<compile_context>
chip_gen: v6e
topology: v6e:2x2x1
jax: 0.10.0
libtpu: 0.0.40
codegen_flags: <defaults>
</compile_context>

<pallas_src>
import math

import jax
import jax.numpy as jnp
from jax.experimental import pallas as pl
from jax.experimental.pallas import tpu as pltpu

# ---- small synthetic DistilBERT config ----
VOCAB = 100            # vocab_size (synthetic, small)
MAX_POS = 64           # max_position_embeddings
B, S = 2, 8            # batch, sequence length
D = 32                 # hidden_size
H = 4                  # num attention heads
DH = D // H            # head dim
I = 64                 # intermediate (ffn) size
L = 2                  # number of transformer layers
NUM_LABELS = 6         # config.num_labels
NUM_LABELS_PAD = 8     # padded for a lane-friendlier store; sliced in the wrapper
LN_EPS = 1e-12         # DistilBERT LayerNorm eps


def _gelu(x):
    # TODO(synk): HF DistilBERT uses the exact erf-GELU; tanh approximation used here for
    # guaranteed Mosaic lowering (numerically very close).
    c = math.sqrt(2.0 / math.pi)
    return 0.5 * x * (1.0 + jnp.tanh(c * (x + 0.044715 * x * x * x)))


def _layernorm(x, g, b):
    mean = jnp.mean(x, axis=-1, keepdims=True)
    var = jnp.mean((x - mean) ** 2, axis=-1, keepdims=True)
    inv = jax.lax.rsqrt(var + LN_EPS)
    return (x - mean) * inv * g + b


def _softmax_last(sc):
    sc = sc - jnp.max(sc, axis=-1, keepdims=True)
    e = jnp.exp(sc)
    return e * pl.reciprocal(jnp.sum(e, axis=-1, keepdims=True), approx=True)


# ----------------------- fused model kernel -----------------------

def _model_kernel(x_emb_ref, emb_ln_g_ref, emb_ln_b_ref, mask_ref,
                  qkv_w_ref, qkv_b_ref, o_w_ref, o_b_ref,
                  ln1_g_ref, ln1_b_ref,
                  ff1_w_ref, ff1_b_ref, ff2_w_ref, ff2_b_ref,
                  ln2_g_ref, ln2_b_ref,
                  pre_w_ref, pre_b_ref, cls_w_ref, cls_b_ref,
                  logits_ref, h_ref):
    scale = 1.0 / math.sqrt(DH)   # DistilBERT scales q by 1/sqrt(dim_per_head)

    # ---- embedding LayerNorm (embedding dropout: eval mode -> identity) ----
    x = _layernorm(x_emb_ref[...], emb_ln_g_ref[...], emb_ln_b_ref[...])

    # Additive key mask, pre-tiled to head-major (H*B, 1, S) in the wrapper; broadcast
    # is hoisted out of the layer loop (JAX does not CSE broadcast_in_dim).
    bias = jnp.broadcast_to(mask_ref[...], (H * B, S, S))

    # ---- static unroll over the L transformer layers (grid collapsed) ----
    for l in range(L):
        # fused Q/K/V projection: one MXU pass, 3*D output lanes
        qkv = jnp.dot(x, qkv_w_ref[l],
                      preferred_element_type=jnp.float32) + qkv_b_ref[l]      # (B*S, 3D)
        q_all = qkv[:, :D] * scale

        # Gather all heads onto one leading batch axis (h-major): (H*B, S, DH).
        q = jnp.concatenate(
            [q_all[:, h * DH:(h + 1) * DH].reshape(B, S, DH) for h in range(H)], axis=0)
        k = jnp.concatenate(
            [qkv[:, D + h * DH:D + (h + 1) * DH].reshape(B, S, DH) for h in range(H)], axis=0)
        v = jnp.concatenate(
            [qkv[:, 2 * D + h * DH:2 * D + (h + 1) * DH].reshape(B, S, DH) for h in range(H)], axis=0)

        # ONE batched score einsum + ONE softmax + ONE batched context einsum.
        sc = jnp.einsum("nqd,nkd->nqk", q, k,
                        preferred_element_type=jnp.float32) + bias            # (H*B, S, S)
        p = _softmax_last(sc)                       # attention dropout: eval -> identity
        ctx = jnp.einsum("nqk,nkd->nqd", p, v,
                         preferred_element_type=jnp.float32)                  # (H*B, S, DH)

        # Head merge (lane concat, no 4-D transposes) + ONE fused output projection.
        ctx2d = jnp.concatenate(
            [ctx[h * B:(h + 1) * B].reshape(B * S, DH) for h in range(H)], axis=-1)
        attn_out = jnp.dot(ctx2d, o_w_ref[l],
                           preferred_element_type=jnp.float32) + o_b_ref[l]   # (B*S, D)

        # residual + sa_layer_norm
        sa = _layernorm(attn_out + x, ln1_g_ref[l], ln1_b_ref[l])

        # fused FFN (intermediate never leaves vregs/VMEM) + residual + output_layer_norm
        ff = _gelu(jnp.dot(sa, ff1_w_ref[l],
                           preferred_element_type=jnp.float32) + ff1_b_ref[l])
        ff = jnp.dot(ff, ff2_w_ref[l],
                     preferred_element_type=jnp.float32) + ff2_b_ref[l]
        x = _layernorm(ff + sa, ln2_g_ref[l], ln2_b_ref[l])

    # ---- classification head on the [CLS] token of every sequence ----
    h_ref[...] = x
    pooled = h_ref[pl.ds(0, B, stride=S), :]        # strided [CLS]-row read, (B, D)
    pooled = jnp.dot(pooled, pre_w_ref[...],
                     preferred_element_type=jnp.float32) + pre_b_ref[...]
    pooled = jnp.maximum(pooled, 0.0)               # pre_classifier + ReLU (dropout: eval)
    logits_ref[...] = jnp.dot(pooled, cls_w_ref[...],
                              preferred_element_type=jnp.float32) + cls_b_ref[...]


# ----------------------- wrapper -----------------------

def forward(params, input_ids, attention_mask):
    Bx, Sx = input_ids.shape
    pos_ids = jnp.arange(Sx)
    # embedding gather is plain-JAX glue
    x_emb = (params["word_emb"][input_ids] +
             params["pos_emb"][pos_ids][None, :, :]).reshape(Bx * Sx, D)
    # additive key mask: 0 for attend, -1e9 for padded keys, tiled head-major to (H*B, 1, S)
    mask_bias = jnp.tile((attention_mask.reshape(Bx, 1, Sx) - 1.0) * 1e9, (H, 1, 1))

    lw = params["layers_stacked"]

    # Grid-less pallas_call: every operand is a whole-array VMEM block (total weights +
    # activations are a few hundred KB), and the kernel runs the full model in one shot.
    logits_pad = pl.pallas_call(
        _model_kernel,
        out_shape=jax.ShapeDtypeStruct((Bx, NUM_LABELS_PAD), jnp.float32),
        scratch_shapes=[pltpu.VMEM((Bx * Sx, D), jnp.float32)],   # final hidden slab
    )(x_emb, params["emb_ln_g"], params["emb_ln_b"], mask_bias,
      lw["qkv_w"], lw["qkv_b"], lw["o_w"], lw["o_b"],
      lw["ln1_g"], lw["ln1_b"],
      lw["ff1_w"], lw["ff1_b"], lw["ff2_w"], lw["ff2_b"],
      lw["ln2_g"], lw["ln2_b"],
      params["pre_w"], params["pre_b"],
      params["cls_w_pad"], params["cls_b_pad"])

    return logits_pad[:, :NUM_LABELS]


# ----------------------- params -----------------------

def init_params(key):
    def w(k, shape, scale=0.02):
        return (scale * jax.random.normal(k, shape)).astype(jnp.float32)

    keys = jax.random.split(key, 4)
    params = {
        "word_emb": w(keys[0], (VOCAB, D)),
        "pos_emb": w(keys[1], (MAX_POS, D)),
        "emb_ln_g": jnp.ones((1, D), jnp.float32),
        "emb_ln_b": jnp.zeros((1, D), jnp.float32),
        "pre_w": w(keys[2], (D, D)),
        "pre_b": jnp.zeros((1, D), jnp.float32),
    }
    cls_w = w(keys[3], (D, NUM_LABELS))   # torch: xavier_normal_; synthetic normal here
    cls_b = jnp.zeros((1, NUM_LABELS), jnp.float32)
    params["cls_w_pad"] = jnp.pad(cls_w, ((0, 0), (0, NUM_LABELS_PAD - NUM_LABELS)))
    params["cls_b_pad"] = jnp.pad(cls_b, ((0, 0), (0, NUM_LABELS_PAD - NUM_LABELS)))

    def layer_params(lkey):
        lk = jax.random.split(lkey, 6)
        q_w, k_w, v_w = w(lk[0], (D, D)), w(lk[1], (D, D)), w(lk[2], (D, D))
        return {
            "qkv_w": jnp.concatenate([q_w, k_w, v_w], axis=1),      # fused (D, 3D)
            "qkv_b": jnp.zeros((1, 3 * D), jnp.float32),
            "o_w": w(lk[3], (D, D)), "o_b": jnp.zeros((1, D), jnp.float32),
            "ln1_g": jnp.ones((1, D), jnp.float32),
            "ln1_b": jnp.zeros((1, D), jnp.float32),
            "ff1_w": w(lk[4], (D, I)), "ff1_b": jnp.zeros((1, I), jnp.float32),
            "ff2_w": w(lk[5], (I, D)), "ff2_b": jnp.zeros((1, D), jnp.float32),
            "ln2_g": jnp.ones((1, D), jnp.float32),
            "ln2_b": jnp.zeros((1, D), jnp.float32),
        }

    per_layer = [layer_params(jax.random.fold_in(key, 100 + l)) for l in range(L)]
    # stack every per-layer weight along a leading L axis; indexed statically in-kernel
    params["layers_stacked"] = {
        name: jnp.stack([lp[name] for lp in per_layer], axis=0)
        for name in per_layer[0]
    }
    return params


if __name__ == "__main__":
    key = jax.random.PRNGKey(0)
    pkey, ikey = jax.random.split(key)
    params = init_params(pkey)

    input_ids = jax.random.randint(ikey, (B, S), 0, VOCAB, dtype=jnp.int32)
    attention_mask = jnp.ones((B, S), jnp.float32)
    # mask out the last two key positions of the second sequence (padding)
    attention_mask = attention_mask.at[1, S - 2:].set(0.0)

    logits = forward(params, input_ids, attention_mask)
    logits = jax.block_until_ready(logits)
    assert logits.shape == (B, NUM_LABELS)
    assert bool(jnp.all(jnp.isfinite(logits)))
    print("KERNEL_OK")
</pallas_src>

<mosaic_0001>
module attributes {stable_mosaic.version = 11 : i64} {
  func.func @_model_kernel(%arg0: memref<16x32xf32, #tpu.memory_space<vmem>>, %arg1: memref<1x32xf32, #tpu.memory_space<vmem>>, %arg2: memref<1x32xf32, #tpu.memory_space<vmem>>, %arg3: memref<8x1x8xf32, #tpu.memory_space<vmem>>, %arg4: memref<2x32x96xf32, #tpu.memory_space<vmem>>, %arg5: memref<2x1x96xf32, #tpu.memory_space<vmem>>, %arg6: memref<2x32x32xf32, #tpu.memory_space<vmem>>, %arg7: memref<2x1x32xf32, #tpu.memory_space<vmem>>, %arg8: memref<2x1x32xf32, #tpu.memory_space<vmem>>, %arg9: memref<2x1x32xf32, #tpu.memory_space<vmem>>, %arg10: memref<2x32x64xf32, #tpu.memory_space<vmem>>, %arg11: memref<2x1x64xf32, #tpu.memory_space<vmem>>, %arg12: memref<2x64x32xf32, #tpu.memory_space<vmem>>, %arg13: memref<2x1x32xf32, #tpu.memory_space<vmem>>, %arg14: memref<2x1x32xf32, #tpu.memory_space<vmem>>, %arg15: memref<2x1x32xf32, #tpu.memory_space<vmem>>, %arg16: memref<32x32xf32, #tpu.memory_space<vmem>>, %arg17: memref<1x32xf32, #tpu.memory_space<vmem>>, %arg18: memref<32x8xf32, #tpu.memory_space<vmem>>, %arg19: memref<1x8xf32, #tpu.memory_space<vmem>>, %arg20: memref<2x8xf32, #tpu.memory_space<vmem>>, %arg21: memref<16x32xf32, #tpu.memory_space<vmem>>) attributes {dimension_semantics = [], scalar_prefetch = 0 : i64, scratch_operands = 1 : i64, tpu.core_type = #tpu.core_type<tc>} {
    %c0 = arith.constant 0 : index
    %c0_0 = arith.constant 0 : index
    %0 = vector.load %arg0[%c0, %c0_0] : memref<16x32xf32, #tpu.memory_space<vmem>>, vector<16x32xf32>
    %c0_1 = arith.constant 0 : index
    %c0_2 = arith.constant 0 : index
    %1 = vector.load %arg1[%c0_1, %c0_2] : memref<1x32xf32, #tpu.memory_space<vmem>>, vector<1x32xf32>
    %c0_3 = arith.constant 0 : index
    %c0_4 = arith.constant 0 : index
    %2 = vector.load %arg2[%c0_3, %c0_4] : memref<1x32xf32, #tpu.memory_space<vmem>>, vector<1x32xf32>
    %cst = arith.constant dense<0.000000e+00> : vector<16xf32>
    %3 = vector.multi_reduction <add>, %0, %cst [1] : vector<16x32xf32> to vector<16xf32>
    %4 = vector.shape_cast %3 : vector<16xf32> to vector<16x1xf32>
    %cst_5 = arith.constant 3.200000e+01 : f32
    %5 = vector.broadcast %cst_5 : f32 to vector<16x1xf32>
    %6 = arith.divf %4, %5 : vector<16x1xf32>
    %7 = vector.broadcast %6 : vector<16x1xf32> to vector<16x32xf32>
    %8 = arith.subf %0, %7 : vector<16x32xf32>
    %9 = arith.mulf %8, %8 : vector<16x32xf32>
    %cst_6 = arith.constant dense<0.000000e+00> : vector<16xf32>
    %10 = vector.multi_reduction <add>, %9, %cst_6 [1] : vector<16x32xf32> to vector<16xf32>
    %11 = vector.shape_cast %10 : vector<16xf32> to vector<16x1xf32>
    %cst_7 = arith.constant 3.200000e+01 : f32
    %12 = vector.broadcast %cst_7 : f32 to vector<16x1xf32>
    %13 = arith.divf %11, %12 : vector<16x1xf32>
    %cst_8 = arith.constant 9.99999996E-13 : f32
    %14 = vector.broadcast %cst_8 : f32 to vector<16x1xf32>
    %15 = arith.addf %13, %14 : vector<16x1xf32>
    %16 = math.rsqrt %15 : vector<16x1xf32>
    %17 = vector.broadcast %6 : vector<16x1xf32> to vector<16x32xf32>
    %18 = arith.subf %0, %17 : vector<16x32xf32>
    %19 = vector.broadcast %16 : vector<16x1xf32> to vector<16x32xf32>
    %20 = arith.mulf %18, %19 : vector<16x32xf32>
    %21 = vector.broadcast %1 : vector<1x32xf32> to vector<16x32xf32>
    %22 = arith.mulf %20, %21 : vector<16x32xf32>
    %23 = vector.broadcast %2 : vector<1x32xf32> to vector<16x32xf32>
    %24 = arith.addf %22, %23 : vector<16x32xf32>
    %c0_9 = arith.constant 0 : index
    %c0_10 = arith.constant 0 : index
    %c0_11 = arith.constant 0 : index
    %25 = vector.load %arg3[%c0_9, %c0_10, %c0_11] : memref<8x1x8xf32, #tpu.memory_space<vmem>>, vector<8x1x8xf32>
    %26 = vector.shape_cast %25 : vector<8x1x8xf32> to vector<8x1x8xf32>
    %27 = vector.broadcast %26 : vector<8x1x8xf32> to vector<8x8x8xf32>
    %c0_12 = arith.constant 0 : index
    %c0_13 = arith.constant 0 : index
    %c0_14 = arith.constant 0 : index
    %28 = vector.load %arg4[%c0_12, %c0_13, %c0_14] : memref<2x32x96xf32, #tpu.memory_space<vmem>>, vector<1x32x96xf32>
    %29 = vector.shape_cast %28 : vector<1x32x96xf32> to vector<32x96xf32>
    %cst_15 = arith.constant dense<0.000000e+00> : vector<16x96xf32>
    %30 = tpu.matmul %24, %29, %cst_15 {dimension_numbers = #tpu.dot_dimension_numbers<[1], [0], [0], [1], [0, 0, 1, 1], [], []>} : vector<16x32xf32>, vector<32x96xf32>, vector<16x96xf32> -> vector<16x96xf32>
    %c0_16 = arith.constant 0 : index
    %c0_17 = arith.constant 0 : index
    %c0_18 = arith.constant 0 : index
    %31 = vector.load %arg5[%c0_16, %c0_17, %c0_18] : memref<2x1x96xf32, #tpu.memory_space<vmem>>, vector<1x1x96xf32>
    %32 = vector.shape_cast %31 : vector<1x1x96xf32> to vector<1x96xf32>
    %33 = vector.broadcast %32 : vector<1x96xf32> to vector<16x96xf32>
    %34 = arith.addf %30, %33 : vector<16x96xf32>
    %35 = vector.extract_strided_slice %34 {offsets = [0, 0], sizes = [16, 32], strides = [1, 1]} : vector<16x96xf32> to vector<16x32xf32>
    %cst_19 = arith.constant 0.353553385 : f32
    %36 = vector.broadcast %cst_19 : f32 to vector<16x32xf32>
    %37 = arith.mulf %35, %36 : vector<16x32xf32>
    %38 = vector.extract_strided_slice %37 {offsets = [0, 0], sizes = [16, 8], strides = [1, 1]} : vector<16x32xf32> to vector<16x8xf32>
    %39 = vector.shape_cast %38 : vector<16x8xf32> to vector<2x8x8xf32>
    %40 = vector.extract_strided_slice %37 {offsets = [0, 8], sizes = [16, 8], strides = [1, 1]} : vector<16x32xf32> to vector<16x8xf32>
    %41 = vector.shape_cast %40 : vector<16x8xf32> to vector<2x8x8xf32>
    %42 = vector.extract_strided_slice %37 {offsets = [0, 16], sizes = [16, 8], strides = [1, 1]} : vector<16x32xf32> to vector<16x8xf32>
    %43 = vector.shape_cast %42 : vector<16x8xf32> to vector<2x8x8xf32>
    %44 = vector.extract_strided_slice %37 {offsets = [0, 24], sizes = [16, 8], strides = [1, 1]} : vector<16x32xf32> to vector<16x8xf32>
    %45 = vector.shape_cast %44 : vector<16x8xf32> to vector<2x8x8xf32>
    %46 = tpu.concatenate %39, %41, %43, %45 in 0 : vector<2x8x8xf32>, vector<2x8x8xf32>, vector<2x8x8xf32>, vector<2x8x8xf32> -> vector<8x8x8xf32>
    %47 = vector.extract_strided_slice %34 {offsets = [0, 32], sizes = [16, 8], strides = [1, 1]} : vector<16x96xf32> to vector<16x8xf32>
    %48 = vector.shape_cast %47 : vector<16x8xf32> to vector<2x8x8xf32>
    %49 = vector.extract_strided_slice %34 {offsets = [0, 40], sizes = [16, 8], strides = [1, 1]} : vector<16x96xf32> to vector<16x8xf32>
    %50 = vector.shape_cast %49 : vector<16x8xf32> to vector<2x8x8xf32>
    %51 = vector.extract_strided_slice %34 {offsets = [0, 48], sizes = [16, 8], strides = [1, 1]} : vector<16x96xf32> to vector<16x8xf32>
    %52 = vector.shape_cast %51 : vector<16x8xf32> to vector<2x8x8xf32>
    %53 = vector.extract_strided_slice %34 {offsets = [0, 56], sizes = [16, 8], strides = [1, 1]} : vector<16x96xf32> to vector<16x8xf32>
    %54 = vector.shape_cast %53 : vector<16x8xf32> to vector<2x8x8xf32>
    %55 = tpu.concatenate %48, %50, %52, %54 in 0 : vector<2x8x8xf32>, vector<2x8x8xf32>, vector<2x8x8xf32>, vector<2x8x8xf32> -> vector<8x8x8xf32>
    %56 = vector.extract_strided_slice %34 {offsets = [0, 64], sizes = [16, 8], strides = [1, 1]} : vector<16x96xf32> to vector<16x8xf32>
    %57 = vector.shape_cast %56 : vector<16x8xf32> to vector<2x8x8xf32>
    %58 = vector.extract_strided_slice %34 {offsets = [0, 72], sizes = [16, 8], strides = [1, 1]} : vector<16x96xf32> to vector<16x8xf32>
    %59 = vector.shape_cast %58 : vector<16x8xf32> to vector<2x8x8xf32>
    %60 = vector.extract_strided_slice %34 {offsets = [0, 80], sizes = [16, 8], strides = [1, 1]} : vector<16x96xf32> to vector<16x8xf32>
    %61 = vector.shape_cast %60 : vector<16x8xf32> to vector<2x8x8xf32>
    %62 = vector.extract_strided_slice %34 {offsets = [0, 88], sizes = [16, 8], strides = [1, 1]} : vector<16x96xf32> to vector<16x8xf32>
    %63 = vector.shape_cast %62 : vector<16x8xf32> to vector<2x8x8xf32>
    %64 = tpu.concatenate %57, %59, %61, %63 in 0 : vector<2x8x8xf32>, vector<2x8x8xf32>, vector<2x8x8xf32>, vector<2x8x8xf32> -> vector<8x8x8xf32>
    "tpu.trace_start"() <{level = 10 : i32, message = "nqd,nkd->nqk"}> : () -> ()
    %cst_20 = arith.constant dense<0.000000e+00> : vector<8x8x8xf32>
    %65 = tpu.matmul %46, %55, %cst_20 {dimension_numbers = #tpu.dot_dimension_numbers<[2], [2], [1], [1], [0, 0, 0, 1, 1, 1], [0], [0]>} : vector<8x8x8xf32>, vector<8x8x8xf32>, vector<8x8x8xf32> -> vector<8x8x8xf32>
    "tpu.trace_stop"() : () -> ()
    %66 = arith.addf %65, %27 : vector<8x8x8xf32>
    %cst_21 = arith.constant dense<0xFF800000> : vector<8x8xf32>
    %67 = vector.multi_reduction <maximumf>, %66, %cst_21 [2] : vector<8x8x8xf32> to vector<8x8xf32>
    %68 = vector.shape_cast %67 : vector<8x8xf32> to vector<8x8x1xf32>
    %69 = vector.broadcast %68 : vector<8x8x1xf32> to vector<8x8x8xf32>
    %70 = arith.subf %66, %69 : vector<8x8x8xf32>
    %71 = math.exp %70 : vector<8x8x8xf32>
    %cst_22 = arith.constant dense<0.000000e+00> : vector<8x8xf32>
    %72 = vector.multi_reduction <add>, %71, %cst_22 [2] : vector<8x8x8xf32> to vector<8x8xf32>
    %73 = vector.shape_cast %72 : vector<8x8xf32> to vector<8x8x1xf32>
    %74 = tpu.reciprocal %73 {approx = true} : vector<8x8x1xf32> -> vector<8x8x1xf32>
    %75 = vector.broadcast %74 : vector<8x8x1xf32> to vector<8x8x8xf32>
    %76 = arith.mulf %71, %75 : vector<8x8x8xf32>
    "tpu.trace_start"() <{level = 10 : i32, message = "nqk,nkd->nqd"}> : () -> ()
    %cst_23 = arith.constant dense<0.000000e+00> : vector<8x8x8xf32>
    %77 = tpu.matmul %76, %64, %cst_23 {dimension_numbers = #tpu.dot_dimension_numbers<[2], [1], [1], [2], [0, 0, 0, 1, 1, 2], [0], [0]>} : vector<8x8x8xf32>, vector<8x8x8xf32>, vector<8x8x8xf32> -> vector<8x8x8xf32>
    "tpu.trace_stop"() : () -> ()
    %78 = vector.extract_strided_slice %77 {offsets = [0, 0, 0], sizes = [2, 8, 8], strides = [1, 1, 1]} : vector<8x8x8xf32> to vector<2x8x8xf32>
    %79 = vector.shape_cast %78 : vector<2x8x8xf32> to vector<16x8xf32>
    %80 = vector.extract_strided_slice %77 {offsets = [2, 0, 0], sizes = [2, 8, 8], strides = [1, 1, 1]} : vector<8x8x8xf32> to vector<2x8x8xf32>
    %81 = vector.shape_cast %80 : vector<2x8x8xf32> to vector<16x8xf32>
    %82 = vector.extract_strided_slice %77 {offsets = [4, 0, 0], sizes = [2, 8, 8], strides = [1, 1, 1]} : vector<8x8x8xf32> to vector<2x8x8xf32>
    %83 = vector.shape_cast %82 : vector<2x8x8xf32> to vector<16x8xf32>
    %84 = vector.extract_strided_slice %77 {offsets = [6, 0, 0], sizes = [2, 8, 8], strides = [1, 1, 1]} : vector<8x8x8xf32> to vector<2x8x8xf32>
    %85 = vector.shape_cast %84 : vector<2x8x8xf32> to vector<16x8xf32>
    %86 = tpu.concatenate %79, %81, %83, %85 in 1 : vector<16x8xf32>, vector<16x8xf32>, vector<16x8xf32>, vector<16x8xf32> -> vector<16x32xf32>
    %c0_24 = arith.constant 0 : index
    %c0_25 = arith.constant 0 : index
    %c0_26 = arith.constant 0 : index
    %87 = vector.load %arg6[%c0_24, %c0_25, %c0_26] : memref<2x32x32xf32, #tpu.memory_space<vmem>>, vector<1x32x32xf32>
    %88 = vector.shape_cast %87 : vector<1x32x32xf32> to vector<32x32xf32>
    %cst_27 = arith.constant dense<0.000000e+00> : vector<16x32xf32>
    %89 = tpu.matmul %86, %88, %cst_27 {dimension_numbers = #tpu.dot_dimension_numbers<[1], [0], [0], [1], [0, 0, 1, 1], [], []>} : vector<16x32xf32>, vector<32x32xf32>, vector<16x32xf32> -> vector<16x32xf32>
    %c0_28 = arith.constant 0 : index
    %c0_29 = arith.constant 0 : index
    %c0_30 = arith.constant 0 : index
    %90 = vector.load %arg7[%c0_28, %c0_29, %c0_30] : memref<2x1x32xf32, #tpu.memory_space<vmem>>, vector<1x1x32xf32>
    %91 = vector.shape_cast %90 : vector<1x1x32xf32> to vector<1x32xf32>
    %92 = vector.broadcast %91 : vector<1x32xf32> to vector<16x32xf32>
    %93 = arith.addf %89, %92 : vector<16x32xf32>
    %94 = arith.addf %93, %24 : vector<16x32xf32>
    %c0_31 = arith.constant 0 : index
    %c0_32 = arith.constant 0 : index
    %c0_33 = arith.constant 0 : index
    %95 = vector.load %arg8[%c0_31, %c0_32, %c0_33] : memref<2x1x32xf32, #tpu.memory_space<vmem>>, vector<1x1x32xf32>
    %96 = vector.shape_cast %95 : vector<1x1x32xf32> to vector<1x32xf32>
    %c0_34 = arith.constant 0 : index
    %c0_35 = arith.constant 0 : index
    %c0_36 = arith.constant 0 : index
    %97 = vector.load %arg9[%c0_34, %c0_35, %c0_36] : memref<2x1x32xf32, #tpu.memory_space<vmem>>, vector<1x1x32xf32>
    %98 = vector.shape_cast %97 : vector<1x1x32xf32> to vector<1x32xf32>
    %cst_37 = arith.constant dense<0.000000e+00> : vector<16xf32>
    %99 = vector.multi_reduction <add>, %94, %cst_37 [1] : vector<16x32xf32> to vector<16xf32>
    %100 = vector.shape_cast %99 : vector<16xf32> to vector<16x1xf32>
    %cst_38 = arith.constant 3.200000e+01 : f32
    %101 = vector.broadcast %cst_38 : f32 to vector<16x1xf32>
    %102 = arith.divf %100, %101 : vector<16x1xf32>
    %103 = vector.broadcast %102 : vector<16x1xf32> to vector<16x32xf32>
    %104 = arith.subf %94, %103 : vector<16x32xf32>
    %105 = arith.mulf %104, %104 : vector<16x32xf32>
    %cst_39 = arith.constant dense<0.000000e+00> : vector<16xf32>
    %106 = vector.multi_reduction <add>, %105, %cst_39 [1] : vector<16x32xf32> to vector<16xf32>
    %107 = vector.shape_cast %106 : vector<16xf32> to vector<16x1xf32>
    %cst_40 = arith.constant 3.200000e+01 : f32
    %108 = vector.broadcast %cst_40 : f32 to vector<16x1xf32>
    %109 = arith.divf %107, %108 : vector<16x1xf32>
    %cst_41 = arith.constant 9.99999996E-13 : f32
    %110 = vector.broadcast %cst_41 : f32 to vector<16x1xf32>
    %111 = arith.addf %109, %110 : vector<16x1xf32>
    %112 = math.rsqrt %111 : vector<16x1xf32>
    %113 = vector.broadcast %102 : vector<16x1xf32> to vector<16x32xf32>
    %114 = arith.subf %94, %113 : vector<16x32xf32>
    %115 = vector.broadcast %112 : vector<16x1xf32> to vector<16x32xf32>
    %116 = arith.mulf %114, %115 : vector<16x32xf32>
    %117 = vector.broadcast %96 : vector<1x32xf32> to vector<16x32xf32>
    %118 = arith.mulf %116, %117 : vector<16x32xf32>
    %119 = vector.broadcast %98 : vector<1x32xf32> to vector<16x32xf32>
    %120 = arith.addf %118, %119 : vector<16x32xf32>
    %c0_42 = arith.constant 0 : index
    %c0_43 = arith.constant 0 : index
    %c0_44 = arith.constant 0 : index
    %121 = vector.load %arg10[%c0_42, %c0_43, %c0_44] : memref<2x32x64xf32, #tpu.memory_space<vmem>>, vector<1x32x64xf32>
    %122 = vector.shape_cast %121 : vector<1x32x64xf32> to vector<32x64xf32>
    %cst_45 = arith.constant dense<0.000000e+00> : vector<16x64xf32>
    %123 = tpu.matmul %120, %122, %cst_45 {dimension_numbers = #tpu.dot_dimension_numbers<[1], [0], [0], [1], [0, 0, 1, 1], [], []>} : vector<16x32xf32>, vector<32x64xf32>, vector<16x64xf32> -> vector<16x64xf32>
    %c0_46 = arith.constant 0 : index
    %c0_47 = arith.constant 0 : index
    %c0_48 = arith.constant 0 : index
    %124 = vector.load %arg11[%c0_46, %c0_47, %c0_48] : memref<2x1x64xf32, #tpu.memory_space<vmem>>, vector<1x1x64xf32>
    %125 = vector.shape_cast %124 : vector<1x1x64xf32> to vector<1x64xf32>
    %126 = vector.broadcast %125 : vector<1x64xf32> to vector<16x64xf32>
    %127 = arith.addf %123, %126 : vector<16x64xf32>
    %cst_49 = arith.constant 5.000000e-01 : f32
    %128 = vector.broadcast %cst_49 : f32 to vector<16x64xf32>
    %129 = arith.mulf %128, %127 : vector<16x64xf32>
    %cst_50 = arith.constant 4.471500e-02 : f32
    %130 = vector.broadcast %cst_50 : f32 to vector<16x64xf32>
    %131 = arith.mulf %130, %127 : vector<16x64xf32>
    %132 = arith.mulf %131, %127 : vector<16x64xf32>
    %133 = arith.mulf %132, %127 : vector<16x64xf32>
    %134 = arith.addf %127, %133 : vector<16x64xf32>
    %cst_51 = arith.constant 0.797884583 : f32
    %135 = vector.broadcast %cst_51 : f32 to vector<16x64xf32>
    %136 = arith.mulf %135, %134 : vector<16x64xf32>
    %137 = math.tanh %136 : vector<16x64xf32>
    %cst_52 = arith.constant 1.000000e+00 : f32
    %138 = vector.broadcast %cst_52 : f32 to vector<16x64xf32>
    %139 = arith.addf %138, %137 : vector<16x64xf32>
    %140 = arith.mulf %129, %139 : vector<16x64xf32>
    %c0_53 = arith.constant 0 : index
    %c0_54 = arith.constant 0 : index
    %c0_55 = arith.constant 0 : index
    %141 = vector.load %arg12[%c0_53, %c0_54, %c0_55] : memref<2x64x32xf32, #tpu.memory_space<vmem>>, vector<1x64x32xf32>
    %142 = vector.shape_cast %141 : vector<1x64x32xf32> to vector<64x32xf32>
    %cst_56 = arith.constant dense<0.000000e+00> : vector<16x32xf32>
    %143 = tpu.matmul %140, %142, %cst_56 {dimension_numbers = #tpu.dot_dimension_numbers<[1], [0], [0], [1], [0, 0, 1, 1], [], []>} : vector<16x64xf32>, vector<64x32xf32>, vector<16x32xf32> -> vector<16x32xf32>
    %c0_57 = arith.constant 0 : index
    %c0_58 = arith.constant 0 : index
    %c0_59 = arith.constant 0 : index
    %144 = vector.load %arg13[%c0_57, %c0_58, %c0_59] : memref<2x1x32xf32, #tpu.memory_space<vmem>>, vector<1x1x32xf32>
    %145 = vector.shape_cast %144 : vector<1x1x32xf32> to vector<1x32xf32>
    %146 = vector.broadcast %145 : vector<1x32xf32> to vector<16x32xf32>
    %147 = arith.addf %143, %146 : vector<16x32xf32>
    %148 = arith.addf %147, %120 : vector<16x32xf32>
    %c0_60 = arith.constant 0 : index
    %c0_61 = arith.constant 0 : index
    %c0_62 = arith.constant 0 : index
    %149 = vector.load %arg14[%c0_60, %c0_61, %c0_62] : memref<2x1x32xf32, #tpu.memory_space<vmem>>, vector<1x1x32xf32>
    %150 = vector.shape_cast %149 : vector<1x1x32xf32> to vector<1x32xf32>
    %c0_63 = arith.constant 0 : index
    %c0_64 = arith.constant 0 : index
    %c0_65 = arith.constant 0 : index
    %151 = vector.load %arg15[%c0_63, %c0_64, %c0_65] : memref<2x1x32xf32, #tpu.memory_space<vmem>>, vector<1x1x32xf32>
    %152 = vector.shape_cast %151 : vector<1x1x32xf32> to vector<1x32xf32>
    %cst_66 = arith.constant dense<0.000000e+00> : vector<16xf32>
    %153 = vector.multi_reduction <add>, %148, %cst_66 [1] : vector<16x32xf32> to vector<16xf32>
    %154 = vector.shape_cast %153 : vector<16xf32> to vector<16x1xf32>
    %cst_67 = arith.constant 3.200000e+01 : f32
    %155 = vector.broadcast %cst_67 : f32 to vector<16x1xf32>
    %156 = arith.divf %154, %155 : vector<16x1xf32>
    %157 = vector.broadcast %156 : vector<16x1xf32> to vector<16x32xf32>
    %158 = arith.subf %148, %157 : vector<16x32xf32>
    %159 = arith.mulf %158, %158 : vector<16x32xf32>
    %cst_68 = arith.constant dense<0.000000e+00> : vector<16xf32>
    %160 = vector.multi_reduction <add>, %159, %cst_68 [1] : vector<16x32xf32> to vector<16xf32>
    %161 = vector.shape_cast %160 : vector<16xf32> to vector<16x1xf32>
    %cst_69 = arith.constant 3.200000e+01 : f32
    %162 = vector.broadcast %cst_69 : f32 to vector<16x1xf32>
    %163 = arith.divf %161, %162 : vector<16x1xf32>
    %cst_70 = arith.constant 9.99999996E-13 : f32
    %164 = vector.broadcast %cst_70 : f32 to vector<16x1xf32>
    %165 = arith.addf %163, %164 : vector<16x1xf32>
    %166 = math.rsqrt %165 : vector<16x1xf32>
    %167 = vector.broadcast %156 : vector<16x1xf32> to vector<16x32xf32>
    %168 = arith.subf %148, %167 : vector<16x32xf32>
    %169 = vector.broadcast %166 : vector<16x1xf32> to vector<16x32xf32>
    %170 = arith.mulf %168, %169 : vector<16x32xf32>
    %171 = vector.broadcast %150 : vector<1x32xf32> to vector<16x32xf32>
    %172 = arith.mulf %170, %171 : vector<16x32xf32>
    %173 = vector.broadcast %152 : vector<1x32xf32> to vector<16x32xf32>
    %174 = arith.addf %172, %173 : vector<16x32xf32>
    %c1 = arith.constant 1 : index
    %c0_71 = arith.constant 0 : index
    %c0_72 = arith.constant 0 : index
    %175 = vector.load %arg4[%c1, %c0_71, %c0_72] : memref<2x32x96xf32, #tpu.memory_space<vmem>>, vector<1x32x96xf32>
    %176 = vector.shape_cast %175 : vector<1x32x96xf32> to vector<32x96xf32>
    %cst_73 = arith.constant dense<0.000000e+00> : vector<16x96xf32>
    %177 = tpu.matmul %174, %176, %cst_73 {dimension_numbers = #tpu.dot_dimension_numbers<[1], [0], [0], [1], [0, 0, 1, 1], [], []>} : vector<16x32xf32>, vector<32x96xf32>, vector<16x96xf32> -> vector<16x96xf32>
    %c1_74 = arith.constant 1 : index
    %c0_75 = arith.constant 0 : index
    %c0_76 = arith.constant 0 : index
    %178 = vector.load %arg5[%c1_74, %c0_75, %c0_76] : memref<2x1x96xf32, #tpu.memory_space<vmem>>, vector<1x1x96xf32>
    %179 = vector.shape_cast %178 : vector<1x1x96xf32> to vector<1x96xf32>
    %180 = vector.broadcast %179 : vector<1x96xf32> to vector<16x96xf32>
    %181 = arith.addf %177, %180 : vector<16x96xf32>
    %182 = vector.extract_strided_slice %181 {offsets = [0, 0], sizes = [16, 32], strides = [1, 1]} : vector<16x96xf32> to vector<16x32xf32>
    %cst_77 = arith.constant 0.353553385 : f32
    %183 = vector.broadcast %cst_77 : f32 to vector<16x32xf32>
    %184 = arith.mulf %182, %183 : vector<16x32xf32>
    %185 = vector.extract_strided_slice %184 {offsets = [0, 0], sizes = [16, 8], strides = [1, 1]} : vector<16x32xf32> to vector<16x8xf32>
    %186 = vector.shape_cast %185 : vector<16x8xf32> to vector<2x8x8xf32>
    %187 = vector.extract_strided_slice %184 {offsets = [0, 8], sizes = [16, 8], strides = [1, 1]} : vector<16x32xf32> to vector<16x8xf32>
    %188 = vector.shape_cast %187 : vector<16x8xf32> to vector<2x8x8xf32>
    %189 = vector.extract_strided_slice %184 {offsets = [0, 16], sizes = [16, 8], strides = [1, 1]} : vector<16x32xf32> to vector<16x8xf32>
    %190 = vector.shape_cast %189 : vector<16x8xf32> to vector<2x8x8xf32>
    %191 = vector.extract_strided_slice %184 {offsets = [0, 24], sizes = [16, 8], strides = [1, 1]} : vector<16x32xf32> to vector<16x8xf32>
    %192 = vector.shape_cast %191 : vector<16x8xf32> to vector<2x8x8xf32>
    %193 = tpu.concatenate %186, %188, %190, %192 in 0 : vector<2x8x8xf32>, vector<2x8x8xf32>, vector<2x8x8xf32>, vector<2x8x8xf32> -> vector<8x8x8xf32>
    %194 = vector.extract_strided_slice %181 {offsets = [0, 32], sizes = [16, 8], strides = [1, 1]} : vector<16x96xf32> to vector<16x8xf32>
    %195 = vector.shape_cast %194 : vector<16x8xf32> to vector<2x8x8xf32>
    %196 = vector.extract_strided_slice %181 {offsets = [0, 40], sizes = [16, 8], strides = [1, 1]} : vector<16x96xf32> to vector<16x8xf32>
    %197 = vector.shape_cast %196 : vector<16x8xf32> to vector<2x8x8xf32>
    %198 = vector.extract_strided_slice %181 {offsets = [0, 48], sizes = [16, 8], strides = [1, 1]} : vector<16x96xf32> to vector<16x8xf32>
    %199 = vector.shape_cast %198 : vector<16x8xf32> to vector<2x8x8xf32>
    %200 = vector.extract_strided_slice %181 {offsets = [0, 56], sizes = [16, 8], strides = [1, 1]} : vector<16x96xf32> to vector<16x8xf32>
    %201 = vector.shape_cast %200 : vector<16x8xf32> to vector<2x8x8xf32>
    %202 = tpu.concatenate %195, %197, %199, %201 in 0 : vector<2x8x8xf32>, vector<2x8x8xf32>, vector<2x8x8xf32>, vector<2x8x8xf32> -> vector<8x8x8xf32>
    %203 = vector.extract_strided_slice %181 {offsets = [0, 64], sizes = [16, 8], strides = [1, 1]} : vector<16x96xf32> to vector<16x8xf32>
    %204 = vector.shape_cast %203 : vector<16x8xf32> to vector<2x8x8xf32>
    %205 = vector.extract_strided_slice %181 {offsets = [0, 72], sizes = [16, 8], strides = [1, 1]} : vector<16x96xf32> to vector<16x8xf32>
    %206 = vector.shape_cast %205 : vector<16x8xf32> to vector<2x8x8xf32>
    %207 = vector.extract_strided_slice %181 {offsets = [0, 80], sizes = [16, 8], strides = [1, 1]} : vector<16x96xf32> to vector<16x8xf32>
    %208 = vector.shape_cast %207 : vector<16x8xf32> to vector<2x8x8xf32>
    %209 = vector.extract_strided_slice %181 {offsets = [0, 88], sizes = [16, 8], strides = [1, 1]} : vector<16x96xf32> to vector<16x8xf32>
    %210 = vector.shape_cast %209 : vector<16x8xf32> to vector<2x8x8xf32>
    %211 = tpu.concatenate %204, %206, %208, %210 in 0 : vector<2x8x8xf32>, vector<2x8x8xf32>, vector<2x8x8xf32>, vector<2x8x8xf32> -> vector<8x8x8xf32>
    "tpu.trace_start"() <{level = 10 : i32, message = "nqd,nkd->nqk"}> : () -> ()
    %cst_78 = arith.constant dense<0.000000e+00> : vector<8x8x8xf32>
    %212 = tpu.matmul %193, %202, %cst_78 {dimension_numbers = #tpu.dot_dimension_numbers<[2], [2], [1], [1], [0, 0, 0, 1, 1, 1], [0], [0]>} : vector<8x8x8xf32>, vector<8x8x8xf32>, vector<8x8x8xf32> -> vector<8x8x8xf32>
    "tpu.trace_stop"() : () -> ()
    %213 = arith.addf %212, %27 : vector<8x8x8xf32>
    %cst_79 = arith.constant dense<0xFF800000> : vector<8x8xf32>
    %214 = vector.multi_reduction <maximumf>, %213, %cst_79 [2] : vector<8x8x8xf32> to vector<8x8xf32>
    %215 = vector.shape_cast %214 : vector<8x8xf32> to vector<8x8x1xf32>
    %216 = vector.broadcast %215 : vector<8x8x1xf32> to vector<8x8x8xf32>
    %217 = arith.subf %213, %216 : vector<8x8x8xf32>
    %218 = math.exp %217 : vector<8x8x8xf32>
    %cst_80 = arith.constant dense<0.000000e+00> : vector<8x8xf32>
    %219 = vector.multi_reduction <add>, %218, %cst_80 [2] : vector<8x8x8xf32> to vector<8x8xf32>
    %220 = vector.shape_cast %219 : vector<8x8xf32> to vector<8x8x1xf32>
    %221 = tpu.reciprocal %220 {approx = true} : vector<8x8x1xf32> -> vector<8x8x1xf32>
    %222 = vector.broadcast %221 : vector<8x8x1xf32> to vector<8x8x8xf32>
    %223 = arith.mulf %218, %222 : vector<8x8x8xf32>
    "tpu.trace_start"() <{level = 10 : i32, message = "nqk,nkd->nqd"}> : () -> ()
    %cst_81 = arith.constant dense<0.000000e+00> : vector<8x8x8xf32>
    %224 = tpu.matmul %223, %211, %cst_81 {dimension_numbers = #tpu.dot_dimension_numbers<[2], [1], [1], [2], [0, 0, 0, 1, 1, 2], [0], [0]>} : vector<8x8x8xf32>, vector<8x8x8xf32>, vector<8x8x8xf32> -> vector<8x8x8xf32>
    "tpu.trace_stop"() : () -> ()
    %225 = vector.extract_strided_slice %224 {offsets = [0, 0, 0], sizes = [2, 8, 8], strides = [1, 1, 1]} : vector<8x8x8xf32> to vector<2x8x8xf32>
    %226 = vector.shape_cast %225 : vector<2x8x8xf32> to vector<16x8xf32>
    %227 = vector.extract_strided_slice %224 {offsets = [2, 0, 0], sizes = [2, 8, 8], strides = [1, 1, 1]} : vector<8x8x8xf32> to vector<2x8x8xf32>
    %228 = vector.shape_cast %227 : vector<2x8x8xf32> to vector<16x8xf32>
    %229 = vector.extract_strided_slice %224 {offsets = [4, 0, 0], sizes = [2, 8, 8], strides = [1, 1, 1]} : vector<8x8x8xf32> to vector<2x8x8xf32>
    %230 = vector.shape_cast %229 : vector<2x8x8xf32> to vector<16x8xf32>
    %231 = vector.extract_strided_slice %224 {offsets = [6, 0, 0], sizes = [2, 8, 8], strides = [1, 1, 1]} : vector<8x8x8xf32> to vector<2x8x8xf32>
    %232 = vector.shape_cast %231 : vector<2x8x8xf32> to vector<16x8xf32>
    %233 = tpu.concatenate %226, %228, %230, %232 in 1 : vector<16x8xf32>, vector<16x8xf32>, vector<16x8xf32>, vector<16x8xf32> -> vector<16x32xf32>
    %c1_82 = arith.constant 1 : index
    %c0_83 = arith.constant 0 : index
    %c0_84 = arith.constant 0 : index
    %234 = vector.load %arg6[%c1_82, %c0_83, %c0_84] : memref<2x32x32xf32, #tpu.memory_space<vmem>>, vector<1x32x32xf32>
    %235 = vector.shape_cast %234 : vector<1x32x32xf32> to vector<32x32xf32>
    %cst_85 = arith.constant dense<0.000000e+00> : vector<16x32xf32>
    %236 = tpu.matmul %233, %235, %cst_85 {dimension_numbers = #tpu.dot_dimension_numbers<[1], [0], [0], [1], [0, 0, 1, 1], [], []>} : vector<16x32xf32>, vector<32x32xf32>, vector<16x32xf32> -> vector<16x32xf32>
    %c1_86 = arith.constant 1 : index
    %c0_87 = arith.constant 0 : index
    %c0_88 = arith.constant 0 : index
    %237 = vector.load %arg7[%c1_86, %c0_87, %c0_88] : memref<2x1x32xf32, #tpu.memory_space<vmem>>, vector<1x1x32xf32>
    %238 = vector.shape_cast %237 : vector<1x1x32xf32> to vector<1x32xf32>
    %239 = vector.broadcast %238 : vector<1x32xf32> to vector<16x32xf32>
    %240 = arith.addf %236, %239 : vector<16x32xf32>
    %241 = arith.addf %240, %174 : vector<16x32xf32>
    %c1_89 = arith.constant 1 : index
    %c0_90 = arith.constant 0 : index
    %c0_91 = arith.constant 0 : index
    %242 = vector.load %arg8[%c1_89, %c0_90, %c0_91] : memref<2x1x32xf32, #tpu.memory_space<vmem>>, vector<1x1x32xf32>
    %243 = vector.shape_cast %242 : vector<1x1x32xf32> to vector<1x32xf32>
    %c1_92 = arith.constant 1 : index
    %c0_93 = arith.constant 0 : index
    %c0_94 = arith.constant 0 : index
    %244 = vector.load %arg9[%c1_92, %c0_93, %c0_94] : memref<2x1x32xf32, #tpu.memory_space<vmem>>, vector<1x1x32xf32>
    %245 = vector.shape_cast %244 : vector<1x1x32xf32> to vector<1x32xf32>
    %cst_95 = arith.constant dense<0.000000e+00> : vector<16xf32>
    %246 = vector.multi_reduction <add>, %241, %cst_95 [1] : vector<16x32xf32> to vector<16xf32>
    %247 = vector.shape_cast %246 : vector<16xf32> to vector<16x1xf32>
    %cst_96 = arith.constant 3.200000e+01 : f32
    %248 = vector.broadcast %cst_96 : f32 to vector<16x1xf32>
    %249 = arith.divf %247, %248 : vector<16x1xf32>
    %250 = vector.broadcast %249 : vector<16x1xf32> to vector<16x32xf32>
    %251 = arith.subf %241, %250 : vector<16x32xf32>
    %252 = arith.mulf %251, %251 : vector<16x32xf32>
    %cst_97 = arith.constant dense<0.000000e+00> : vector<16xf32>
    %253 = vector.multi_reduction <add>, %252, %cst_97 [1] : vector<16x32xf32> to vector<16xf32>
    %254 = vector.shape_cast %253 : vector<16xf32> to vector<16x1xf32>
    %cst_98 = arith.constant 3.200000e+01 : f32
    %255 = vector.broadcast %cst_98 : f32 to vector<16x1xf32>
    %256 = arith.divf %254, %255 : vector<16x1xf32>
    %cst_99 = arith.constant 9.99999996E-13 : f32
    %257 = vector.broadcast %cst_99 : f32 to vector<16x1xf32>
    %258 = arith.addf %256, %257 : vector<16x1xf32>
    %259 = math.rsqrt %258 : vector<16x1xf32>
    %260 = vector.broadcast %249 : vector<16x1xf32> to vector<16x32xf32>
    %261 = arith.subf %241, %260 : vector<16x32xf32>
    %262 = vector.broadcast %259 : vector<16x1xf32> to vector<16x32xf32>
    %263 = arith.mulf %261, %262 : vector<16x32xf32>
    %264 = vector.broadcast %243 : vector<1x32xf32> to vector<16x32xf32>
    %265 = arith.mulf %263, %264 : vector<16x32xf32>
    %266 = vector.broadcast %245 : vector<1x32xf32> to vector<16x32xf32>
    %267 = arith.addf %265, %266 : vector<16x32xf32>
    %c1_100 = arith.constant 1 : index
    %c0_101 = arith.constant 0 : index
    %c0_102 = arith.constant 0 : index
    %268 = vector.load %arg10[%c1_100, %c0_101, %c0_102] : memref<2x32x64xf32, #tpu.memory_space<vmem>>, vector<1x32x64xf32>
    %269 = vector.shape_cast %268 : vector<1x32x64xf32> to vector<32x64xf32>
    %cst_103 = arith.constant dense<0.000000e+00> : vector<16x64xf32>
    %270 = tpu.matmul %267, %269, %cst_103 {dimension_numbers = #tpu.dot_dimension_numbers<[1], [0], [0], [1], [0, 0, 1, 1], [], []>} : vector<16x32xf32>, vector<32x64xf32>, vector<16x64xf32> -> vector<16x64xf32>
    %c1_104 = arith.constant 1 : index
    %c0_105 = arith.constant 0 : index
    %c0_106 = arith.constant 0 : index
    %271 = vector.load %arg11[%c1_104, %c0_105, %c0_106] : memref<2x1x64xf32, #tpu.memory_space<vmem>>, vector<1x1x64xf32>
    %272 = vector.shape_cast %271 : vector<1x1x64xf32> to vector<1x64xf32>
    %273 = vector.broadcast %272 : vector<1x64xf32> to vector<16x64xf32>
    %274 = arith.addf %270, %273 : vector<16x64xf32>
    %cst_107 = arith.constant 5.000000e-01 : f32
    %275 = vector.broadcast %cst_107 : f32 to vector<16x64xf32>
    %276 = arith.mulf %275, %274 : vector<16x64xf32>
    %cst_108 = arith.constant 4.471500e-02 : f32
    %277 = vector.broadcast %cst_108 : f32 to vector<16x64xf32>
    %278 = arith.mulf %277, %274 : vector<16x64xf32>
    %279 = arith.mulf %278, %274 : vector<16x64xf32>
    %280 = arith.mulf %279, %274 : vector<16x64xf32>
    %281 = arith.addf %274, %280 : vector<16x64xf32>
    %cst_109 = arith.constant 0.797884583 : f32
    %282 = vector.broadcast %cst_109 : f32 to vector<16x64xf32>
    %283 = arith.mulf %282, %281 : vector<16x64xf32>
    %284 = math.tanh %283 : vector<16x64xf32>
    %cst_110 = arith.constant 1.000000e+00 : f32
    %285 = vector.broadcast %cst_110 : f32 to vector<16x64xf32>
    %286 = arith.addf %285, %284 : vector<16x64xf32>
    %287 = arith.mulf %276, %286 : vector<16x64xf32>
    %c1_111 = arith.constant 1 : index
    %c0_112 = arith.constant 0 : index
    %c0_113 = arith.constant 0 : index
    %288 = vector.load %arg12[%c1_111, %c0_112, %c0_113] : memref<2x64x32xf32, #tpu.memory_space<vmem>>, vector<1x64x32xf32>
    %289 = vector.shape_cast %288 : vector<1x64x32xf32> to vector<64x32xf32>
    %cst_114 = arith.constant dense<0.000000e+00> : vector<16x32xf32>
    %290 = tpu.matmul %287, %289, %cst_114 {dimension_numbers = #tpu.dot_dimension_numbers<[1], [0], [0], [1], [0, 0, 1, 1], [], []>} : vector<16x64xf32>, vector<64x32xf32>, vector<16x32xf32> -> vector<16x32xf32>
    %c1_115 = arith.constant 1 : index
    %c0_116 = arith.constant 0 : index
    %c0_117 = arith.constant 0 : index
    %291 = vector.load %arg13[%c1_115, %c0_116, %c0_117] : memref<2x1x32xf32, #tpu.memory_space<vmem>>, vector<1x1x32xf32>
    %292 = vector.shape_cast %291 : vector<1x1x32xf32> to vector<1x32xf32>
    %293 = vector.broadcast %292 : vector<1x32xf32> to vector<16x32xf32>
    %294 = arith.addf %290, %293 : vector<16x32xf32>
    %295 = arith.addf %294, %267 : vector<16x32xf32>
    %c1_118 = arith.constant 1 : index
    %c0_119 = arith.constant 0 : index
    %c0_120 = arith.constant 0 : index
    %296 = vector.load %arg14[%c1_118, %c0_119, %c0_120] : memref<2x1x32xf32, #tpu.memory_space<vmem>>, vector<1x1x32xf32>
    %297 = vector.shape_cast %296 : vector<1x1x32xf32> to vector<1x32xf32>
    %c1_121 = arith.constant 1 : index
    %c0_122 = arith.constant 0 : index
    %c0_123 = arith.constant 0 : index
    %298 = vector.load %arg15[%c1_121, %c0_122, %c0_123] : memref<2x1x32xf32, #tpu.memory_space<vmem>>, vector<1x1x32xf32>
    %299 = vector.shape_cast %298 : vector<1x1x32xf32> to vector<1x32xf32>
    %cst_124 = arith.constant dense<0.000000e+00> : vector<16xf32>
    %300 = vector.multi_reduction <add>, %295, %cst_124 [1] : vector<16x32xf32> to vector<16xf32>
    %301 = vector.shape_cast %300 : vector<16xf32> to vector<16x1xf32>
    %cst_125 = arith.constant 3.200000e+01 : f32
    %302 = vector.broadcast %cst_125 : f32 to vector<16x1xf32>
    %303 = arith.divf %301, %302 : vector<16x1xf32>
    %304 = vector.broadcast %303 : vector<16x1xf32> to vector<16x32xf32>
    %305 = arith.subf %295, %304 : vector<16x32xf32>
    %306 = arith.mulf %305, %305 : vector<16x32xf32>
    %cst_126 = arith.constant dense<0.000000e+00> : vector<16xf32>
    %307 = vector.multi_reduction <add>, %306, %cst_126 [1] : vector<16x32xf32> to vector<16xf32>
    %308 = vector.shape_cast %307 : vector<16xf32> to vector<16x1xf32>
    %cst_127 = arith.constant 3.200000e+01 : f32
    %309 = vector.broadcast %cst_127 : f32 to vector<16x1xf32>
    %310 = arith.divf %308, %309 : vector<16x1xf32>
    %cst_128 = arith.constant 9.99999996E-13 : f32
    %311 = vector.broadcast %cst_128 : f32 to vector<16x1xf32>
    %312 = arith.addf %310, %311 : vector<16x1xf32>
    %313 = math.rsqrt %312 : vector<16x1xf32>
    %314 = vector.broadcast %303 : vector<16x1xf32> to vector<16x32xf32>
    %315 = arith.subf %295, %314 : vector<16x32xf32>
    %316 = vector.broadcast %313 : vector<16x1xf32> to vector<16x32xf32>
    %317 = arith.mulf %315, %316 : vector<16x32xf32>
    %318 = vector.broadcast %297 : vector<1x32xf32> to vector<16x32xf32>
    %319 = arith.mulf %317, %318 : vector<16x32xf32>
    %320 = vector.broadcast %299 : vector<1x32xf32> to vector<16x32xf32>
    %321 = arith.addf %319, %320 : vector<16x32xf32>
    %c0_129 = arith.constant 0 : index
    %c0_130 = arith.constant 0 : index
    %322 = vector.load %arg21[%c0_129, %c0_130] : memref<16x32xf32, #tpu.memory_space<vmem>>, vector<16x32xf32>
    tpu.vector_store %arg21[%c0_129, %c0_130], %321 {strides = array<i32>} : memref<16x32xf32, #tpu.memory_space<vmem>>, vector<16x32xf32>,
    %c0_131 = arith.constant 0 : index
    %c0_132 = arith.constant 0 : index
    %323 = tpu.strided_load %arg21[%c0_131, %c0_132] {strides = array<i32: 8, 1>} : memref<16x32xf32, #tpu.memory_space<vmem>>, vector<2x32xf32>
    %c0_133 = arith.constant 0 : index
    %c0_134 = arith.constant 0 : index
    %324 = vector.load %arg16[%c0_133, %c0_134] : memref<32x32xf32, #tpu.memory_space<vmem>>, vector<32x32xf32>
    %cst_135 = arith.constant dense<0.000000e+00> : vector<2x32xf32>
    %325 = tpu.matmul %323, %324, %cst_135 {dimension_numbers = #tpu.dot_dimension_numbers<[1], [0], [0], [1], [0, 0, 1, 1], [], []>} : vector<2x32xf32>, vector<32x32xf32>, vector<2x32xf32> -> vector<2x32xf32>
    %c0_136 = arith.constant 0 : index
    %c0_137 = arith.constant 0 : index
    %326 = vector.load %arg17[%c0_136, %c0_137] : memref<1x32xf32, #tpu.memory_space<vmem>>, vector<1x32xf32>
    %327 = vector.broadcast %326 : vector<1x32xf32> to vector<2x32xf32>
    %328 = arith.addf %325, %327 : vector<2x32xf32>
    %cst_138 = arith.constant 0.000000e+00 : f32
    %329 = vector.broadcast %cst_138 : f32 to vector<2x32xf32>
    %330 = arith.maximumf %328, %329 : vector<2x32xf32>
    %c0_139 = arith.constant 0 : index
    %c0_140 = arith.constant 0 : index
    %331 = vector.load %arg18[%c0_139, %c0_140] : memref<32x8xf32, #tpu.memory_space<vmem>>, vector<32x8xf32>
    %cst_141 = arith.constant dense<0.000000e+00> : vector<2x8xf32>
    %332 = tpu.matmul %330, %331, %cst_141 {dimension_numbers = #tpu.dot_dimension_numbers<[1], [0], [0], [1], [0, 0, 1, 1], [], []>} : vector<2x32xf32>, vector<32x8xf32>, vector<2x8xf32> -> vector<2x8xf32>
    %c0_142 = arith.constant 0 : index
    %c0_143 = arith.constant 0 : index
    %333 = vector.load %arg19[%c0_142, %c0_143] : memref<1x8xf32, #tpu.memory_space<vmem>>, vector<1x8xf32>
    %334 = vector.broadcast %333 : vector<1x8xf32> to vector<2x8xf32>
    %335 = arith.addf %332, %334 : vector<2x8xf32>
    %c0_144 = arith.constant 0 : index
    %c0_145 = arith.constant 0 : index
    %336 = vector.load %arg20[%c0_144, %c0_145] : memref<2x8xf32, #tpu.memory_space<vmem>>, vector<2x8xf32>
    tpu.vector_store %arg20[%c0_144, %c0_145], %335 {strides = array<i32>} : memref<2x8xf32, #tpu.memory_space<vmem>>, vector<2x8xf32>,
    return
  }
}

</mosaic_0001>

<llo_original>
// kernel: tpu_custom_call.1
$region0: #{tpu_custom_call.1}
  #allocation0 [shape = 'u32[]', space=smem, size = 0x4, offset = 0x4, fixed_abs, tag = 'smem constant byte address 0x4 - core index']
  #allocation1 [shape = 'u32[144,128]{1,0:T(1,128)}', space=vmem, size = 0x12000, scoped, tag = 'internal scratch']
  #allocation2 [shape = 'f32[16,32]{1,0:T(8,128)}', space=vmem, size = 0x2000, scoped, tag = 'scratch operand']
  %s0 = inlined_call_operand.hbm [shape: f32[16,32], index: 0, kind: input, shape index: {}]
  %s1 = inlined_call_operand.hbm [shape: f32[1,32], index: 1, kind: input, shape index: {}]
  %s2 = inlined_call_operand.hbm [shape: f32[1,32], index: 2, kind: input, shape index: {}]
  %s3 = inlined_call_operand.vmem [shape: f32[8,1,8], index: 3, kind: input, shape index: {}]
  %s4 = inlined_call_operand.vmem [shape: f32[2,32,96], index: 4, kind: input, shape index: {}]
  %s5 = inlined_call_operand.vmem [shape: f32[2,1,96], index: 5, kind: input, shape index: {}]
  %s6 = inlined_call_operand.vmem [shape: f32[2,32,32], index: 6, kind: input, shape index: {}]
  %s7 = inlined_call_operand.vmem [shape: f32[2,1,32], index: 7, kind: input, shape index: {}]
  %s8 = inlined_call_operand.vmem [shape: f32[2,1,32], index: 8, kind: input, shape index: {}]
  %s9 = inlined_call_operand.vmem [shape: f32[2,1,32], index: 9, kind: input, shape index: {}]
  %s10 = inlined_call_operand.vmem [shape: f32[2,32,64], index: 10, kind: input, shape index: {}]
  %s11 = inlined_call_operand.vmem [shape: f32[2,1,64], index: 11, kind: input, shape index: {}]
  %s12 = inlined_call_operand.vmem [shape: f32[2,64,32], index: 12, kind: input, shape index: {}]
  %s13 = inlined_call_operand.vmem [shape: f32[2,1,32], index: 13, kind: input, shape index: {}]
  %s14 = inlined_call_operand.vmem [shape: f32[2,1,32], index: 14, kind: input, shape index: {}]
  %s15 = inlined_call_operand.vmem [shape: f32[2,1,32], index: 15, kind: input, shape index: {}]
  %s16 = inlined_call_operand.vmem [shape: f32[32,32], index: 16, kind: input, shape index: {}]
  %s17 = inlined_call_operand.vmem [shape: f32[1,32], index: 17, kind: input, shape index: {}]
  %s18 = inlined_call_operand.vmem [shape: f32[32,8], index: 18, kind: input, shape index: {}]
  %s19 = inlined_call_operand.vmem [shape: f32[1,8], index: 19, kind: input, shape index: {}]
  %s20 = inlined_call_operand.hbm [shape: f32[2,8], index: 20, kind: output, shape index: {}]
  %s21 = sld [smem:[#allocation0]]
  $region102: #{tpu_custom_call.1} parent=0
    _
  %s23 = ssub.s32 1, %s21
  %s24 = scalar_select 0, %s23, %s21
  $region1: #{tpu_custom_call.1} parent=0
    #allocation3 [shape = 'u8[8192]{0}', space=vmem, size = 0x2000, scoped, tag = 'input window, operand 0, single buffered']
    #allocation4 [shape = 's32[1]{0}', space=sflag, size = 0x4, scoped, tag = 'scoped memory for tpu_custom_call.1']
    #allocation5 [shape = 's32[1]{0}', space=sflag, size = 0x4, scoped, tag = 'scoped memory for tpu_custom_call.1']
    #allocation6 [shape = 'u8[512]{0}', space=vmem, size = 0x400, scoped, tag = 'input window, operand 1, single buffered']
    #allocation7 [shape = 's32[1]{0}', space=sflag, size = 0x4, scoped, tag = 'scoped memory for tpu_custom_call.1']
    #allocation8 [shape = 'u8[512]{0}', space=vmem, size = 0x400, scoped, tag = 'input window, operand 2, single buffered']
    #allocation9 [shape = 'u8[1024]{0}', space=vmem, size = 0x400, scoped, tag = 'output window, operand 0, single buffered']
    %25 = vsyncpa [#allocation4], 0
    %26 = vsyncpa [#allocation7], 0
    %27 = vsyncpa [#allocation5], 0
    // Predicated region
    $region2: #{tpu_custom_call.1} parent=1 // pred_check
      _
    $region3: #{tpu_custom_call.1} parent=1 // pred_check_branch
      %29 = sbr.rel (0) target = $region5
    $region4: #{tpu_custom_call.1} parent=1 // pred_region
      %s31 = ssub.s32 256, 256
      %32 = vsyncadd [#allocation4], %s31
      %s33 = sshll.u32 [#allocation3], 4
      %s34 = int_to_ptr.vmem [resolvable:$true] %s33
      %39 = dma.hbm_to_vmem [thread:$0]  %s0, 256, %s34, [#allocation4], 128, 128, 8
    $region5: #{tpu_custom_call.1} parent=1 // pred_fallthru
      _
    // Predicated region
    $region6: #{tpu_custom_call.1} parent=1 // pred_check
      _
    $region7: #{tpu_custom_call.1} parent=1 // pred_check_branch
      %41 = sbr.rel (0) target = $region9
    $region8: #{tpu_custom_call.1} parent=1 // pred_region
      %s43 = ssub.s32 16, 16
      %44 = vsyncadd [#allocation7], %s43
      %s46 = sshll.u32 [#allocation6], 4
      %s47 = int_to_ptr.vmem [resolvable:$true] %s46
      %49 = dma.hbm_to_vmem [thread:$0]  %s1, 16, %s47, [#allocation7]
    $region9: #{tpu_custom_call.1} parent=1 // pred_fallthru
      _
    // Predicated region
    $region10: #{tpu_custom_call.1} parent=1 // pred_check
      _
    $region11: #{tpu_custom_call.1} parent=1 // pred_check_branch
      %51 = sbr.rel (0) target = $region13
    $region12: #{tpu_custom_call.1} parent=1 // pred_region
      %s53 = ssub.s32 16, 16
      %54 = vsyncadd [#allocation7], %s53
      %s56 = sshll.u32 [#allocation8], 4
      %s57 = int_to_ptr.vmem [resolvable:$true] %s56
      %59 = dma.hbm_to_vmem [thread:$0]  %s2, 16, %s57, [#allocation7]
    $region13: #{tpu_custom_call.1} parent=1 // pred_fallthru
      _
    // Predicated region
    $region14: #{tpu_custom_call.1} parent=1 // pred_check
      _
    $region15: #{tpu_custom_call.1} parent=1 // pred_check_branch
      %61 = sbr.rel (0) target = $region17
    $region16: #{tpu_custom_call.1} parent=1 // pred_region
      _
    $region17: #{tpu_custom_call.1} parent=1 // pred_fallthru
      _
    // Predicated region
    $region18: #{tpu_custom_call.1} parent=1 // pred_check
      _
    $region19: #{tpu_custom_call.1} parent=1 // pred_check_branch
      %63 = sbr.rel (0) target = $region21
    $region20: #{tpu_custom_call.1} parent=1 // pred_region
      _
    $region21: #{tpu_custom_call.1} parent=1 // pred_fallthru
      _
    // Predicated region
    $region22: #{tpu_custom_call.1} parent=1 // pred_check
      _
    $region23: #{tpu_custom_call.1} parent=1 // pred_check_branch
      %65 = sbr.rel (0) target = $region25
    $region24: #{tpu_custom_call.1} parent=1 // pred_region
      _
    $region25: #{tpu_custom_call.1} parent=1 // pred_fallthru
      _
    // Predicated region
    $region26: #{tpu_custom_call.1} parent=1 // pred_check
      _
    $region27: #{tpu_custom_call.1} parent=1 // pred_check_branch
      %67 = sbr.rel (0) target = $region29
    $region28: #{tpu_custom_call.1} parent=1 // pred_region
      _
    $region29: #{tpu_custom_call.1} parent=1 // pred_fallthru
      _
    // Predicated region
    $region30: #{tpu_custom_call.1} parent=1 // pred_check
      _
    $region31: #{tpu_custom_call.1} parent=1 // pred_check_branch
      %69 = sbr.rel (0) target = $region33
    $region32: #{tpu_custom_call.1} parent=1 // pred_region
      _
    $region33: #{tpu_custom_call.1} parent=1 // pred_fallthru
      _
    // Predicated region
    $region34: #{tpu_custom_call.1} parent=1 // pred_check
      _
    $region35: #{tpu_custom_call.1} parent=1 // pred_check_branch
      %71 = sbr.rel (0) target = $region37
    $region36: #{tpu_custom_call.1} parent=1 // pred_region
      _
    $region37: #{tpu_custom_call.1} parent=1 // pred_fallthru
      _
    // Predicated region
    $region38: #{tpu_custom_call.1} parent=1 // pred_check
      _
    $region39: #{tpu_custom_call.1} parent=1 // pred_check_branch
      %73 = sbr.rel (0) target = $region41
    $region40: #{tpu_custom_call.1} parent=1 // pred_region
      _
    $region41: #{tpu_custom_call.1} parent=1 // pred_fallthru
      _
    // Predicated region
    $region42: #{tpu_custom_call.1} parent=1 // pred_check
      _
    $region43: #{tpu_custom_call.1} parent=1 // pred_check_branch
      %75 = sbr.rel (0) target = $region45
    $region44: #{tpu_custom_call.1} parent=1 // pred_region
      _
    $region45: #{tpu_custom_call.1} parent=1 // pred_fallthru
      _
    // Predicated region
    $region46: #{tpu_custom_call.1} parent=1 // pred_check
      _
    $region47: #{tpu_custom_call.1} parent=1 // pred_check_branch
      %77 = sbr.rel (0) target = $region49
    $region48: #{tpu_custom_call.1} parent=1 // pred_region
      _
    $region49: #{tpu_custom_call.1} parent=1 // pred_fallthru
      _
    // Predicated region
    $region50: #{tpu_custom_call.1} parent=1 // pred_check
      _
    $region51: #{tpu_custom_call.1} parent=1 // pred_check_branch
      %79 = sbr.rel (0) target = $region53
    $region52: #{tpu_custom_call.1} parent=1 // pred_region
      _
    $region53: #{tpu_custom_call.1} parent=1 // pred_fallthru
      _
    // Predicated region
    $region54: #{tpu_custom_call.1} parent=1 // pred_check
      _
    $region55: #{tpu_custom_call.1} parent=1 // pred_check_branch
      %81 = sbr.rel (0) target = $region57
    $region56: #{tpu_custom_call.1} parent=1 // pred_region
      _
    $region57: #{tpu_custom_call.1} parent=1 // pred_fallthru
      _
    // Predicated region
    $region58: #{tpu_custom_call.1} parent=1 // pred_check
      _
    $region59: #{tpu_custom_call.1} parent=1 // pred_check_branch
      %83 = sbr.rel (0) target = $region61
    $region60: #{tpu_custom_call.1} parent=1 // pred_region
      _
    $region61: #{tpu_custom_call.1} parent=1 // pred_fallthru
      _
    // Predicated region
    $region62: #{tpu_custom_call.1} parent=1 // pred_check
      _
    $region63: #{tpu_custom_call.1} parent=1 // pred_check_branch
      %85 = sbr.rel (0) target = $region65
    $region64: #{tpu_custom_call.1} parent=1 // pred_region
      _
    $region65: #{tpu_custom_call.1} parent=1 // pred_fallthru
      _
    // Predicated region
    $region66: #{tpu_custom_call.1} parent=1 // pred_check
      _
    $region67: #{tpu_custom_call.1} parent=1 // pred_check_branch
      %87 = sbr.rel (0) target = $region69
    $region68: #{tpu_custom_call.1} parent=1 // pred_region
      _
    $region69: #{tpu_custom_call.1} parent=1 // pred_fallthru
      _
    // Predicated region
    $region70: #{tpu_custom_call.1} parent=1 // pred_check
      _
    $region71: #{tpu_custom_call.1} parent=1 // pred_check_branch
      %89 = sbr.rel (0) target = $region73
    $region72: #{tpu_custom_call.1} parent=1 // pred_region
      _
    $region73: #{tpu_custom_call.1} parent=1 // pred_fallthru
      _
    // Predicated region
    $region74: #{tpu_custom_call.1} parent=1 // pred_check
      _
    $region75: #{tpu_custom_call.1} parent=1 // pred_check_branch
      %91 = sbr.rel (0) target = $region77
    $region76: #{tpu_custom_call.1} parent=1 // pred_region
      _
    $region77: #{tpu_custom_call.1} parent=1 // pred_fallthru
      _
    // Predicated region
    $region78: #{tpu_custom_call.1} parent=1 // pred_check
      _
    $region79: #{tpu_custom_call.1} parent=1 // pred_check_branch
      %93 = sbr.rel (0) target = $region81
    $region80: #{tpu_custom_call.1} parent=1 // pred_region
      _
    $region81: #{tpu_custom_call.1} parent=1 // pred_fallthru
      _
    // Predicated region
    $region82: #{tpu_custom_call.1} parent=1 // pred_check
      _
    $region83: #{tpu_custom_call.1} parent=1 // pred_check_branch
      %95 = sbr.rel (0) target = $region85
    $region84: #{tpu_custom_call.1} parent=1 // pred_region
      %96 = dma.done [#allocation4], 256
    $region85: #{tpu_custom_call.1} parent=1 // pred_fallthru
      _
    // Predicated region
    $region86: #{tpu_custom_call.1} parent=1 // pred_check
      _
    $region87: #{tpu_custom_call.1} parent=1 // pred_check_branch
      %98 = sbr.rel (0) target = $region89
    $region88: #{tpu_custom_call.1} parent=1 // pred_region
      %99 = dma.done [#allocation7], 16
    $region89: #{tpu_custom_call.1} parent=1 // pred_fallthru
      _
    // Predicated region
    $region90: #{tpu_custom_call.1} parent=1 // pred_check
      _
    $region91: #{tpu_custom_call.1} parent=1 // pred_check_branch
      %101 = sbr.rel (0) target = $region93
    $region92: #{tpu_custom_call.1} parent=1 // pred_region
      %102 = dma.done [#allocation7], 16
    $region93: #{tpu_custom_call.1} parent=1 // pred_fallthru
      _
    %v103 = vld [vmem:[#allocation3] sm:$0xff]
    %v104 = vld [vmem:[#allocation3 + $0x8] sm:$0xff]
    %v105 = vld [vmem:[#allocation6] sm:$0x1]
    %v106 = vld [vmem:[#allocation8] sm:$0x1]
    %vm107 = vcmask 261120
    %v108 = vsel %vm107, %v103, 0.0
    %109 = vadd.xlane.f32.xlu0 %v108
    %v110 = vpop.xlane.xlu0 %109
    %v111 = vsel %vm107, %v104, 0.0
    %112 = vadd.xlane.f32.xlu0 %v111
    %v113 = vpop.xlane.xlu0 %112
    %v114 = vrcp.pop 32.0
    %v115 = vmul.f32 %v110, %v114
    %v116 = vmul.f32 %v113, %v114
    %v117 = vsub.f32 %v103, %v115
    %v118 = vsub.f32 %v104, %v116
    %v119 = vmul.f32 %v117, %v117
    %v120 = vmul.f32 %v118, %v118
    %v121 = vsel %vm107, %v119, 0.0
    %122 = vadd.xlane.f32.xlu0 %v121
    %v123 = vpop.xlane.xlu0 %122
    %v124 = vsel %vm107, %v120, 0.0
    %125 = vadd.xlane.f32.xlu0 %v124
    %v126 = vpop.xlane.xlu0 %125
    %v127 = vmul.f32 %v123, %v114
    %v128 = vmul.f32 %v126, %v114
    %v129 = vadd.f32 %v127, 1e-12
    %v130 = vadd.f32 %v128, 1e-12
    %v131 = vrsqrt.pop %v129
    %v132 = vrsqrt.pop %v130
    %v133 = vmul.f32 %v117, %v131
    %v134 = vmul.f32 %v118, %v132
    %v136 = vlaneseq
    %v137 = vshrl.u32 %v136, 7
    %v138 = vsub.s32 0, %v137
    %v139 = vrot.slane %v105, %v138
    %v141 = vmul.f32 %v133, %v139
    %v142 = vmul.f32 %v134, %v139
    %v144 = vlaneseq
    %v145 = vshrl.u32 %v144, 7
    %v146 = vsub.s32 0, %v145
    %v147 = vrot.slane %v106, %v146
    %v149 = vadd.f32 %v141, %v147
    %v150 = vadd.f32 %v142, %v147
    %v151 = vld [vmem:[%s3] sm:$0x1]
    %v152 = vld [vmem:[%s3 + $0x1] sm:$0x1]
    %v153 = vld [vmem:[%s3 + $0x2] sm:$0x1]
    %v154 = vld [vmem:[%s3 + $0x3] sm:$0x1]
    %v155 = vld [vmem:[%s3 + $0x4] sm:$0x1]
    %v156 = vld [vmem:[%s3 + $0x5] sm:$0x1]
    %v157 = vld [vmem:[%s3 + $0x6] sm:$0x1]
    %v158 = vld [vmem:[%s3 + $0x7] sm:$0x1]
    %v167 = vlaneseq
    %v168 = vshrl.u32 %v167, 7
    %v169 = vsub.s32 0, %v168
    %v170 = vrot.slane %v151, %v169
    %v171 = vlaneseq
    %v172 = vshrl.u32 %v171, 7
    %v173 = vsub.s32 0, %v172
    %v174 = vrot.slane %v152, %v173
    %v175 = vlaneseq
    %v176 = vshrl.u32 %v175, 7
    %v177 = vsub.s32 0, %v176
    %v178 = vrot.slane %v153, %v177
    %v179 = vlaneseq
    %v180 = vshrl.u32 %v179, 7
    %v181 = vsub.s32 0, %v180
    %v182 = vrot.slane %v154, %v181
    %v183 = vlaneseq
    %v184 = vshrl.u32 %v183, 7
    %v185 = vsub.s32 0, %v184
    %v186 = vrot.slane %v155, %v185
    %v187 = vlaneseq
    %v188 = vshrl.u32 %v187, 7
    %v189 = vsub.s32 0, %v188
    %v190 = vrot.slane %v156, %v189
    %v191 = vlaneseq
    %v192 = vshrl.u32 %v191, 7
    %v193 = vsub.s32 0, %v192
    %v194 = vrot.slane %v157, %v193
    %v195 = vlaneseq
    %v196 = vshrl.u32 %v195, 7
    %v197 = vsub.s32 0, %v196
    %v198 = vrot.slane %v158, %v197
    %v207 = vld [vmem:[%s4] sm:$0xff]
    %v208 = vld [vmem:[%s4 + $0x8] sm:$0xff]
    %v209 = vld [vmem:[%s4 + $0x10] sm:$0xff]
    %v210 = vld [vmem:[%s4 + $0x18] sm:$0xff]
    %v211 = vld [vmem:[%s5] sm:$0x1]
    %v213 = vlaneseq
    %v214 = vshrl.u32 %v213, 7
    %v215 = vsub.s32 0, %v214
    %v216 = vrot.slane %v211, %v215
    %v219 = vsel %vm107, %v149, 0
    %v222 = vsel %vm107, %v150, 0
    %224 = vmatprep.subr.mxu0 0.0
    %225 = vmatpush1.msra.mxu0 0.0
    %226 = vmatprep.subr.mxu0 0.0
    %227 = vmatpush1.msra.mxu0 0.0
    %228 = vmatprep.subr.mxu0 0.0
    %229 = vmatpush1.msra.mxu0 0.0
    %230 = vmatprep.subr.mxu0 0.0
    %231 = vmatpush1.msra.mxu0 0.0
    %232 = vmatprep.subr.mxu0 0.0
    %233 = vmatpush1.msra.mxu0 0.0
    %234 = vmatprep.subr.mxu0 0.0
    %235 = vmatpush1.msra.mxu0 0.0
    %236 = vmatprep.subr.mxu0 0.0
    %237 = vmatpush1.msra.mxu0 0.0
    %238 = vmatprep.subr.mxu0 0.0
    %239 = vmatpush1.msra.mxu0 0.0
    %240 = vmatprep.subr.mxu0 0.0
    %241 = vmatpush1.msra.mxu0 0.0
    %242 = vmatprep.subr.mxu0 0.0
    %243 = vmatpush1.msra.mxu0 0.0
    %244 = vmatprep.subr.mxu0 0.0
    %245 = vmatpush1.msra.mxu0 0.0
    %246 = vmatprep.subr.mxu0 0.0
    %247 = vmatpush1.msra.mxu0 0.0
    %248 = vmatprep.subr.mxu0 0.0
    %249 = vmatpush1.msra.mxu0 %v210
    %250 = vmatprep.subr.mxu0 0.0
    %251 = vmatpush1.msra.mxu0 %v209
    %252 = vmatprep.subr.mxu0 0.0
    %253 = vmatpush1.msra.mxu0 %v208
    %254 = vmatprep.subr.mxu0 0.0
    %255 = vmatpush1.msra.mxu0 %v207
    %256 = vmatprep.subr.mxu0 0.0
    %257 = vmatpush2.msra.mxu0 0.0
    %258 = vmatprep.subr.mxu0 0.0
    %259 = vmatpush2.msra.mxu0 0.0
    %260 = vmatprep.subr.mxu0 0.0
    %261 = vmatpush2.msra.mxu0 0.0
    %262 = vmatprep.subr.mxu0 0.0
    %263 = vmatpush2.msra.mxu0 0.0
    %264 = vmatprep.subr.mxu0 0.0
    %265 = vmatpush2.msra.mxu0 0.0
    %266 = vmatprep.subr.mxu0 0.0
    %267 = vmatpush2.msra.mxu0 0.0
    %268 = vmatprep.subr.mxu0 0.0
    %269 = vmatpush2.msra.mxu0 0.0
    %270 = vmatprep.subr.mxu0 0.0
    %271 = vmatpush2.msra.mxu0 0.0
    %272 = vmatprep.subr.mxu0 0.0
    %273 = vmatpush2.msra.mxu0 0.0
    %274 = vmatprep.subr.mxu0 0.0
    %275 = vmatpush2.msra.mxu0 0.0
    %276 = vmatprep.subr.mxu0 0.0
    %277 = vmatpush2.msra.mxu0 0.0
    %278 = vmatprep.subr.mxu0 0.0
    %279 = vmatpush2.msra.mxu0 0.0
    %280 = vmatprep.subr.mxu0 0.0
    %281 = vmatpush2.msra.mxu0 0.0
    %282 = vmatprep.subr.mxu0 0.0
    %283 = vmatpush2.msra.mxu0 0.0
    %284 = vmatprep.subr.mxu0 0.0
    %285 = vmatpush2.msra.mxu0 0.0
    %286 = vmatprep.subr.mxu0 0.0
    %287 = vmatpush2.msra.mxu0 0.0
    %288 = vmatprep.mubr.f32.mxu0 0.0
    %289 = vmatmul.mubr.f32.gmra.mxu0 %v219
    %v290 = vpop.f32.mrf.mxu0
    %v291 = vadd.f32 %v216, %v290
    %v292 = vpop.f32.mrf.mxu0
    %293 = vmatprep.mubr.f32.mxu0 0.0
    %294 = vmatmul.mubr.f32.gmra.mxu0 %v222
    %v295 = vpop.f32.mrf.mxu0
    %v296 = vadd.f32 %v216, %v295
    %v297 = vpop.f32.mrf.mxu0
    %298 = vdwg.mxu0
    %v299 = vmul.f32 %v291, 0.35355338
    %v300 = vmul.f32 %v296, 0.35355338
    %303 = vrot.lane.b32.xlu0 %v299, 120
    %v304 = vpop.permute.xlu0 %303
    %305 = vrot.lane.b32.xlu0 %v300, 120
    %v306 = vpop.permute.xlu0 %305
    %307 = vrot.lane.b32.xlu0 %v299, 112
    %v308 = vpop.permute.xlu0 %307
    %309 = vrot.lane.b32.xlu0 %v300, 112
    %v310 = vpop.permute.xlu0 %309
    %311 = vrot.lane.b32.xlu0 %v299, 104
    %v312 = vpop.permute.xlu0 %311
    %313 = vrot.lane.b32.xlu0 %v300, 104
    %v314 = vpop.permute.xlu0 %313
    %317 = vrot.lane.b32.xlu0 %v291, 120
    %v318 = vpop.permute.xlu0 %317
    %319 = vrot.lane.b32.xlu0 %v296, 120
    %v320 = vpop.permute.xlu0 %319
    %321 = vrot.lane.b32.xlu0 %v291, 112
    %v322 = vpop.permute.xlu0 %321
    %323 = vrot.lane.b32.xlu0 %v296, 112
    %v324 = vpop.permute.xlu0 %323
    %325 = vrot.lane.b32.xlu0 %v291, 104
    %v326 = vpop.permute.xlu0 %325
    %327 = vrot.lane.b32.xlu0 %v296, 104
    %v328 = vpop.permute.xlu0 %327
    %329 = vrot.lane.b32.xlu0 %v291, 96
    %v330 = vpop.permute.xlu0 %329
    %vm331 = vcmask 64512
    %v332 = vsel %vm331, %v299, 0
    %v334 = vsel %vm331, %v330, 0
    %336 = vmatprep.subr.mxu0 0.0
    %337 = vmatpush1.xpose.msra.mxu0 0.0
    %338 = vmatprep.subr.mxu0 0.0
    %339 = vmatpush1.xpose.msra.mxu0 0.0
    %340 = vmatprep.subr.mxu0 0.0
    %341 = vmatpush1.xpose.msra.mxu0 0.0
    %342 = vmatprep.subr.mxu0 0.0
    %343 = vmatpush1.xpose.msra.mxu0 0.0
    %344 = vmatprep.subr.mxu0 0.0
    %345 = vmatpush1.xpose.msra.mxu0 0.0
    %346 = vmatprep.subr.mxu0 0.0
    %347 = vmatpush1.xpose.msra.mxu0 0.0
    %348 = vmatprep.subr.mxu0 0.0
    %349 = vmatpush1.xpose.msra.mxu0 0.0
    %350 = vmatprep.subr.mxu0 0.0
    %351 = vmatpush1.xpose.msra.mxu0 0.0
    %352 = vmatprep.subr.mxu0 0.0
    %353 = vmatpush1.xpose.msra.mxu0 0.0
    %354 = vmatprep.subr.mxu0 0.0
    %355 = vmatpush1.xpose.msra.mxu0 0.0
    %356 = vmatprep.subr.mxu0 0.0
    %357 = vmatpush1.xpose.msra.mxu0 0.0
    %358 = vmatprep.subr.mxu0 0.0
    %359 = vmatpush1.xpose.msra.mxu0 0.0
    %360 = vmatprep.subr.mxu0 0.0
    %361 = vmatpush1.xpose.msra.mxu0 0.0
    %362 = vmatprep.subr.mxu0 0.0
    %363 = vmatpush1.xpose.msra.mxu0 0.0
    %364 = vmatprep.subr.mxu0 0.0
    %365 = vmatpush1.xpose.msra.mxu0 0.0
    %366 = vmatprep.subr.mxu0 0.0
    %367 = vmatpush1.xpose.msra.mxu0 %v334
    %368 = vmatprep.subr.mxu0 0.0
    %369 = vmatpush2.xpose.msra.mxu0 0.0
    %370 = vmatprep.subr.mxu0 0.0
    %371 = vmatpush2.xpose.msra.mxu0 0.0
    %372 = vmatprep.subr.mxu0 0.0
    %373 = vmatpush2.xpose.msra.mxu0 0.0
    %374 = vmatprep.subr.mxu0 0.0
    %375 = vmatpush2.xpose.msra.mxu0 0.0
    %376 = vmatprep.subr.mxu0 0.0
    %377 = vmatpush2.xpose.msra.mxu0 0.0
    %378 = vmatprep.subr.mxu0 0.0
    %379 = vmatpush2.xpose.msra.mxu0 0.0
    %380 = vmatprep.subr.mxu0 0.0
    %381 = vmatpush2.xpose.msra.mxu0 0.0
    %382 = vmatprep.subr.mxu0 0.0
    %383 = vmatpush2.xpose.msra.mxu0 0.0
    %384 = vmatprep.subr.mxu0 0.0
    %385 = vmatpush2.xpose.msra.mxu0 0.0
    %386 = vmatprep.subr.mxu0 0.0
    %387 = vmatpush2.xpose.msra.mxu0 0.0
    %388 = vmatprep.subr.mxu0 0.0
    %389 = vmatpush2.xpose.msra.mxu0 0.0
    %390 = vmatprep.subr.mxu0 0.0
    %391 = vmatpush2.xpose.msra.mxu0 0.0
    %392 = vmatprep.subr.mxu0 0.0
    %393 = vmatpush2.xpose.msra.mxu0 0.0
    %394 = vmatprep.subr.mxu0 0.0
    %395 = vmatpush2.xpose.msra.mxu0 0.0
    %396 = vmatprep.subr.mxu0 0.0
    %397 = vmatpush2.xpose.msra.mxu0 0.0
    %398 = vmatprep.subr.mxu0 0.0
    %399 = vmatpush2.xpose.msra.mxu0 0.0
    %400 = vmatprep.mubr.f32.mxu0 0.0
    %401 = vmatmul.mubr.f32.gmra.mxu0 %v332
    %v402 = vpop.f32.mrf.mxu0
    %v403 = vadd.f32 %v170, %v402
    %v404 = vpop.f32.mrf.mxu0
    %405 = vdwg.mxu0
    %406 = vrot.lane.b32.xlu0 %v296, 96
    %v407 = vpop.permute.xlu0 %406
    %v408 = vsel %vm331, %v300, 0
    %v410 = vsel %vm331, %v407, 0
    %412 = vmatprep.subr.mxu0 0.0
    %413 = vmatpush1.xpose.msra.mxu0 0.0
    %414 = vmatprep.subr.mxu0 0.0
    %415 = vmatpush1.xpose.msra.mxu0 0.0
    %416 = vmatprep.subr.mxu0 0.0
    %417 = vmatpush1.xpose.msra.mxu0 0.0
    %418 = vmatprep.subr.mxu0 0.0
    %419 = vmatpush1.xpose.msra.mxu0 0.0
    %420 = vmatprep.subr.mxu0 0.0
    %421 = vmatpush1.xpose.msra.mxu0 0.0
    %422 = vmatprep.subr.mxu0 0.0
    %423 = vmatpush1.xpose.msra.mxu0 0.0
    %424 = vmatprep.subr.mxu0 0.0
    %425 = vmatpush1.xpose.msra.mxu0 0.0
    %426 = vmatprep.subr.mxu0 0.0
    %427 = vmatpush1.xpose.msra.mxu0 0.0
    %428 = vmatprep.subr.mxu0 0.0
    %429 = vmatpush1.xpose.msra.mxu0 0.0
    %430 = vmatprep.subr.mxu0 0.0
    %431 = vmatpush1.xpose.msra.mxu0 0.0
    %432 = vmatprep.subr.mxu0 0.0
    %433 = vmatpush1.xpose.msra.mxu0 0.0
    %434 = vmatprep.subr.mxu0 0.0
    %435 = vmatpush1.xpose.msra.mxu0 0.0
    %436 = vmatprep.subr.mxu0 0.0
    %437 = vmatpush1.xpose.msra.mxu0 0.0
    %438 = vmatprep.subr.mxu0 0.0
    %439 = vmatpush1.xpose.msra.mxu0 0.0
    %440 = vmatprep.subr.mxu0 0.0
    %441 = vmatpush1.xpose.msra.mxu0 0.0
    %442 = vmatprep.subr.mxu0 0.0
    %443 = vmatpush1.xpose.msra.mxu0 %v410
    %444 = vmatprep.subr.mxu0 0.0
    %445 = vmatpush2.xpose.msra.mxu0 0.0
    %446 = vmatprep.subr.mxu0 0.0
    %447 = vmatpush2.xpose.msra.mxu0 0.0
    %448 = vmatprep.subr.mxu0 0.0
    %449 = vmatpush2.xpose.msra.mxu0 0.0
    %450 = vmatprep.subr.mxu0 0.0
    %451 = vmatpush2.xpose.msra.mxu0 0.0
    %452 = vmatprep.subr.mxu0 0.0
    %453 = vmatpush2.xpose.msra.mxu0 0.0
    %454 = vmatprep.subr.mxu0 0.0
    %455 = vmatpush2.xpose.msra.mxu0 0.0
    %456 = vmatprep.subr.mxu0 0.0
    %457 = vmatpush2.xpose.msra.mxu0 0.0
    %458 = vmatprep.subr.mxu0 0.0
    %459 = vmatpush2.xpose.msra.mxu0 0.0
    %460 = vmatprep.subr.mxu0 0.0
    %461 = vmatpush2.xpose.msra.mxu0 0.0
    %462 = vmatprep.subr.mxu0 0.0
    %463 = vmatpush2.xpose.msra.mxu0 0.0
    %464 = vmatprep.subr.mxu0 0.0
    %465 = vmatpush2.xpose.msra.mxu0 0.0
    %466 = vmatprep.subr.mxu0 0.0
    %467 = vmatpush2.xpose.msra.mxu0 0.0
    %468 = vmatprep.subr.mxu0 0.0
    %469 = vmatpush2.xpose.msra.mxu0 0.0
    %470 = vmatprep.subr.mxu0 0.0
    %471 = vmatpush2.xpose.msra.mxu0 0.0
    %472 = vmatprep.subr.mxu0 0.0
    %473 = vmatpush2.xpose.msra.mxu0 0.0
    %474 = vmatprep.subr.mxu0 0.0
    %475 = vmatpush2.xpose.msra.mxu0 0.0
    %476 = vmatprep.mubr.f32.mxu0 0.0
    %477 = vmatmul.mubr.f32.gmra.mxu0 %v408
    %v478 = vpop.f32.mrf.mxu0
    %v479 = vadd.f32 %v174, %v478
    %v480 = vpop.f32.mrf.mxu0
    %481 = vdwg.mxu0
    %482 = vrot.lane.b32.xlu0 %v318, 96
    %v483 = vpop.permute.xlu0 %482
    %v484 = vsel %vm331, %v304, 0
    %v486 = vsel %vm331, %v483, 0
    %488 = vmatprep.subr.mxu0 0.0
    %489 = vmatpush1.xpose.msra.mxu0 0.0
    %490 = vmatprep.subr.mxu0 0.0
    %491 = vmatpush1.xpose.msra.mxu0 0.0
    %492 = vmatprep.subr.mxu0 0.0
    %493 = vmatpush1.xpose.msra.mxu0 0.0
    %494 = vmatprep.subr.mxu0 0.0
    %495 = vmatpush1.xpose.msra.mxu0 0.0
    %496 = vmatprep.subr.mxu0 0.0
    %497 = vmatpush1.xpose.msra.mxu0 0.0
    %498 = vmatprep.subr.mxu0 0.0
    %499 = vmatpush1.xpose.msra.mxu0 0.0
    %500 = vmatprep.subr.mxu0 0.0
    %501 = vmatpush1.xpose.msra.mxu0 0.0
    %502 = vmatprep.subr.mxu0 0.0
    %503 = vmatpush1.xpose.msra.mxu0 0.0
    %504 = vmatprep.subr.mxu0 0.0
    %505 = vmatpush1.xpose.msra.mxu0 0.0
    %506 = vmatprep.subr.mxu0 0.0
    %507 = vmatpush1.xpose.msra.mxu0 0.0
    %508 = vmatprep.subr.mxu0 0.0
    %509 = vmatpush1.xpose.msra.mxu0 0.0
    %510 = vmatprep.subr.mxu0 0.0
    %511 = vmatpush1.xpose.msra.mxu0 0.0
    %512 = vmatprep.subr.mxu0 0.0
    %513 = vmatpush1.xpose.msra.mxu0 0.0
    %514 = vmatprep.subr.mxu0 0.0
    %515 = vmatpush1.xpose.msra.mxu0 0.0
    %516 = vmatprep.subr.mxu0 0.0
    %517 = vmatpush1.xpose.msra.mxu0 0.0
    %518 = vmatprep.subr.mxu0 0.0
    %519 = vmatpush1.xpose.msra.mxu0 %v486
    %520 = vmatprep.subr.mxu0 0.0
    %521 = vmatpush2.xpose.msra.mxu0 0.0
    %522 = vmatprep.subr.mxu0 0.0
    %523 = vmatpush2.xpose.msra.mxu0 0.0
    %524 = vmatprep.subr.mxu0 0.0
    %525 = vmatpush2.xpose.msra.mxu0 0.0
    %526 = vmatprep.subr.mxu0 0.0
    %527 = vmatpush2.xpose.msra.mxu0 0.0
    %528 = vmatprep.subr.mxu0 0.0
    %529 = vmatpush2.xpose.msra.mxu0 0.0
    %530 = vmatprep.subr.mxu0 0.0
    %531 = vmatpush2.xpose.msra.mxu0 0.0
    %532 = vmatprep.subr.mxu0 0.0
    %533 = vmatpush2.xpose.msra.mxu0 0.0
    %534 = vmatprep.subr.mxu0 0.0
    %535 = vmatpush2.xpose.msra.mxu0 0.0
    %536 = vmatprep.subr.mxu0 0.0
    %537 = vmatpush2.xpose.msra.mxu0 0.0
    %538 = vmatprep.subr.mxu0 0.0
    %539 = vmatpush2.xpose.msra.mxu0 0.0
    %540 = vmatprep.subr.mxu0 0.0
    %541 = vmatpush2.xpose.msra.mxu0 0.0
    %542 = vmatprep.subr.mxu0 0.0
    %543 = vmatpush2.xpose.msra.mxu0 0.0
    %544 = vmatprep.subr.mxu0 0.0
    %545 = vmatpush2.xpose.msra.mxu0 0.0
    %546 = vmatprep.subr.mxu0 0.0
    %547 = vmatpush2.xpose.msra.mxu0 0.0
    %548 = vmatprep.subr.mxu0 0.0
    %549 = vmatpush2.xpose.msra.mxu0 0.0
    %550 = vmatprep.subr.mxu0 0.0
    %551 = vmatpush2.xpose.msra.mxu0 0.0
    %552 = vmatprep.mubr.f32.mxu0 0.0
    %553 = vmatmul.mubr.f32.gmra.mxu0 %v484
    %v554 = vpop.f32.mrf.mxu0
    %v555 = vadd.f32 %v178, %v554
    %v556 = vpop.f32.mrf.mxu0
    %557 = vdwg.mxu0
    %558 = vrot.lane.b32.xlu0 %v320, 96
    %v559 = vpop.permute.xlu0 %558
    %v560 = vsel %vm331, %v306, 0
    %v562 = vsel %vm331, %v559, 0
    %564 = vmatprep.subr.mxu0 0.0
    %565 = vmatpush1.xpose.msra.mxu0 0.0
    %566 = vmatprep.subr.mxu0 0.0
    %567 = vmatpush1.xpose.msra.mxu0 0.0
    %568 = vmatprep.subr.mxu0 0.0
    %569 = vmatpush1.xpose.msra.mxu0 0.0
    %570 = vmatprep.subr.mxu0 0.0
    %571 = vmatpush1.xpose.msra.mxu0 0.0
    %572 = vmatprep.subr.mxu0 0.0
    %573 = vmatpush1.xpose.msra.mxu0 0.0
    %574 = vmatprep.subr.mxu0 0.0
    %575 = vmatpush1.xpose.msra.mxu0 0.0
    %576 = vmatprep.subr.mxu0 0.0
    %577 = vmatpush1.xpose.msra.mxu0 0.0
    %578 = vmatprep.subr.mxu0 0.0
    %579 = vmatpush1.xpose.msra.mxu0 0.0
    %580 = vmatprep.subr.mxu0 0.0
    %581 = vmatpush1.xpose.msra.mxu0 0.0
    %582 = vmatprep.subr.mxu0 0.0
    %583 = vmatpush1.xpose.msra.mxu0 0.0
    %584 = vmatprep.subr.mxu0 0.0
    %585 = vmatpush1.xpose.msra.mxu0 0.0
    %586 = vmatprep.subr.mxu0 0.0
    %587 = vmatpush1.xpose.msra.mxu0 0.0
    %588 = vmatprep.subr.mxu0 0.0
    %589 = vmatpush1.xpose.msra.mxu0 0.0
    %590 = vmatprep.subr.mxu0 0.0
    %591 = vmatpush1.xpose.msra.mxu0 0.0
    %592 = vmatprep.subr.mxu0 0.0
    %593 = vmatpush1.xpose.msra.mxu0 0.0
    %594 = vmatprep.subr.mxu0 0.0
    %595 = vmatpush1.xpose.msra.mxu0 %v562
    %596 = vmatprep.subr.mxu0 0.0
    %597 = vmatpush2.xpose.msra.mxu0 0.0
    %598 = vmatprep.subr.mxu0 0.0
    %599 = vmatpush2.xpose.msra.mxu0 0.0
    %600 = vmatprep.subr.mxu0 0.0
    %601 = vmatpush2.xpose.msra.mxu0 0.0
    %602 = vmatprep.subr.mxu0 0.0
    %603 = vmatpush2.xpose.msra.mxu0 0.0
    %604 = vmatprep.subr.mxu0 0.0
    %605 = vmatpush2.xpose.msra.mxu0 0.0
    %606 = vmatprep.subr.mxu0 0.0
    %607 = vmatpush2.xpose.msra.mxu0 0.0
    %608 = vmatprep.subr.mxu0 0.0
    %609 = vmatpush2.xpose.msra.mxu0 0.0
    %610 = vmatprep.subr.mxu0 0.0
    %611 = vmatpush2.xpose.msra.mxu0 0.0
    %612 = vmatprep.subr.mxu0 0.0
    %613 = vmatpush2.xpose.msra.mxu0 0.0
    %614 = vmatprep.subr.mxu0 0.0
    %615 = vmatpush2.xpose.msra.mxu0 0.0
    %616 = vmatprep.subr.mxu0 0.0
    %617 = vmatpush2.xpose.msra.mxu0 0.0
    %618 = vmatprep.subr.mxu0 0.0
    %619 = vmatpush2.xpose.msra.mxu0 0.0
    %620 = vmatprep.subr.mxu0 0.0
    %621 = vmatpush2.xpose.msra.mxu0 0.0
    %622 = vmatprep.subr.mxu0 0.0
    %623 = vmatpush2.xpose.msra.mxu0 0.0
    %624 = vmatprep.subr.mxu0 0.0
    %625 = vmatpush2.xpose.msra.mxu0 0.0
    %626 = vmatprep.subr.mxu0 0.0
    %627 = vmatpush2.xpose.msra.mxu0 0.0
    %628 = vmatprep.mubr.f32.mxu0 0.0
    %629 = vmatmul.mubr.f32.gmra.mxu0 %v560
    %v630 = vpop.f32.mrf.mxu0
    %v631 = vadd.f32 %v182, %v630
    %v632 = vpop.f32.mrf.mxu0
    %633 = vdwg.mxu0
    %634 = vrot.lane.b32.xlu0 %v322, 96
    %v635 = vpop.permute.xlu0 %634
    %v636 = vsel %vm331, %v308, 0
    %v638 = vsel %vm331, %v635, 0
    %640 = vmatprep.subr.mxu0 0.0
    %641 = vmatpush1.xpose.msra.mxu0 0.0
    %642 = vmatprep.subr.mxu0 0.0
    %643 = vmatpush1.xpose.msra.mxu0 0.0
    %644 = vmatprep.subr.mxu0 0.0
    %645 = vmatpush1.xpose.msra.mxu0 0.0
    %646 = vmatprep.subr.mxu0 0.0
    %647 = vmatpush1.xpose.msra.mxu0 0.0
    %648 = vmatprep.subr.mxu0 0.0
    %649 = vmatpush1.xpose.msra.mxu0 0.0
    %650 = vmatprep.subr.mxu0 0.0
    %651 = vmatpush1.xpose.msra.mxu0 0.0
    %652 = vmatprep.subr.mxu0 0.0
    %653 = vmatpush1.xpose.msra.mxu0 0.0
    %654 = vmatprep.subr.mxu0 0.0
    %655 = vmatpush1.xpose.msra.mxu0 0.0
    %656 = vmatprep.subr.mxu0 0.0
    %657 = vmatpush1.xpose.msra.mxu0 0.0
    %658 = vmatprep.subr.mxu0 0.0
    %659 = vmatpush1.xpose.msra.mxu0 0.0
    %660 = vmatprep.subr.mxu0 0.0
    %661 = vmatpush1.xpose.msra.mxu0 0.0
    %662 = vmatprep.subr.mxu0 0.0
    %663 = vmatpush1.xpose.msra.mxu0 0.0
    %664 = vmatprep.subr.mxu0 0.0
    %665 = vmatpush1.xpose.msra.mxu0 0.0
    %666 = vmatprep.subr.mxu0 0.0
    %667 = vmatpush1.xpose.msra.mxu0 0.0
    %668 = vmatprep.subr.mxu0 0.0
    %669 = vmatpush1.xpose.msra.mxu0 0.0
    %670 = vmatprep.subr.mxu0 0.0
    %671 = vmatpush1.xpose.msra.mxu0 %v638
    %672 = vmatprep.subr.mxu0 0.0
    %673 = vmatpush2.xpose.msra.mxu0 0.0
    %674 = vmatprep.subr.mxu0 0.0
    %675 = vmatpush2.xpose.msra.mxu0 0.0
    %676 = vmatprep.subr.mxu0 0.0
    %677 = vmatpush2.xpose.msra.mxu0 0.0
    %678 = vmatprep.subr.mxu0 0.0
    %679 = vmatpush2.xpose.msra.mxu0 0.0
    %680 = vmatprep.subr.mxu0 0.0
    %681 = vmatpush2.xpose.msra.mxu0 0.0
    %682 = vmatprep.subr.mxu0 0.0
    %683 = vmatpush2.xpose.msra.mxu0 0.0
    %684 = vmatprep.subr.mxu0 0.0
    %685 = vmatpush2.xpose.msra.mxu0 0.0
    %686 = vmatprep.subr.mxu0 0.0
    %687 = vmatpush2.xpose.msra.mxu0 0.0
    %688 = vmatprep.subr.mxu0 0.0
    %689 = vmatpush2.xpose.msra.mxu0 0.0
    %690 = vmatprep.subr.mxu0 0.0
    %691 = vmatpush2.xpose.msra.mxu0 0.0
    %692 = vmatprep.subr.mxu0 0.0
    %693 = vmatpush2.xpose.msra.mxu0 0.0
    %694 = vmatprep.subr.mxu0 0.0
    %695 = vmatpush2.xpose.msra.mxu0 0.0
    %696 = vmatprep.subr.mxu0 0.0
    %697 = vmatpush2.xpose.msra.mxu0 0.0
    %698 = vmatprep.subr.mxu0 0.0
    %699 = vmatpush2.xpose.msra.mxu0 0.0
    %700 = vmatprep.subr.mxu0 0.0
    %701 = vmatpush2.xpose.msra.mxu0 0.0
    %702 = vmatprep.subr.mxu0 0.0
    %703 = vmatpush2.xpose.msra.mxu0 0.0
    %704 = vmatprep.mubr.f32.mxu0 0.0
    %705 = vmatmul.mubr.f32.gmra.mxu0 %v636
    %v706 = vpop.f32.mrf.mxu0
    %v707 = vadd.f32 %v186, %v706
    %v708 = vpop.f32.mrf.mxu0
    %709 = vdwg.mxu0
    %710 = vrot.lane.b32.xlu0 %v324, 96
    %v711 = vpop.permute.xlu0 %710
    %v712 = vsel %vm331, %v310, 0
    %v714 = vsel %vm331, %v711, 0
    %716 = vmatprep.subr.mxu0 0.0
    %717 = vmatpush1.xpose.msra.mxu0 0.0
    %718 = vmatprep.subr.mxu0 0.0
    %719 = vmatpush1.xpose.msra.mxu0 0.0
    %720 = vmatprep.subr.mxu0 0.0
    %721 = vmatpush1.xpose.msra.mxu0 0.0
    %722 = vmatprep.subr.mxu0 0.0
    %723 = vmatpush1.xpose.msra.mxu0 0.0
    %724 = vmatprep.subr.mxu0 0.0
    %725 = vmatpush1.xpose.msra.mxu0 0.0
    %726 = vmatprep.subr.mxu0 0.0
    %727 = vmatpush1.xpose.msra.mxu0 0.0
    %728 = vmatprep.subr.mxu0 0.0
    %729 = vmatpush1.xpose.msra.mxu0 0.0
    %730 = vmatprep.subr.mxu0 0.0
    %731 = vmatpush1.xpose.msra.mxu0 0.0
    %732 = vmatprep.subr.mxu0 0.0
    %733 = vmatpush1.xpose.msra.mxu0 0.0
    %734 = vmatprep.subr.mxu0 0.0
    %735 = vmatpush1.xpose.msra.mxu0 0.0
    %736 = vmatprep.subr.mxu0 0.0
    %737 = vmatpush1.xpose.msra.mxu0 0.0
    %738 = vmatprep.subr.mxu0 0.0
    %739 = vmatpush1.xpose.msra.mxu0 0.0
    %740 = vmatprep.subr.mxu0 0.0
    %741 = vmatpush1.xpose.msra.mxu0 0.0
    %742 = vmatprep.subr.mxu0 0.0
    %743 = vmatpush1.xpose.msra.mxu0 0.0
    %744 = vmatprep.subr.mxu0 0.0
    %745 = vmatpush1.xpose.msra.mxu0 0.0
    %746 = vmatprep.subr.mxu0 0.0
    %747 = vmatpush1.xpose.msra.mxu0 %v714
    %748 = vmatprep.subr.mxu0 0.0
    %749 = vmatpush2.xpose.msra.mxu0 0.0
    %750 = vmatprep.subr.mxu0 0.0
    %751 = vmatpush2.xpose.msra.mxu0 0.0
    %752 = vmatprep.subr.mxu0 0.0
    %753 = vmatpush2.xpose.msra.mxu0 0.0
    %754 = vmatprep.subr.mxu0 0.0
    %755 = vmatpush2.xpose.msra.mxu0 0.0
    %756 = vmatprep.subr.mxu0 0.0
    %757 = vmatpush2.xpose.msra.mxu0 0.0
    %758 = vmatprep.subr.mxu0 0.0
    %759 = vmatpush2.xpose.msra.mxu0 0.0
    %760 = vmatprep.subr.mxu0 0.0
    %761 = vmatpush2.xpose.msra.mxu0 0.0
    %762 = vmatprep.subr.mxu0 0.0
    %763 = vmatpush2.xpose.msra.mxu0 0.0
    %764 = vmatprep.subr.mxu0 0.0
    %765 = vmatpush2.xpose.msra.mxu0 0.0
    %766 = vmatprep.subr.mxu0 0.0
    %767 = vmatpush2.xpose.msra.mxu0 0.0
    %768 = vmatprep.subr.mxu0 0.0
    %769 = vmatpush2.xpose.msra.mxu0 0.0
    %770 = vmatprep.subr.mxu0 0.0
    %771 = vmatpush2.xpose.msra.mxu0 0.0
    %772 = vmatprep.subr.mxu0 0.0
    %773 = vmatpush2.xpose.msra.mxu0 0.0
    %774 = vmatprep.subr.mxu0 0.0
    %775 = vmatpush2.xpose.msra.mxu0 0.0
    %776 = vmatprep.subr.mxu0 0.0
    %777 = vmatpush2.xpose.msra.mxu0 0.0
    %778 = vmatprep.subr.mxu0 0.0
    %779 = vmatpush2.xpose.msra.mxu0 0.0
    %780 = vmatprep.mubr.f32.mxu0 0.0
    %781 = vmatmul.mubr.f32.gmra.mxu0 %v712
    %v782 = vpop.f32.mrf.mxu0
    %v783 = vadd.f32 %v190, %v782
    %v784 = vpop.f32.mrf.mxu0
    %785 = vdwg.mxu0
    %786 = vrot.lane.b32.xlu0 %v326, 96
    %v787 = vpop.permute.xlu0 %786
    %v788 = vsel %vm331, %v312, 0
    %v790 = vsel %vm331, %v787, 0
    %792 = vmatprep.subr.mxu0 0.0
    %793 = vmatpush1.xpose.msra.mxu0 0.0
    %794 = vmatprep.subr.mxu0 0.0
    %795 = vmatpush1.xpose.msra.mxu0 0.0
    %796 = vmatprep.subr.mxu0 0.0
    %797 = vmatpush1.xpose.msra.mxu0 0.0
    %798 = vmatprep.subr.mxu0 0.0
    %799 = vmatpush1.xpose.msra.mxu0 0.0
    %800 = vmatprep.subr.mxu0 0.0
    %801 = vmatpush1.xpose.msra.mxu0 0.0
    %802 = vmatprep.subr.mxu0 0.0
    %803 = vmatpush1.xpose.msra.mxu0 0.0
    %804 = vmatprep.subr.mxu0 0.0
    %805 = vmatpush1.xpose.msra.mxu0 0.0
    %806 = vmatprep.subr.mxu0 0.0
    %807 = vmatpush1.xpose.msra.mxu0 0.0
    %808 = vmatprep.subr.mxu0 0.0
    %809 = vmatpush1.xpose.msra.mxu0 0.0
    %810 = vmatprep.subr.mxu0 0.0
    %811 = vmatpush1.xpose.msra.mxu0 0.0
    %812 = vmatprep.subr.mxu0 0.0
    %813 = vmatpush1.xpose.msra.mxu0 0.0
    %814 = vmatprep.subr.mxu0 0.0
    %815 = vmatpush1.xpose.msra.mxu0 0.0
    %816 = vmatprep.subr.mxu0 0.0
    %817 = vmatpush1.xpose.msra.mxu0 0.0
    %818 = vmatprep.subr.mxu0 0.0
    %819 = vmatpush1.xpose.msra.mxu0 0.0
    %820 = vmatprep.subr.mxu0 0.0
    %821 = vmatpush1.xpose.msra.mxu0 0.0
    %822 = vmatprep.subr.mxu0 0.0
    %823 = vmatpush1.xpose.msra.mxu0 %v790
    %824 = vmatprep.subr.mxu0 0.0
    %825 = vmatpush2.xpose.msra.mxu0 0.0
    %826 = vmatprep.subr.mxu0 0.0
    %827 = vmatpush2.xpose.msra.mxu0 0.0
    %828 = vmatprep.subr.mxu0 0.0
    %829 = vmatpush2.xpose.msra.mxu0 0.0
    %830 = vmatprep.subr.mxu0 0.0
    %831 = vmatpush2.xpose.msra.mxu0 0.0
    %832 = vmatprep.subr.mxu0 0.0
    %833 = vmatpush2.xpose.msra.mxu0 0.0
    %834 = vmatprep.subr.mxu0 0.0
    %835 = vmatpush2.xpose.msra.mxu0 0.0
    %836 = vmatprep.subr.mxu0 0.0
    %837 = vmatpush2.xpose.msra.mxu0 0.0
    %838 = vmatprep.subr.mxu0 0.0
    %839 = vmatpush2.xpose.msra.mxu0 0.0
    %840 = vmatprep.subr.mxu0 0.0
    %841 = vmatpush2.xpose.msra.mxu0 0.0
    %842 = vmatprep.subr.mxu0 0.0
    %843 = vmatpush2.xpose.msra.mxu0 0.0
    %844 = vmatprep.subr.mxu0 0.0
    %845 = vmatpush2.xpose.msra.mxu0 0.0
    %846 = vmatprep.subr.mxu0 0.0
    %847 = vmatpush2.xpose.msra.mxu0 0.0
    %848 = vmatprep.subr.mxu0 0.0
    %849 = vmatpush2.xpose.msra.mxu0 0.0
    %850 = vmatprep.subr.mxu0 0.0
    %851 = vmatpush2.xpose.msra.mxu0 0.0
    %852 = vmatprep.subr.mxu0 0.0
    %853 = vmatpush2.xpose.msra.mxu0 0.0
    %854 = vmatprep.subr.mxu0 0.0
    %855 = vmatpush2.xpose.msra.mxu0 0.0
    %856 = vmatprep.mubr.f32.mxu0 0.0
    %857 = vmatmul.mubr.f32.gmra.mxu0 %v788
    %v858 = vpop.f32.mrf.mxu0
    %v859 = vadd.f32 %v194, %v858
    %v860 = vpop.f32.mrf.mxu0
    %861 = vdwg.mxu0
    %862 = vrot.lane.b32.xlu0 %v328, 96
    %v863 = vpop.permute.xlu0 %862
    %v864 = vsel %vm331, %v314, 0
    %v866 = vsel %vm331, %v863, 0
    %868 = vmatprep.subr.mxu0 0.0
    %869 = vmatpush1.xpose.msra.mxu0 0.0
    %870 = vmatprep.subr.mxu0 0.0
    %871 = vmatpush1.xpose.msra.mxu0 0.0
    %872 = vmatprep.subr.mxu0 0.0
    %873 = vmatpush1.xpose.msra.mxu0 0.0
    %874 = vmatprep.subr.mxu0 0.0
    %875 = vmatpush1.xpose.msra.mxu0 0.0
    %876 = vmatprep.subr.mxu0 0.0
    %877 = vmatpush1.xpose.msra.mxu0 0.0
    %878 = vmatprep.subr.mxu0 0.0
    %879 = vmatpush1.xpose.msra.mxu0 0.0
    %880 = vmatprep.subr.mxu0 0.0
    %881 = vmatpush1.xpose.msra.mxu0 0.0
    %882 = vmatprep.subr.mxu0 0.0
    %883 = vmatpush1.xpose.msra.mxu0 0.0
    %884 = vmatprep.subr.mxu0 0.0
    %885 = vmatpush1.xpose.msra.mxu0 0.0
    %886 = vmatprep.subr.mxu0 0.0
    %887 = vmatpush1.xpose.msra.mxu0 0.0
    %888 = vmatprep.subr.mxu0 0.0
    %889 = vmatpush1.xpose.msra.mxu0 0.0
    %890 = vmatprep.subr.mxu0 0.0
    %891 = vmatpush1.xpose.msra.mxu0 0.0
    %892 = vmatprep.subr.mxu0 0.0
    %893 = vmatpush1.xpose.msra.mxu0 0.0
    %894 = vmatprep.subr.mxu0 0.0
    %895 = vmatpush1.xpose.msra.mxu0 0.0
    %896 = vmatprep.subr.mxu0 0.0
    %897 = vmatpush1.xpose.msra.mxu0 0.0
    %898 = vmatprep.subr.mxu0 0.0
    %899 = vmatpush1.xpose.msra.mxu0 %v866
    %900 = vmatprep.subr.mxu0 0.0
    %901 = vmatpush2.xpose.msra.mxu0 0.0
    %902 = vmatprep.subr.mxu0 0.0
    %903 = vmatpush2.xpose.msra.mxu0 0.0
    %904 = vmatprep.subr.mxu0 0.0
    %905 = vmatpush2.xpose.msra.mxu0 0.0
    %906 = vmatprep.subr.mxu0 0.0
    %907 = vmatpush2.xpose.msra.mxu0 0.0
    %908 = vmatprep.subr.mxu0 0.0
    %909 = vmatpush2.xpose.msra.mxu0 0.0
    %910 = vmatprep.subr.mxu0 0.0
    %911 = vmatpush2.xpose.msra.mxu0 0.0
    %912 = vmatprep.subr.mxu0 0.0
    %913 = vmatpush2.xpose.msra.mxu0 0.0
    %914 = vmatprep.subr.mxu0 0.0
    %915 = vmatpush2.xpose.msra.mxu0 0.0
    %916 = vmatprep.subr.mxu0 0.0
    %917 = vmatpush2.xpose.msra.mxu0 0.0
    %918 = vmatprep.subr.mxu0 0.0
    %919 = vmatpush2.xpose.msra.mxu0 0.0
    %920 = vmatprep.subr.mxu0 0.0
    %921 = vmatpush2.xpose.msra.mxu0 0.0
    %922 = vmatprep.subr.mxu0 0.0
    %923 = vmatpush2.xpose.msra.mxu0 0.0
    %924 = vmatprep.subr.mxu0 0.0
    %925 = vmatpush2.xpose.msra.mxu0 0.0
    %926 = vmatprep.subr.mxu0 0.0
    %927 = vmatpush2.xpose.msra.mxu0 0.0
    %928 = vmatprep.subr.mxu0 0.0
    %929 = vmatpush2.xpose.msra.mxu0 0.0
    %930 = vmatprep.subr.mxu0 0.0
    %931 = vmatpush2.xpose.msra.mxu0 0.0
    %932 = vmatprep.mubr.f32.mxu0 0.0
    %933 = vmatmul.mubr.f32.gmra.mxu0 %v864
    %v934 = vpop.f32.mrf.mxu0
    %v935 = vadd.f32 %v198, %v934
    %v936 = vpop.f32.mrf.mxu0
    %937 = vdwg.mxu0
    %v938 = vsel %vm331, %v403, -inf
    %939 = vmax.xlane.f32.xlu0 %v938
    %v940 = vpop.xlane.xlu0 %939
    %v941 = vsel %vm331, %v479, -inf
    %942 = vmax.xlane.f32.xlu0 %v941
    %v943 = vpop.xlane.xlu0 %942
    %v944 = vsel %vm331, %v555, -inf
    %945 = vmax.xlane.f32.xlu0 %v944
    %v946 = vpop.xlane.xlu0 %945
    %v947 = vsel %vm331, %v631, -inf
    %948 = vmax.xlane.f32.xlu0 %v947
    %v949 = vpop.xlane.xlu0 %948
    %v950 = vsel %vm331, %v707, -inf
    %951 = vmax.xlane.f32.xlu0 %v950
    %v952 = vpop.xlane.xlu0 %951
    %v953 = vsel %vm331, %v783, -inf
    %954 = vmax.xlane.f32.xlu0 %v953
    %v955 = vpop.xlane.xlu0 %954
    %v956 = vsel %vm331, %v859, -inf
    %957 = vmax.xlane.f32.xlu0 %v956
    %v958 = vpop.xlane.xlu0 %957
    %v959 = vsel %vm331, %v935, -inf
    %960 = vmax.xlane.f32.xlu0 %v959
    %v961 = vpop.xlane.xlu0 %960
    %v962 = vsub.f32 %v403, %v940
    %v963 = vsub.f32 %v479, %v943
    %v964 = vsub.f32 %v555, %v946
    %v965 = vsub.f32 %v631, %v949
    %v966 = vsub.f32 %v707, %v952
    %v967 = vsub.f32 %v783, %v955
    %v968 = vsub.f32 %v859, %v958
    %v969 = vsub.f32 %v935, %v961
    %v970 = vmul.f32 %v962, 1.442695
    %v971 = vpow.pop %v970
    %v972 = vmul.f32 %v963, 1.442695
    %v973 = vpow.pop %v972
    %v974 = vmul.f32 %v964, 1.442695
    %v975 = vpow.pop %v974
    %v976 = vmul.f32 %v965, 1.442695
    %v977 = vpow.pop %v976
    %v978 = vmul.f32 %v966, 1.442695
    %v979 = vpow.pop %v978
    %v980 = vmul.f32 %v967, 1.442695
    %v981 = vpow.pop %v980
    %v982 = vmul.f32 %v968, 1.442695
    %v983 = vpow.pop %v982
    %v984 = vmul.f32 %v969, 1.442695
    %v985 = vpow.pop %v984
    %v986 = vsel %vm331, %v971, 0.0
    %987 = vadd.xlane.f32.xlu0 %v986
    %v988 = vpop.xlane.xlu0 %987
    %v989 = vsel %vm331, %v973, 0.0
    %990 = vadd.xlane.f32.xlu0 %v989
    %v991 = vpop.xlane.xlu0 %990
    %v992 = vsel %vm331, %v975, 0.0
    %993 = vadd.xlane.f32.xlu0 %v992
    %v994 = vpop.xlane.xlu0 %993
    %v995 = vsel %vm331, %v977, 0.0
    %996 = vadd.xlane.f32.xlu0 %v995
    %v997 = vpop.xlane.xlu0 %996
    %v998 = vsel %vm331, %v979, 0.0
    %999 = vadd.xlane.f32.xlu0 %v998
    %v1000 = vpop.xlane.xlu0 %999
    %v1001 = vsel %vm331, %v981, 0.0
    %1002 = vadd.xlane.f32.xlu0 %v1001
    %v1003 = vpop.xlane.xlu0 %1002
    %v1004 = vsel %vm331, %v983, 0.0
    %1005 = vadd.xlane.f32.xlu0 %v1004
    %v1006 = vpop.xlane.xlu0 %1005
    %v1007 = vsel %vm331, %v985, 0.0
    %1008 = vadd.xlane.f32.xlu0 %v1007
    %v1009 = vpop.xlane.xlu0 %1008
    %v1010 = vrcp.pop %v988
    %v1011 = vrcp.pop %v991
    %v1012 = vrcp.pop %v994
    %v1013 = vrcp.pop %v997
    %v1014 = vrcp.pop %v1000
    %v1015 = vrcp.pop %v1003
    %v1016 = vrcp.pop %v1006
    %v1017 = vrcp.pop %v1009
    %v1018 = vmul.f32 %v971, %v1010
    %v1019 = vmul.f32 %v973, %v1011
    %v1020 = vmul.f32 %v975, %v1012
    %v1021 = vmul.f32 %v977, %v1013
    %v1022 = vmul.f32 %v979, %v1014
    %v1023 = vmul.f32 %v981, %v1015
    %v1024 = vmul.f32 %v983, %v1016
    %v1025 = vmul.f32 %v985, %v1017
    %1026 = vrot.lane.b32.xlu0 %v291, 64
    %v1027 = vpop.permute.xlu0 %1026
    %v1030 = vsel %vm331, %v1018, 0
    %1032 = vmatprep.subr.mxu0 0.0
    %1033 = vmatpush1.msra.mxu0 0.0
    %1034 = vmatprep.subr.mxu0 0.0
    %1035 = vmatpush1.msra.mxu0 0.0
    %1036 = vmatprep.subr.mxu0 0.0
    %1037 = vmatpush1.msra.mxu0 0.0
    %1038 = vmatprep.subr.mxu0 0.0
    %1039 = vmatpush1.msra.mxu0 0.0
    %1040 = vmatprep.subr.mxu0 0.0
    %1041 = vmatpush1.msra.mxu0 0.0
    %1042 = vmatprep.subr.mxu0 0.0
    %1043 = vmatpush1.msra.mxu0 0.0
    %1044 = vmatprep.subr.mxu0 0.0
    %1045 = vmatpush1.msra.mxu0 0.0
    %1046 = vmatprep.subr.mxu0 0.0
    %1047 = vmatpush1.msra.mxu0 0.0
    %1048 = vmatprep.subr.mxu0 0.0
    %1049 = vmatpush1.msra.mxu0 0.0
    %1050 = vmatprep.subr.mxu0 0.0
    %1051 = vmatpush1.msra.mxu0 0.0
    %1052 = vmatprep.subr.mxu0 0.0
    %1053 = vmatpush1.msra.mxu0 0.0
    %1054 = vmatprep.subr.mxu0 0.0
    %1055 = vmatpush1.msra.mxu0 0.0
    %1056 = vmatprep.subr.mxu0 0.0
    %1057 = vmatpush1.msra.mxu0 0.0
    %1058 = vmatprep.subr.mxu0 0.0
    %1059 = vmatpush1.msra.mxu0 0.0
    %1060 = vmatprep.subr.mxu0 0.0
    %1061 = vmatpush1.msra.mxu0 0.0
    %1062 = vmatprep.subr.mxu0 0.0
    %1063 = vmatpush1.msra.mxu0 %v1027
    %1064 = vmatprep.subr.mxu0 0.0
    %1065 = vmatpush2.msra.mxu0 0.0
    %1066 = vmatprep.subr.mxu0 0.0
    %1067 = vmatpush2.msra.mxu0 0.0
    %1068 = vmatprep.subr.mxu0 0.0
    %1069 = vmatpush2.msra.mxu0 0.0
    %1070 = vmatprep.subr.mxu0 0.0
    %1071 = vmatpush2.msra.mxu0 0.0
    %1072 = vmatprep.subr.mxu0 0.0
    %1073 = vmatpush2.msra.mxu0 0.0
    %1074 = vmatprep.subr.mxu0 0.0
    %1075 = vmatpush2.msra.mxu0 0.0
    %1076 = vmatprep.subr.mxu0 0.0
    %1077 = vmatpush2.msra.mxu0 0.0
    %1078 = vmatprep.subr.mxu0 0.0
    %1079 = vmatpush2.msra.mxu0 0.0
    %1080 = vmatprep.subr.mxu0 0.0
    %1081 = vmatpush2.msra.mxu0 0.0
    %1082 = vmatprep.subr.mxu0 0.0
    %1083 = vmatpush2.msra.mxu0 0.0
    %1084 = vmatprep.subr.mxu0 0.0
    %1085 = vmatpush2.msra.mxu0 0.0
    %1086 = vmatprep.subr.mxu0 0.0
    %1087 = vmatpush2.msra.mxu0 0.0
    %1088 = vmatprep.subr.mxu0 0.0
    %1089 = vmatpush2.msra.mxu0 0.0
    %1090 = vmatprep.subr.mxu0 0.0
    %1091 = vmatpush2.msra.mxu0 0.0
    %1092 = vmatprep.subr.mxu0 0.0
    %1093 = vmatpush2.msra.mxu0 0.0
    %1094 = vmatprep.subr.mxu0 0.0
    %1095 = vmatpush2.msra.mxu0 0.0
    %1096 = vmatprep.mubr.f32.mxu0 0.0
    %1097 = vmatmul.mubr.f32.gmra.mxu0 %v1030
    %v1098 = vpop.f32.mrf.mxu0
    %v1099 = vadd.f32 0.0, %v1098
    %v1100 = vpop.f32.mrf.mxu0
    %1101 = vdwg.mxu0
    %1102 = vrot.lane.b32.xlu0 %v296, 64
    %v1103 = vpop.permute.xlu0 %1102
    %v1106 = vsel %vm331, %v1019, 0
    %1108 = vmatprep.subr.mxu0 0.0
    %1109 = vmatpush1.msra.mxu0 0.0
    %1110 = vmatprep.subr.mxu0 0.0
    %1111 = vmatpush1.msra.mxu0 0.0
    %1112 = vmatprep.subr.mxu0 0.0
    %1113 = vmatpush1.msra.mxu0 0.0
    %1114 = vmatprep.subr.mxu0 0.0
    %1115 = vmatpush1.msra.mxu0 0.0
    %1116 = vmatprep.subr.mxu0 0.0
    %1117 = vmatpush1.msra.mxu0 0.0
    %1118 = vmatprep.subr.mxu0 0.0
    %1119 = vmatpush1.msra.mxu0 0.0
    %1120 = vmatprep.subr.mxu0 0.0
    %1121 = vmatpush1.msra.mxu0 0.0
    %1122 = vmatprep.subr.mxu0 0.0
    %1123 = vmatpush1.msra.mxu0 0.0
    %1124 = vmatprep.subr.mxu0 0.0
    %1125 = vmatpush1.msra.mxu0 0.0
    %1126 = vmatprep.subr.mxu0 0.0
    %1127 = vmatpush1.msra.mxu0 0.0
    %1128 = vmatprep.subr.mxu0 0.0
    %1129 = vmatpush1.msra.mxu0 0.0
    %1130 = vmatprep.subr.mxu0 0.0
    %1131 = vmatpush1.msra.mxu0 0.0
    %1132 = vmatprep.subr.mxu0 0.0
    %1133 = vmatpush1.msra.mxu0 0.0
    %1134 = vmatprep.subr.mxu0 0.0
    %1135 = vmatpush1.msra.mxu0 0.0
    %1136 = vmatprep.subr.mxu0 0.0
    %1137 = vmatpush1.msra.mxu0 0.0
    %1138 = vmatprep.subr.mxu0 0.0
    %1139 = vmatpush1.msra.mxu0 %v1103
    %1140 = vmatprep.subr.mxu0 0.0
    %1141 = vmatpush2.msra.mxu0 0.0
    %1142 = vmatprep.subr.mxu0 0.0
    %1143 = vmatpush2.msra.mxu0 0.0
    %1144 = vmatprep.subr.mxu0 0.0
    %1145 = vmatpush2.msra.mxu0 0.0
    %1146 = vmatprep.subr.mxu0 0.0
    %1147 = vmatpush2.msra.mxu0 0.0
    %1148 = vmatprep.subr.mxu0 0.0
    %1149 = vmatpush2.msra.mxu0 0.0
    %1150 = vmatprep.subr.mxu0 0.0
    %1151 = vmatpush2.msra.mxu0 0.0
    %1152 = vmatprep.subr.mxu0 0.0
    %1153 = vmatpush2.msra.mxu0 0.0
    %1154 = vmatprep.subr.mxu0 0.0
    %1155 = vmatpush2.msra.mxu0 0.0
    %1156 = vmatprep.subr.mxu0 0.0
    %1157 = vmatpush2.msra.mxu0 0.0
    %1158 = vmatprep.subr.mxu0 0.0
    %1159 = vmatpush2.msra.mxu0 0.0
    %1160 = vmatprep.subr.mxu0 0.0
    %1161 = vmatpush2.msra.mxu0 0.0
    %1162 = vmatprep.subr.mxu0 0.0
    %1163 = vmatpush2.msra.mxu0 0.0
    %1164 = vmatprep.subr.mxu0 0.0
    %1165 = vmatpush2.msra.mxu0 0.0
    %1166 = vmatprep.subr.mxu0 0.0
    %1167 = vmatpush2.msra.mxu0 0.0
    %1168 = vmatprep.subr.mxu0 0.0
    %1169 = vmatpush2.msra.mxu0 0.0
    %1170 = vmatprep.subr.mxu0 0.0
    %1171 = vmatpush2.msra.mxu0 0.0
    %1172 = vmatprep.mubr.f32.mxu0 0.0
    %1173 = vmatmul.mubr.f32.gmra.mxu0 %v1106
    %v1174 = vpop.f32.mrf.mxu0
    %v1175 = vadd.f32 0.0, %v1174
    %v1176 = vpop.f32.mrf.mxu0
    %1177 = vdwg.mxu0
    %1178 = vrot.lane.b32.xlu0 %v318, 64
    %v1179 = vpop.permute.xlu0 %1178
    %v1182 = vsel %vm331, %v1020, 0
    %1184 = vmatprep.subr.mxu0 0.0
    %1185 = vmatpush1.msra.mxu0 0.0
    %1186 = vmatprep.subr.mxu0 0.0
    %1187 = vmatpush1.msra.mxu0 0.0
    %1188 = vmatprep.subr.mxu0 0.0
    %1189 = vmatpush1.msra.mxu0 0.0
    %1190 = vmatprep.subr.mxu0 0.0
    %1191 = vmatpush1.msra.mxu0 0.0
    %1192 = vmatprep.subr.mxu0 0.0
    %1193 = vmatpush1.msra.mxu0 0.0
    %1194 = vmatprep.subr.mxu0 0.0
    %1195 = vmatpush1.msra.mxu0 0.0
    %1196 = vmatprep.subr.mxu0 0.0
    %1197 = vmatpush1.msra.mxu0 0.0
    %1198 = vmatprep.subr.mxu0 0.0
    %1199 = vmatpush1.msra.mxu0 0.0
    %1200 = vmatprep.subr.mxu0 0.0
    %1201 = vmatpush1.msra.mxu0 0.0
    %1202 = vmatprep.subr.mxu0 0.0
    %1203 = vmatpush1.msra.mxu0 0.0
    %1204 = vmatprep.subr.mxu0 0.0
    %1205 = vmatpush1.msra.mxu0 0.0
    %1206 = vmatprep.subr.mxu0 0.0
    %1207 = vmatpush1.msra.mxu0 0.0
    %1208 = vmatprep.subr.mxu0 0.0
    %1209 = vmatpush1.msra.mxu0 0.0
    %1210 = vmatprep.subr.mxu0 0.0
    %1211 = vmatpush1.msra.mxu0 0.0
    %1212 = vmatprep.subr.mxu0 0.0
    %1213 = vmatpush1.msra.mxu0 0.0
    %1214 = vmatprep.subr.mxu0 0.0
    %1215 = vmatpush1.msra.mxu0 %v1179
    %1216 = vmatprep.subr.mxu0 0.0
    %1217 = vmatpush2.msra.mxu0 0.0
    %1218 = vmatprep.subr.mxu0 0.0
    %1219 = vmatpush2.msra.mxu0 0.0
    %1220 = vmatprep.subr.mxu0 0.0
    %1221 = vmatpush2.msra.mxu0 0.0
    %1222 = vmatprep.subr.mxu0 0.0
    %1223 = vmatpush2.msra.mxu0 0.0
    %1224 = vmatprep.subr.mxu0 0.0
    %1225 = vmatpush2.msra.mxu0 0.0
    %1226 = vmatprep.subr.mxu0 0.0
    %1227 = vmatpush2.msra.mxu0 0.0
    %1228 = vmatprep.subr.mxu0 0.0
    %1229 = vmatpush2.msra.mxu0 0.0
    %1230 = vmatprep.subr.mxu0 0.0
    %1231 = vmatpush2.msra.mxu0 0.0
    %1232 = vmatprep.subr.mxu0 0.0
    %1233 = vmatpush2.msra.mxu0 0.0
    %1234 = vmatprep.subr.mxu0 0.0
    %1235 = vmatpush2.msra.mxu0 0.0
    %1236 = vmatprep.subr.mxu0 0.0
    %1237 = vmatpush2.msra.mxu0 0.0
    %1238 = vmatprep.subr.mxu0 0.0
    %1239 = vmatpush2.msra.mxu0 0.0
    %1240 = vmatprep.subr.mxu0 0.0
    %1241 = vmatpush2.msra.mxu0 0.0
    %1242 = vmatprep.subr.mxu0 0.0
    %1243 = vmatpush2.msra.mxu0 0.0
    %1244 = vmatprep.subr.mxu0 0.0
    %1245 = vmatpush2.msra.mxu0 0.0
    %1246 = vmatprep.subr.mxu0 0.0
    %1247 = vmatpush2.msra.mxu0 0.0
    %1248 = vmatprep.mubr.f32.mxu0 0.0
    %1249 = vmatmul.mubr.f32.gmra.mxu0 %v1182
    %v1250 = vpop.f32.mrf.mxu0
    %v1251 = vadd.f32 0.0, %v1250
    %v1252 = vpop.f32.mrf.mxu0
    %1253 = vdwg.mxu0
    %1254 = vrot.lane.b32.xlu0 %v320, 64
    %v1255 = vpop.permute.xlu0 %1254
    %v1258 = vsel %vm331, %v1021, 0
    %1260 = vmatprep.subr.mxu0 0.0
    %1261 = vmatpush1.msra.mxu0 0.0
    %1262 = vmatprep.subr.mxu0 0.0
    %1263 = vmatpush1.msra.mxu0 0.0
    %1264 = vmatprep.subr.mxu0 0.0
    %1265 = vmatpush1.msra.mxu0 0.0
    %1266 = vmatprep.subr.mxu0 0.0
    %1267 = vmatpush1.msra.mxu0 0.0
    %1268 = vmatprep.subr.mxu0 0.0
    %1269 = vmatpush1.msra.mxu0 0.0
    %1270 = vmatprep.subr.mxu0 0.0
    %1271 = vmatpush1.msra.mxu0 0.0
    %1272 = vmatprep.subr.mxu0 0.0
    %1273 = vmatpush1.msra.mxu0 0.0
    %1274 = vmatprep.subr.mxu0 0.0
    %1275 = vmatpush1.msra.mxu0 0.0
    %1276 = vmatprep.subr.mxu0 0.0
    %1277 = vmatpush1.msra.mxu0 0.0
    %1278 = vmatprep.subr.mxu0 0.0
    %1279 = vmatpush1.msra.mxu0 0.0
    %1280 = vmatprep.subr.mxu0 0.0
    %1281 = vmatpush1.msra.mxu0 0.0
    %1282 = vmatprep.subr.mxu0 0.0
    %1283 = vmatpush1.msra.mxu0 0.0
    %1284 = vmatprep.subr.mxu0 0.0
    %1285 = vmatpush1.msra.mxu0 0.0
    %1286 = vmatprep.subr.mxu0 0.0
    %1287 = vmatpush1.msra.mxu0 0.0
    %1288 = vmatprep.subr.mxu0 0.0
    %1289 = vmatpush1.msra.mxu0 0.0
    %1290 = vmatprep.subr.mxu0 0.0
    %1291 = vmatpush1.msra.mxu0 %v1255
    %1292 = vmatprep.subr.mxu0 0.0
    %1293 = vmatpush2.msra.mxu0 0.0
    %1294 = vmatprep.subr.mxu0 0.0
    %1295 = vmatpush2.msra.mxu0 0.0
    %1296 = vmatprep.subr.mxu0 0.0
    %1297 = vmatpush2.msra.mxu0 0.0
    %1298 = vmatprep.subr.mxu0 0.0
    %1299 = vmatpush2.msra.mxu0 0.0
    %1300 = vmatprep.subr.mxu0 0.0
    %1301 = vmatpush2.msra.mxu0 0.0
    %1302 = vmatprep.subr.mxu0 0.0
    %1303 = vmatpush2.msra.mxu0 0.0
    %1304 = vmatprep.subr.mxu0 0.0
    %1305 = vmatpush2.msra.mxu0 0.0
    %1306 = vmatprep.subr.mxu0 0.0
    %1307 = vmatpush2.msra.mxu0 0.0
    %1308 = vmatprep.subr.mxu0 0.0
    %1309 = vmatpush2.msra.mxu0 0.0
    %1310 = vmatprep.subr.mxu0 0.0
    %1311 = vmatpush2.msra.mxu0 0.0
    %1312 = vmatprep.subr.mxu0 0.0
    %1313 = vmatpush2.msra.mxu0 0.0
    %1314 = vmatprep.subr.mxu0 0.0
    %1315 = vmatpush2.msra.mxu0 0.0
    %1316 = vmatprep.subr.mxu0 0.0
    %1317 = vmatpush2.msra.mxu0 0.0
    %1318 = vmatprep.subr.mxu0 0.0
    %1319 = vmatpush2.msra.mxu0 0.0
    %1320 = vmatprep.subr.mxu0 0.0
    %1321 = vmatpush2.msra.mxu0 0.0
    %1322 = vmatprep.subr.mxu0 0.0
    %1323 = vmatpush2.msra.mxu0 0.0
    %1324 = vmatprep.mubr.f32.mxu0 0.0
    %1325 = vmatmul.mubr.f32.gmra.mxu0 %v1258
    %v1326 = vpop.f32.mrf.mxu0
    %v1327 = vadd.f32 0.0, %v1326
    %v1328 = vpop.f32.mrf.mxu0
    %1329 = vdwg.mxu0
    %1330 = vrot.lane.b32.xlu0 %v322, 64
    %v1331 = vpop.permute.xlu0 %1330
    %v1334 = vsel %vm331, %v1022, 0
    %1336 = vmatprep.subr.mxu0 0.0
    %1337 = vmatpush1.msra.mxu0 0.0
    %1338 = vmatprep.subr.mxu0 0.0
    %1339 = vmatpush1.msra.mxu0 0.0
    %1340 = vmatprep.subr.mxu0 0.0
    %1341 = vmatpush1.msra.mxu0 0.0
    %1342 = vmatprep.subr.mxu0 0.0
    %1343 = vmatpush1.msra.mxu0 0.0
    %1344 = vmatprep.subr.mxu0 0.0
    %1345 = vmatpush1.msra.mxu0 0.0
    %1346 = vmatprep.subr.mxu0 0.0
    %1347 = vmatpush1.msra.mxu0 0.0
    %1348 = vmatprep.subr.mxu0 0.0
    %1349 = vmatpush1.msra.mxu0 0.0
    %1350 = vmatprep.subr.mxu0 0.0
    %1351 = vmatpush1.msra.mxu0 0.0
    %1352 = vmatprep.subr.mxu0 0.0
    %1353 = vmatpush1.msra.mxu0 0.0
    %1354 = vmatprep.subr.mxu0 0.0
    %1355 = vmatpush1.msra.mxu0 0.0
    %1356 = vmatprep.subr.mxu0 0.0
    %1357 = vmatpush1.msra.mxu0 0.0
    %1358 = vmatprep.subr.mxu0 0.0
    %1359 = vmatpush1.msra.mxu0 0.0
    %1360 = vmatprep.subr.mxu0 0.0
    %1361 = vmatpush1.msra.mxu0 0.0
    %1362 = vmatprep.subr.mxu0 0.0
    %1363 = vmatpush1.msra.mxu0 0.0
    %1364 = vmatprep.subr.mxu0 0.0
    %1365 = vmatpush1.msra.mxu0 0.0
    %1366 = vmatprep.subr.mxu0 0.0
    %1367 = vmatpush1.msra.mxu0 %v1331
    %1368 = vmatprep.subr.mxu0 0.0
    %1369 = vmatpush2.msra.mxu0 0.0
    %1370 = vmatprep.subr.mxu0 0.0
    %1371 = vmatpush2.msra.mxu0 0.0
    %1372 = vmatprep.subr.mxu0 0.0
    %1373 = vmatpush2.msra.mxu0 0.0
    %1374 = vmatprep.subr.mxu0 0.0
    %1375 = vmatpush2.msra.mxu0 0.0
    %1376 = vmatprep.subr.mxu0 0.0
    %1377 = vmatpush2.msra.mxu0 0.0
    %1378 = vmatprep.subr.mxu0 0.0
    %1379 = vmatpush2.msra.mxu0 0.0
    %1380 = vmatprep.subr.mxu0 0.0
    %1381 = vmatpush2.msra.mxu0 0.0
    %1382 = vmatprep.subr.mxu0 0.0
    %1383 = vmatpush2.msra.mxu0 0.0
    %1384 = vmatprep.subr.mxu0 0.0
    %1385 = vmatpush2.msra.mxu0 0.0
    %1386 = vmatprep.subr.mxu0 0.0
    %1387 = vmatpush2.msra.mxu0 0.0
    %1388 = vmatprep.subr.mxu0 0.0
    %1389 = vmatpush2.msra.mxu0 0.0
    %1390 = vmatprep.subr.mxu0 0.0
    %1391 = vmatpush2.msra.mxu0 0.0
    %1392 = vmatprep.subr.mxu0 0.0
    %1393 = vmatpush2.msra.mxu0 0.0
    %1394 = vmatprep.subr.mxu0 0.0
    %1395 = vmatpush2.msra.mxu0 0.0
    %1396 = vmatprep.subr.mxu0 0.0
    %1397 = vmatpush2.msra.mxu0 0.0
    %1398 = vmatprep.subr.mxu0 0.0
    %1399 = vmatpush2.msra.mxu0 0.0
    %1400 = vmatprep.mubr.f32.mxu0 0.0
    %1401 = vmatmul.mubr.f32.gmra.mxu0 %v1334
    %v1402 = vpop.f32.mrf.mxu0
    %v1403 = vadd.f32 0.0, %v1402
    %v1404 = vpop.f32.mrf.mxu0
    %1405 = vdwg.mxu0
    %1406 = vrot.lane.b32.xlu0 %v324, 64
    %v1407 = vpop.permute.xlu0 %1406
    %v1410 = vsel %vm331, %v1023, 0
    %1412 = vmatprep.subr.mxu0 0.0
    %1413 = vmatpush1.msra.mxu0 0.0
    %1414 = vmatprep.subr.mxu0 0.0
    %1415 = vmatpush1.msra.mxu0 0.0
    %1416 = vmatprep.subr.mxu0 0.0
    %1417 = vmatpush1.msra.mxu0 0.0
    %1418 = vmatprep.subr.mxu0 0.0
    %1419 = vmatpush1.msra.mxu0 0.0
    %1420 = vmatprep.subr.mxu0 0.0
    %1421 = vmatpush1.msra.mxu0 0.0
    %1422 = vmatprep.subr.mxu0 0.0
    %1423 = vmatpush1.msra.mxu0 0.0
    %1424 = vmatprep.subr.mxu0 0.0
    %1425 = vmatpush1.msra.mxu0 0.0
    %1426 = vmatprep.subr.mxu0 0.0
    %1427 = vmatpush1.msra.mxu0 0.0
    %1428 = vmatprep.subr.mxu0 0.0
    %1429 = vmatpush1.msra.mxu0 0.0
    %1430 = vmatprep.subr.mxu0 0.0
    %1431 = vmatpush1.msra.mxu0 0.0
    %1432 = vmatprep.subr.mxu0 0.0
    %1433 = vmatpush1.msra.mxu0 0.0
    %1434 = vmatprep.subr.mxu0 0.0
    %1435 = vmatpush1.msra.mxu0 0.0
    %1436 = vmatprep.subr.mxu0 0.0
    %1437 = vmatpush1.msra.mxu0 0.0
    %1438 = vmatprep.subr.mxu0 0.0
    %1439 = vmatpush1.msra.mxu0 0.0
    %1440 = vmatprep.subr.mxu0 0.0
    %1441 = vmatpush1.msra.mxu0 0.0
    %1442 = vmatprep.subr.mxu0 0.0
    %1443 = vmatpush1.msra.mxu0 %v1407
    %1444 = vmatprep.subr.mxu0 0.0
    %1445 = vmatpush2.msra.mxu0 0.0
    %1446 = vmatprep.subr.mxu0 0.0
    %1447 = vmatpush2.msra.mxu0 0.0
    %1448 = vmatprep.subr.mxu0 0.0
    %1449 = vmatpush2.msra.mxu0 0.0
    %1450 = vmatprep.subr.mxu0 0.0
    %1451 = vmatpush2.msra.mxu0 0.0
    %1452 = vmatprep.subr.mxu0 0.0
    %1453 = vmatpush2.msra.mxu0 0.0
    %1454 = vmatprep.subr.mxu0 0.0
    %1455 = vmatpush2.msra.mxu0 0.0
    %1456 = vmatprep.subr.mxu0 0.0
    %1457 = vmatpush2.msra.mxu0 0.0
    %1458 = vmatprep.subr.mxu0 0.0
    %1459 = vmatpush2.msra.mxu0 0.0
    %1460 = vmatprep.subr.mxu0 0.0
    %1461 = vmatpush2.msra.mxu0 0.0
    %1462 = vmatprep.subr.mxu0 0.0
    %1463 = vmatpush2.msra.mxu0 0.0
    %1464 = vmatprep.subr.mxu0 0.0
    %1465 = vmatpush2.msra.mxu0 0.0
    %1466 = vmatprep.subr.mxu0 0.0
    %1467 = vmatpush2.msra.mxu0 0.0
    %1468 = vmatprep.subr.mxu0 0.0
    %1469 = vmatpush2.msra.mxu0 0.0
    %1470 = vmatprep.subr.mxu0 0.0
    %1471 = vmatpush2.msra.mxu0 0.0
    %1472 = vmatprep.subr.mxu0 0.0
    %1473 = vmatpush2.msra.mxu0 0.0
    %1474 = vmatprep.subr.mxu0 0.0
    %1475 = vmatpush2.msra.mxu0 0.0
    %1476 = vmatprep.mubr.f32.mxu0 0.0
    %1477 = vmatmul.mubr.f32.gmra.mxu0 %v1410
    %v1478 = vpop.f32.mrf.mxu0
    %v1479 = vadd.f32 0.0, %v1478
    %v1480 = vpop.f32.mrf.mxu0
    %1481 = vdwg.mxu0
    %1482 = vrot.lane.b32.xlu0 %v326, 64
    %v1483 = vpop.permute.xlu0 %1482
    %v1486 = vsel %vm331, %v1024, 0
    %1488 = vmatprep.subr.mxu0 0.0
    %1489 = vmatpush1.msra.mxu0 0.0
    %1490 = vmatprep.subr.mxu0 0.0
    %1491 = vmatpush1.msra.mxu0 0.0
    %1492 = vmatprep.subr.mxu0 0.0
    %1493 = vmatpush1.msra.mxu0 0.0
    %1494 = vmatprep.subr.mxu0 0.0
    %1495 = vmatpush1.msra.mxu0 0.0
    %1496 = vmatprep.subr.mxu0 0.0
    %1497 = vmatpush1.msra.mxu0 0.0
    %1498 = vmatprep.subr.mxu0 0.0
    %1499 = vmatpush1.msra.mxu0 0.0
    %1500 = vmatprep.subr.mxu0 0.0
    %1501 = vmatpush1.msra.mxu0 0.0
    %1502 = vmatprep.subr.mxu0 0.0
    %1503 = vmatpush1.msra.mxu0 0.0
    %1504 = vmatprep.subr.mxu0 0.0
    %1505 = vmatpush1.msra.mxu0 0.0
    %1506 = vmatprep.subr.mxu0 0.0
    %1507 = vmatpush1.msra.mxu0 0.0
    %1508 = vmatprep.subr.mxu0 0.0
    %1509 = vmatpush1.msra.mxu0 0.0
    %1510 = vmatprep.subr.mxu0 0.0
    %1511 = vmatpush1.msra.mxu0 0.0
    %1512 = vmatprep.subr.mxu0 0.0
    %1513 = vmatpush1.msra.mxu0 0.0
    %1514 = vmatprep.subr.mxu0 0.0
    %1515 = vmatpush1.msra.mxu0 0.0
    %1516 = vmatprep.subr.mxu0 0.0
    %1517 = vmatpush1.msra.mxu0 0.0
    %1518 = vmatprep.subr.mxu0 0.0
    %1519 = vmatpush1.msra.mxu0 %v1483
    %1520 = vmatprep.subr.mxu0 0.0
    %1521 = vmatpush2.msra.mxu0 0.0
    %1522 = vmatprep.subr.mxu0 0.0
    %1523 = vmatpush2.msra.mxu0 0.0
    %1524 = vmatprep.subr.mxu0 0.0
    %1525 = vmatpush2.msra.mxu0 0.0
    %1526 = vmatprep.subr.mxu0 0.0
    %1527 = vmatpush2.msra.mxu0 0.0
    %1528 = vmatprep.subr.mxu0 0.0
    %1529 = vmatpush2.msra.mxu0 0.0
    %1530 = vmatprep.subr.mxu0 0.0
    %1531 = vmatpush2.msra.mxu0 0.0
    %1532 = vmatprep.subr.mxu0 0.0
    %1533 = vmatpush2.msra.mxu0 0.0
    %1534 = vmatprep.subr.mxu0 0.0
    %1535 = vmatpush2.msra.mxu0 0.0
    %1536 = vmatprep.subr.mxu0 0.0
    %1537 = vmatpush2.msra.mxu0 0.0
    %1538 = vmatprep.subr.mxu0 0.0
    %1539 = vmatpush2.msra.mxu0 0.0
    %1540 = vmatprep.subr.mxu0 0.0
    %1541 = vmatpush2.msra.mxu0 0.0
    %1542 = vmatprep.subr.mxu0 0.0
    %1543 = vmatpush2.msra.mxu0 0.0
    %1544 = vmatprep.subr.mxu0 0.0
    %1545 = vmatpush2.msra.mxu0 0.0
    %1546 = vmatprep.subr.mxu0 0.0
    %1547 = vmatpush2.msra.mxu0 0.0
    %1548 = vmatprep.subr.mxu0 0.0
    %1549 = vmatpush2.msra.mxu0 0.0
    %1550 = vmatprep.subr.mxu0 0.0
    %1551 = vmatpush2.msra.mxu0 0.0
    %1552 = vmatprep.mubr.f32.mxu0 0.0
    %1553 = vmatmul.mubr.f32.gmra.mxu0 %v1486
    %v1554 = vpop.f32.mrf.mxu0
    %v1555 = vadd.f32 0.0, %v1554
    %v1556 = vpop.f32.mrf.mxu0
    %1557 = vdwg.mxu0
    %1558 = vrot.lane.b32.xlu0 %v328, 64
    %v1559 = vpop.permute.xlu0 %1558
    %v1562 = vsel %vm331, %v1025, 0
    %1564 = vmatprep.subr.mxu0 0.0
    %1565 = vmatpush1.msra.mxu0 0.0
    %1566 = vmatprep.subr.mxu0 0.0
    %1567 = vmatpush1.msra.mxu0 0.0
    %1568 = vmatprep.subr.mxu0 0.0
    %1569 = vmatpush1.msra.mxu0 0.0
    %1570 = vmatprep.subr.mxu0 0.0
    %1571 = vmatpush1.msra.mxu0 0.0
    %1572 = vmatprep.subr.mxu0 0.0
    %1573 = vmatpush1.msra.mxu0 0.0
    %1574 = vmatprep.subr.mxu0 0.0
    %1575 = vmatpush1.msra.mxu0 0.0
    %1576 = vmatprep.subr.mxu0 0.0
    %1577 = vmatpush1.msra.mxu0 0.0
    %1578 = vmatprep.subr.mxu0 0.0
    %1579 = vmatpush1.msra.mxu0 0.0
    %1580 = vmatprep.subr.mxu0 0.0
    %1581 = vmatpush1.msra.mxu0 0.0
    %1582 = vmatprep.subr.mxu0 0.0
    %1583 = vmatpush1.msra.mxu0 0.0
    %1584 = vmatprep.subr.mxu0 0.0
    %1585 = vmatpush1.msra.mxu0 0.0
    %1586 = vmatprep.subr.mxu0 0.0
    %1587 = vmatpush1.msra.mxu0 0.0
    %1588 = vmatprep.subr.mxu0 0.0
    %1589 = vmatpush1.msra.mxu0 0.0
    %1590 = vmatprep.subr.mxu0 0.0
    %1591 = vmatpush1.msra.mxu0 0.0
    %1592 = vmatprep.subr.mxu0 0.0
    %1593 = vmatpush1.msra.mxu0 0.0
    %1594 = vmatprep.subr.mxu0 0.0
    %1595 = vmatpush1.msra.mxu0 %v1559
    %1596 = vmatprep.subr.mxu0 0.0
    %1597 = vmatpush2.msra.mxu0 0.0
    %1598 = vmatprep.subr.mxu0 0.0
    %1599 = vmatpush2.msra.mxu0 0.0
    %1600 = vmatprep.subr.mxu0 0.0
    %1601 = vmatpush2.msra.mxu0 0.0
    %1602 = vmatprep.subr.mxu0 0.0
    %1603 = vmatpush2.msra.mxu0 0.0
    %1604 = vmatprep.subr.mxu0 0.0
    %1605 = vmatpush2.msra.mxu0 0.0
    %1606 = vmatprep.subr.mxu0 0.0
    %1607 = vmatpush2.msra.mxu0 0.0
    %1608 = vmatprep.subr.mxu0 0.0
    %1609 = vmatpush2.msra.mxu0 0.0
    %1610 = vmatprep.subr.mxu0 0.0
    %1611 = vmatpush2.msra.mxu0 0.0
    %1612 = vmatprep.subr.mxu0 0.0
    %1613 = vmatpush2.msra.mxu0 0.0
    %1614 = vmatprep.subr.mxu0 0.0
    %1615 = vmatpush2.msra.mxu0 0.0
    %1616 = vmatprep.subr.mxu0 0.0
    %1617 = vmatpush2.msra.mxu0 0.0
    %1618 = vmatprep.subr.mxu0 0.0
    %1619 = vmatpush2.msra.mxu0 0.0
    %1620 = vmatprep.subr.mxu0 0.0
    %1621 = vmatpush2.msra.mxu0 0.0
    %1622 = vmatprep.subr.mxu0 0.0
    %1623 = vmatpush2.msra.mxu0 0.0
    %1624 = vmatprep.subr.mxu0 0.0
    %1625 = vmatpush2.msra.mxu0 0.0
    %1626 = vmatprep.subr.mxu0 0.0
    %1627 = vmatpush2.msra.mxu0 0.0
    %1628 = vmatprep.mubr.f32.mxu0 0.0
    %1629 = vmatmul.mubr.f32.gmra.mxu0 %v1562
    %v1630 = vpop.f32.mrf.mxu0
    %v1631 = vadd.f32 0.0, %v1630
    %v1632 = vpop.f32.mrf.mxu0
    %1633 = vdwg.mxu0
    %1636 = vrot.lane.b32.xlu0 %v1251, 8
    %v1637 = vpop.permute.xlu0 %1636
    %1638 = vrot.lane.b32.xlu0 %v1327, 8
    %v1639 = vpop.permute.xlu0 %1638
    %1644 = vrot.lane.b32.xlu0 %v1403, 16
    %v1645 = vpop.permute.xlu0 %1644
    %1646 = vrot.lane.b32.xlu0 %v1479, 16
    %v1647 = vpop.permute.xlu0 %1646
    %1652 = vrot.lane.b32.xlu0 %v1555, 24
    %v1653 = vpop.permute.xlu0 %1652
    %1654 = vrot.lane.b32.xlu0 %v1631, 24
    %v1655 = vpop.permute.xlu0 %1654
    %v1658 = vsel %vm331, %v1099, %v1637
    %v1659 = vsel %vm331, %v1175, %v1639
    %vm1660 = vcmask 130048
    %v1661 = vsel %vm1660, %v1658, %v1645
    %v1662 = vsel %vm1660, %v1659, %v1647
    %vm1663 = vcmask 195584
    %v1664 = vsel %vm1663, %v1661, %v1653
    %v1665 = vsel %vm1663, %v1662, %v1655
    %v1666 = vld [vmem:[%s6] sm:$0xff]
    %v1667 = vld [vmem:[%s6 + $0x8] sm:$0xff]
    %v1668 = vld [vmem:[%s6 + $0x10] sm:$0xff]
    %v1669 = vld [vmem:[%s6 + $0x18] sm:$0xff]
    %v1670 = vld [vmem:[%s7] sm:$0x1]
    %v1672 = vlaneseq
    %v1673 = vshrl.u32 %v1672, 7
    %v1674 = vsub.s32 0, %v1673
    %v1675 = vrot.slane %v1670, %v1674
    %v1678 = vsel %vm107, %v1664, 0
    %v1681 = vsel %vm107, %v1665, 0
    %1683 = vmatprep.subr.mxu0 0.0
    %1684 = vmatpush1.msra.mxu0 0.0
    %1685 = vmatprep.subr.mxu0 0.0
    %1686 = vmatpush1.msra.mxu0 0.0
    %1687 = vmatprep.subr.mxu0 0.0
    %1688 = vmatpush1.msra.mxu0 0.0
    %1689 = vmatprep.subr.mxu0 0.0
    %1690 = vmatpush1.msra.mxu0 0.0
    %1691 = vmatprep.subr.mxu0 0.0
    %1692 = vmatpush1.msra.mxu0 0.0
    %1693 = vmatprep.subr.mxu0 0.0
    %1694 = vmatpush1.msra.mxu0 0.0
    %1695 = vmatprep.subr.mxu0 0.0
    %1696 = vmatpush1.msra.mxu0 0.0
    %1697 = vmatprep.subr.mxu0 0.0
    %1698 = vmatpush1.msra.mxu0 0.0
    %1699 = vmatprep.subr.mxu0 0.0
    %1700 = vmatpush1.msra.mxu0 0.0
    %1701 = vmatprep.subr.mxu0 0.0
    %1702 = vmatpush1.msra.mxu0 0.0
    %1703 = vmatprep.subr.mxu0 0.0
    %1704 = vmatpush1.msra.mxu0 0.0
    %1705 = vmatprep.subr.mxu0 0.0
    %1706 = vmatpush1.msra.mxu0 0.0
    %1707 = vmatprep.subr.mxu0 0.0
    %1708 = vmatpush1.msra.mxu0 %v1669
    %1709 = vmatprep.subr.mxu0 0.0
    %1710 = vmatpush1.msra.mxu0 %v1668
    %1711 = vmatprep.subr.mxu0 0.0
    %1712 = vmatpush1.msra.mxu0 %v1667
    %1713 = vmatprep.subr.mxu0 0.0
    %1714 = vmatpush1.msra.mxu0 %v1666
    %1715 = vmatprep.subr.mxu0 0.0
    %1716 = vmatpush2.msra.mxu0 0.0
    %1717 = vmatprep.subr.mxu0 0.0
    %1718 = vmatpush2.msra.mxu0 0.0
    %1719 = vmatprep.subr.mxu0 0.0
    %1720 = vmatpush2.msra.mxu0 0.0
    %1721 = vmatprep.subr.mxu0 0.0
    %1722 = vmatpush2.msra.mxu0 0.0
    %1723 = vmatprep.subr.mxu0 0.0
    %1724 = vmatpush2.msra.mxu0 0.0
    %1725 = vmatprep.subr.mxu0 0.0
    %1726 = vmatpush2.msra.mxu0 0.0
    %1727 = vmatprep.subr.mxu0 0.0
    %1728 = vmatpush2.msra.mxu0 0.0
    %1729 = vmatprep.subr.mxu0 0.0
    %1730 = vmatpush2.msra.mxu0 0.0
    %1731 = vmatprep.subr.mxu0 0.0
    %1732 = vmatpush2.msra.mxu0 0.0
    %1733 = vmatprep.subr.mxu0 0.0
    %1734 = vmatpush2.msra.mxu0 0.0
    %1735 = vmatprep.subr.mxu0 0.0
    %1736 = vmatpush2.msra.mxu0 0.0
    %1737 = vmatprep.subr.mxu0 0.0
    %1738 = vmatpush2.msra.mxu0 0.0
    %1739 = vmatprep.subr.mxu0 0.0
    %1740 = vmatpush2.msra.mxu0 0.0
    %1741 = vmatprep.subr.mxu0 0.0
    %1742 = vmatpush2.msra.mxu0 0.0
    %1743 = vmatprep.subr.mxu0 0.0
    %1744 = vmatpush2.msra.mxu0 0.0
    %1745 = vmatprep.subr.mxu0 0.0
    %1746 = vmatpush2.msra.mxu0 0.0
    %1747 = vmatprep.mubr.f32.mxu0 0.0
    %1748 = vmatmul.mubr.f32.gmra.mxu0 %v1678
    %v1749 = vpop.f32.mrf.mxu0
    %v1750 = vadd.f32 %v1675, %v1749
    %v1751 = vpop.f32.mrf.mxu0
    %1752 = vmatprep.mubr.f32.mxu0 0.0
    %1753 = vmatmul.mubr.f32.gmra.mxu0 %v1681
    %v1754 = vpop.f32.mrf.mxu0
    %v1755 = vadd.f32 %v1675, %v1754
    %v1756 = vpop.f32.mrf.mxu0
    %1757 = vdwg.mxu0
    %v1758 = vadd.f32 %v1750, %v149
    %v1759 = vadd.f32 %v1755, %v150
    %v1760 = vld [vmem:[%s8] sm:$0x1]
    %v1761 = vld [vmem:[%s9] sm:$0x1]
    %v1762 = vsel %vm107, %v1758, 0.0
    %1763 = vadd.xlane.f32.xlu0 %v1762
    %v1764 = vpop.xlane.xlu0 %1763
    %v1765 = vsel %vm107, %v1759, 0.0
    %1766 = vadd.xlane.f32.xlu0 %v1765
    %v1767 = vpop.xlane.xlu0 %1766
    %v1768 = vmul.f32 %v1764, %v114
    %v1769 = vmul.f32 %v1767, %v114
    %v1770 = vsub.f32 %v1758, %v1768
    %v1771 = vsub.f32 %v1759, %v1769
    %v1772 = vmul.f32 %v1770, %v1770
    %v1773 = vmul.f32 %v1771, %v1771
    %v1774 = vsel %vm107, %v1772, 0.0
    %1775 = vadd.xlane.f32.xlu0 %v1774
    %v1776 = vpop.xlane.xlu0 %1775
    %v1777 = vsel %vm107, %v1773, 0.0
    %1778 = vadd.xlane.f32.xlu0 %v1777
    %v1779 = vpop.xlane.xlu0 %1778
    %v1780 = vmul.f32 %v1776, %v114
    %v1781 = vmul.f32 %v1779, %v114
    %v1782 = vadd.f32 %v1780, 1e-12
    %v1783 = vadd.f32 %v1781, 1e-12
    %v1784 = vrsqrt.pop %v1782
    %v1785 = vrsqrt.pop %v1783
    %v1786 = vmul.f32 %v1770, %v1784
    %v1787 = vmul.f32 %v1771, %v1785
    %v1789 = vlaneseq
    %v1790 = vshrl.u32 %v1789, 7
    %v1791 = vsub.s32 0, %v1790
    %v1792 = vrot.slane %v1760, %v1791
    %v1794 = vmul.f32 %v1786, %v1792
    %v1795 = vmul.f32 %v1787, %v1792
    %v1797 = vlaneseq
    %v1798 = vshrl.u32 %v1797, 7
    %v1799 = vsub.s32 0, %v1798
    %v1800 = vrot.slane %v1761, %v1799
    %v1802 = vadd.f32 %v1794, %v1800
    %v1803 = vadd.f32 %v1795, %v1800
    %v1804 = vld [vmem:[%s10] sm:$0xff]
    %v1805 = vld [vmem:[%s10 + $0x8] sm:$0xff]
    %v1806 = vld [vmem:[%s10 + $0x10] sm:$0xff]
    %v1807 = vld [vmem:[%s10 + $0x18] sm:$0xff]
    %v1808 = vld [vmem:[%s11] sm:$0x1]
    %v1810 = vlaneseq
    %v1811 = vshrl.u32 %v1810, 7
    %v1812 = vsub.s32 0, %v1811
    %v1813 = vrot.slane %v1808, %v1812
    %v1816 = vsel %vm107, %v1802, 0
    %v1819 = vsel %vm107, %v1803, 0
    %1821 = vmatprep.subr.mxu0 0.0
    %1822 = vmatpush1.msra.mxu0 0.0
    %1823 = vmatprep.subr.mxu0 0.0
    %1824 = vmatpush1.msra.mxu0 0.0
    %1825 = vmatprep.subr.mxu0 0.0
    %1826 = vmatpush1.msra.mxu0 0.0
    %1827 = vmatprep.subr.mxu0 0.0
    %1828 = vmatpush1.msra.mxu0 0.0
    %1829 = vmatprep.subr.mxu0 0.0
    %1830 = vmatpush1.msra.mxu0 0.0
    %1831 = vmatprep.subr.mxu0 0.0
    %1832 = vmatpush1.msra.mxu0 0.0
    %1833 = vmatprep.subr.mxu0 0.0
    %1834 = vmatpush1.msra.mxu0 0.0
    %1835 = vmatprep.subr.mxu0 0.0
    %1836 = vmatpush1.msra.mxu0 0.0
    %1837 = vmatprep.subr.mxu0 0.0
    %1838 = vmatpush1.msra.mxu0 0.0
    %1839 = vmatprep.subr.mxu0 0.0
    %1840 = vmatpush1.msra.mxu0 0.0
    %1841 = vmatprep.subr.mxu0 0.0
    %1842 = vmatpush1.msra.mxu0 0.0
    %1843 = vmatprep.subr.mxu0 0.0
    %1844 = vmatpush1.msra.mxu0 0.0
    %1845 = vmatprep.subr.mxu0 0.0
    %1846 = vmatpush1.msra.mxu0 %v1807
    %1847 = vmatprep.subr.mxu0 0.0
    %1848 = vmatpush1.msra.mxu0 %v1806
    %1849 = vmatprep.subr.mxu0 0.0
    %1850 = vmatpush1.msra.mxu0 %v1805
    %1851 = vmatprep.subr.mxu0 0.0
    %1852 = vmatpush1.msra.mxu0 %v1804
    %1853 = vmatprep.subr.mxu0 0.0
    %1854 = vmatpush2.msra.mxu0 0.0
    %1855 = vmatprep.subr.mxu0 0.0
    %1856 = vmatpush2.msra.mxu0 0.0
    %1857 = vmatprep.subr.mxu0 0.0
    %1858 = vmatpush2.msra.mxu0 0.0
    %1859 = vmatprep.subr.mxu0 0.0
    %1860 = vmatpush2.msra.mxu0 0.0
    %1861 = vmatprep.subr.mxu0 0.0
    %1862 = vmatpush2.msra.mxu0 0.0
    %1863 = vmatprep.subr.mxu0 0.0
    %1864 = vmatpush2.msra.mxu0 0.0
    %1865 = vmatprep.subr.mxu0 0.0
    %1866 = vmatpush2.msra.mxu0 0.0
    %1867 = vmatprep.subr.mxu0 0.0
    %1868 = vmatpush2.msra.mxu0 0.0
    %1869 = vmatprep.subr.mxu0 0.0
    %1870 = vmatpush2.msra.mxu0 0.0
    %1871 = vmatprep.subr.mxu0 0.0
    %1872 = vmatpush2.msra.mxu0 0.0
    %1873 = vmatprep.subr.mxu0 0.0
    %1874 = vmatpush2.msra.mxu0 0.0
    %1875 = vmatprep.subr.mxu0 0.0
    %1876 = vmatpush2.msra.mxu0 0.0
    %1877 = vmatprep.subr.mxu0 0.0
    %1878 = vmatpush2.msra.mxu0 0.0
    %1879 = vmatprep.subr.mxu0 0.0
    %1880 = vmatpush2.msra.mxu0 0.0
    %1881 = vmatprep.subr.mxu0 0.0
    %1882 = vmatpush2.msra.mxu0 0.0
    %1883 = vmatprep.subr.mxu0 0.0
    %1884 = vmatpush2.msra.mxu0 0.0
    %1885 = vmatprep.mubr.f32.mxu0 0.0
    %1886 = vmatmul.mubr.f32.gmra.mxu0 %v1816
    %v1887 = vpop.f32.mrf.mxu0
    %v1888 = vadd.f32 %v1813, %v1887
    %v1889 = vpop.f32.mrf.mxu0
    %1890 = vmatprep.mubr.f32.mxu0 0.0
    %1891 = vmatmul.mubr.f32.gmra.mxu0 %v1819
    %v1892 = vpop.f32.mrf.mxu0
    %v1893 = vadd.f32 %v1813, %v1892
    %v1894 = vpop.f32.mrf.mxu0
    %1895 = vdwg.mxu0
    %v1896 = vmul.f32 %v1888, 0.5
    %v1897 = vmul.f32 %v1893, 0.5
    %v1898 = vmul.f32 %v1888, 0.044715
    %v1899 = vmul.f32 %v1893, 0.044715
    %v1900 = vmul.f32 %v1898, %v1888
    %v1901 = vmul.f32 %v1899, %v1893
    %v1902 = vmul.f32 %v1900, %v1888
    %v1903 = vmul.f32 %v1901, %v1893
    %v1904 = vadd.f32 %v1888, %v1902
    %v1905 = vadd.f32 %v1893, %v1903
    %v1906 = vmul.f32 %v1904, 0.7978846
    %v1907 = vmul.f32 %v1905, 0.7978846
    %v1908 = vtanh.pop %v1906
    %v1909 = vtanh.pop %v1907
    %v1910 = vadd.f32 %v1908, 1.0
    %v1911 = vadd.f32 %v1909, 1.0
    %v1912 = vmul.f32 %v1896, %v1910
    %v1913 = vmul.f32 %v1897, %v1911
    %v1914 = vld [vmem:[%s12] sm:$0xff]
    %v1915 = vld [vmem:[%s12 + $0x8] sm:$0xff]
    %v1916 = vld [vmem:[%s12 + $0x10] sm:$0xff]
    %v1917 = vld [vmem:[%s12 + $0x18] sm:$0xff]
    %v1918 = vld [vmem:[%s12 + $0x20] sm:$0xff]
    %v1919 = vld [vmem:[%s12 + $0x28] sm:$0xff]
    %v1920 = vld [vmem:[%s12 + $0x30] sm:$0xff]
    %v1921 = vld [vmem:[%s12 + $0x38] sm:$0xff]
    %v1922 = vld [vmem:[%s13] sm:$0x1]
    %v1924 = vlaneseq
    %v1925 = vshrl.u32 %v1924, 7
    %v1926 = vsub.s32 0, %v1925
    %v1927 = vrot.slane %v1922, %v1926
    %vm1929 = vcmask 523264
    %v1931 = vsel %vm1929, %v1912, 0
    %v1934 = vsel %vm1929, %v1913, 0
    %1936 = vmatprep.subr.mxu0 0.0
    %1937 = vmatpush1.msra.mxu0 0.0
    %1938 = vmatprep.subr.mxu0 0.0
    %1939 = vmatpush1.msra.mxu0 0.0
    %1940 = vmatprep.subr.mxu0 0.0
    %1941 = vmatpush1.msra.mxu0 0.0
    %1942 = vmatprep.subr.mxu0 0.0
    %1943 = vmatpush1.msra.mxu0 0.0
    %1944 = vmatprep.subr.mxu0 0.0
    %1945 = vmatpush1.msra.mxu0 0.0
    %1946 = vmatprep.subr.mxu0 0.0
    %1947 = vmatpush1.msra.mxu0 0.0
    %1948 = vmatprep.subr.mxu0 0.0
    %1949 = vmatpush1.msra.mxu0 0.0
    %1950 = vmatprep.subr.mxu0 0.0
    %1951 = vmatpush1.msra.mxu0 0.0
    %1952 = vmatprep.subr.mxu0 0.0
    %1953 = vmatpush1.msra.mxu0 %v1921
    %1954 = vmatprep.subr.mxu0 0.0
    %1955 = vmatpush1.msra.mxu0 %v1920
    %1956 = vmatprep.subr.mxu0 0.0
    %1957 = vmatpush1.msra.mxu0 %v1919
    %1958 = vmatprep.subr.mxu0 0.0
    %1959 = vmatpush1.msra.mxu0 %v1918
    %1960 = vmatprep.subr.mxu0 0.0
    %1961 = vmatpush1.msra.mxu0 %v1917
    %1962 = vmatprep.subr.mxu0 0.0
    %1963 = vmatpush1.msra.mxu0 %v1916
    %1964 = vmatprep.subr.mxu0 0.0
    %1965 = vmatpush1.msra.mxu0 %v1915
    %1966 = vmatprep.subr.mxu0 0.0
    %1967 = vmatpush1.msra.mxu0 %v1914
    %1968 = vmatprep.subr.mxu0 0.0
    %1969 = vmatpush2.msra.mxu0 0.0
    %1970 = vmatprep.subr.mxu0 0.0
    %1971 = vmatpush2.msra.mxu0 0.0
    %1972 = vmatprep.subr.mxu0 0.0
    %1973 = vmatpush2.msra.mxu0 0.0
    %1974 = vmatprep.subr.mxu0 0.0
    %1975 = vmatpush2.msra.mxu0 0.0
    %1976 = vmatprep.subr.mxu0 0.0
    %1977 = vmatpush2.msra.mxu0 0.0
    %1978 = vmatprep.subr.mxu0 0.0
    %1979 = vmatpush2.msra.mxu0 0.0
    %1980 = vmatprep.subr.mxu0 0.0
    %1981 = vmatpush2.msra.mxu0 0.0
    %1982 = vmatprep.subr.mxu0 0.0
    %1983 = vmatpush2.msra.mxu0 0.0
    %1984 = vmatprep.subr.mxu0 0.0
    %1985 = vmatpush2.msra.mxu0 0.0
    %1986 = vmatprep.subr.mxu0 0.0
    %1987 = vmatpush2.msra.mxu0 0.0
    %1988 = vmatprep.subr.mxu0 0.0
    %1989 = vmatpush2.msra.mxu0 0.0
    %1990 = vmatprep.subr.mxu0 0.0
    %1991 = vmatpush2.msra.mxu0 0.0
    %1992 = vmatprep.subr.mxu0 0.0
    %1993 = vmatpush2.msra.mxu0 0.0
    %1994 = vmatprep.subr.mxu0 0.0
    %1995 = vmatpush2.msra.mxu0 0.0
    %1996 = vmatprep.subr.mxu0 0.0
    %1997 = vmatpush2.msra.mxu0 0.0
    %1998 = vmatprep.subr.mxu0 0.0
    %1999 = vmatpush2.msra.mxu0 0.0
    %2000 = vmatprep.mubr.f32.mxu0 0.0
    %2001 = vmatmul.mubr.f32.gmra.mxu0 %v1931
    %v2002 = vpop.f32.mrf.mxu0
    %v2003 = vadd.f32 %v1927, %v2002
    %v2004 = vpop.f32.mrf.mxu0
    %2005 = vmatprep.mubr.f32.mxu0 0.0
    %2006 = vmatmul.mubr.f32.gmra.mxu0 %v1934
    %v2007 = vpop.f32.mrf.mxu0
    %v2008 = vadd.f32 %v1927, %v2007
    %v2009 = vpop.f32.mrf.mxu0
    %2010 = vdwg.mxu0
    %v2011 = vadd.f32 %v2003, %v1802
    %v2012 = vadd.f32 %v2008, %v1803
    %v2013 = vld [vmem:[%s14] sm:$0x1]
    %v2014 = vld [vmem:[%s15] sm:$0x1]
    %v2015 = vsel %vm107, %v2011, 0.0
    %2016 = vadd.xlane.f32.xlu0 %v2015
    %v2017 = vpop.xlane.xlu0 %2016
    %v2018 = vsel %vm107, %v2012, 0.0
    %2019 = vadd.xlane.f32.xlu0 %v2018
    %v2020 = vpop.xlane.xlu0 %2019
    %v2021 = vmul.f32 %v2017, %v114
    %v2022 = vmul.f32 %v2020, %v114
    %v2023 = vsub.f32 %v2011, %v2021
    %v2024 = vsub.f32 %v2012, %v2022
    %v2025 = vmul.f32 %v2023, %v2023
    %v2026 = vmul.f32 %v2024, %v2024
    %v2027 = vsel %vm107, %v2025, 0.0
    %2028 = vadd.xlane.f32.xlu0 %v2027
    %v2029 = vpop.xlane.xlu0 %2028
    %v2030 = vsel %vm107, %v2026, 0.0
    %2031 = vadd.xlane.f32.xlu0 %v2030
    %v2032 = vpop.xlane.xlu0 %2031
    %v2033 = vmul.f32 %v2029, %v114
    %v2034 = vmul.f32 %v2032, %v114
    %v2035 = vadd.f32 %v2033, 1e-12
    %v2036 = vadd.f32 %v2034, 1e-12
    %v2037 = vrsqrt.pop %v2035
    %v2038 = vrsqrt.pop %v2036
    %v2039 = vmul.f32 %v2023, %v2037
    %v2040 = vmul.f32 %v2024, %v2038
    %v2042 = vlaneseq
    %v2043 = vshrl.u32 %v2042, 7
    %v2044 = vsub.s32 0, %v2043
    %v2045 = vrot.slane %v2013, %v2044
    %v2047 = vmul.f32 %v2039, %v2045
    %v2048 = vmul.f32 %v2040, %v2045
    %v2050 = vlaneseq
    %v2051 = vshrl.u32 %v2050, 7
    %v2052 = vsub.s32 0, %v2051
    %v2053 = vrot.slane %v2014, %v2052
    %v2055 = vadd.f32 %v2047, %v2053
    %v2056 = vadd.f32 %v2048, %v2053
    %s2057 = scalar_lea.vmem %s4, 32
    %v2058 = vld [vmem:[%s2057] sm:$0xff]
    %v2059 = vld [vmem:[%s2057 + $0x8] sm:$0xff]
    %v2060 = vld [vmem:[%s2057 + $0x10] sm:$0xff]
    %v2061 = vld [vmem:[%s2057 + $0x18] sm:$0xff]
    %s2062 = scalar_lea.vmem %s5, 1
    %v2063 = vld [vmem:[%s2062] sm:$0x1]
    %v2065 = vlaneseq
    %v2066 = vshrl.u32 %v2065, 7
    %v2067 = vsub.s32 0, %v2066
    %v2068 = vrot.slane %v2063, %v2067
    %v2071 = vsel %vm107, %v2055, 0
    %v2074 = vsel %vm107, %v2056, 0
    %2076 = vmatprep.subr.mxu0 0.0
    %2077 = vmatpush1.msra.mxu0 0.0
    %2078 = vmatprep.subr.mxu0 0.0
    %2079 = vmatpush1.msra.mxu0 0.0
    %2080 = vmatprep.subr.mxu0 0.0
    %2081 = vmatpush1.msra.mxu0 0.0
    %2082 = vmatprep.subr.mxu0 0.0
    %2083 = vmatpush1.msra.mxu0 0.0
    %2084 = vmatprep.subr.mxu0 0.0
    %2085 = vmatpush1.msra.mxu0 0.0
    %2086 = vmatprep.subr.mxu0 0.0
    %2087 = vmatpush1.msra.mxu0 0.0
    %2088 = vmatprep.subr.mxu0 0.0
    %2089 = vmatpush1.msra.mxu0 0.0
    %2090 = vmatprep.subr.mxu0 0.0
    %2091 = vmatpush1.msra.mxu0 0.0
    %2092 = vmatprep.subr.mxu0 0.0
    %2093 = vmatpush1.msra.mxu0 0.0
    %2094 = vmatprep.subr.mxu0 0.0
    %2095 = vmatpush1.msra.mxu0 0.0
    %2096 = vmatprep.subr.mxu0 0.0
    %2097 = vmatpush1.msra.mxu0 0.0
    %2098 = vmatprep.subr.mxu0 0.0
    %2099 = vmatpush1.msra.mxu0 0.0
    %2100 = vmatprep.subr.mxu0 0.0
    %2101 = vmatpush1.msra.mxu0 %v2061
    %2102 = vmatprep.subr.mxu0 0.0
    %2103 = vmatpush1.msra.mxu0 %v2060
    %2104 = vmatprep.subr.mxu0 0.0
    %2105 = vmatpush1.msra.mxu0 %v2059
    %2106 = vmatprep.subr.mxu0 0.0
    %2107 = vmatpush1.msra.mxu0 %v2058
    %2108 = vmatprep.subr.mxu0 0.0
    %2109 = vmatpush2.msra.mxu0 0.0
    %2110 = vmatprep.subr.mxu0 0.0
    %2111 = vmatpush2.msra.mxu0 0.0
    %2112 = vmatprep.subr.mxu0 0.0
    %2113 = vmatpush2.msra.mxu0 0.0
    %2114 = vmatprep.subr.mxu0 0.0
    %2115 = vmatpush2.msra.mxu0 0.0
    %2116 = vmatprep.subr.mxu0 0.0
    %2117 = vmatpush2.msra.mxu0 0.0
    %2118 = vmatprep.subr.mxu0 0.0
    %2119 = vmatpush2.msra.mxu0 0.0
    %2120 = vmatprep.subr.mxu0 0.0
    %2121 = vmatpush2.msra.mxu0 0.0
    %2122 = vmatprep.subr.mxu0 0.0
    %2123 = vmatpush2.msra.mxu0 0.0
    %2124 = vmatprep.subr.mxu0 0.0
    %2125 = vmatpush2.msra.mxu0 0.0
    %2126 = vmatprep.subr.mxu0 0.0
    %2127 = vmatpush2.msra.mxu0 0.0
    %2128 = vmatprep.subr.mxu0 0.0
    %2129 = vmatpush2.msra.mxu0 0.0
    %2130 = vmatprep.subr.mxu0 0.0
    %2131 = vmatpush2.msra.mxu0 0.0
    %2132 = vmatprep.subr.mxu0 0.0
    %2133 = vmatpush2.msra.mxu0 0.0
    %2134 = vmatprep.subr.mxu0 0.0
    %2135 = vmatpush2.msra.mxu0 0.0
    %2136 = vmatprep.subr.mxu0 0.0
    %2137 = vmatpush2.msra.mxu0 0.0
    %2138 = vmatprep.subr.mxu0 0.0
    %2139 = vmatpush2.msra.mxu0 0.0
    %2140 = vmatprep.mubr.f32.mxu0 0.0
    %2141 = vmatmul.mubr.f32.gmra.mxu0 %v2071
    %v2142 = vpop.f32.mrf.mxu0
    %v2143 = vadd.f32 %v2068, %v2142
    %v2144 = vpop.f32.mrf.mxu0
    %2145 = vmatprep.mubr.f32.mxu0 0.0
    %2146 = vmatmul.mubr.f32.gmra.mxu0 %v2074
    %v2147 = vpop.f32.mrf.mxu0
    %v2148 = vadd.f32 %v2068, %v2147
    %v2149 = vpop.f32.mrf.mxu0
    %2150 = vdwg.mxu0
    %v2151 = vmul.f32 %v2143, 0.35355338
    %v2152 = vmul.f32 %v2148, 0.35355338
    %2155 = vrot.lane.b32.xlu0 %v2151, 120
    %v2156 = vpop.permute.xlu0 %2155
    %2157 = vrot.lane.b32.xlu0 %v2152, 120
    %v2158 = vpop.permute.xlu0 %2157
    %2159 = vrot.lane.b32.xlu0 %v2151, 112
    %v2160 = vpop.permute.xlu0 %2159
    %2161 = vrot.lane.b32.xlu0 %v2152, 112
    %v2162 = vpop.permute.xlu0 %2161
    %2163 = vrot.lane.b32.xlu0 %v2151, 104
    %v2164 = vpop.permute.xlu0 %2163
    %2165 = vrot.lane.b32.xlu0 %v2152, 104
    %v2166 = vpop.permute.xlu0 %2165
    %2169 = vrot.lane.b32.xlu0 %v2143, 120
    %v2170 = vpop.permute.xlu0 %2169
    %2171 = vrot.lane.b32.xlu0 %v2148, 120
    %v2172 = vpop.permute.xlu0 %2171
    %2173 = vrot.lane.b32.xlu0 %v2143, 112
    %v2174 = vpop.permute.xlu0 %2173
    %2175 = vrot.lane.b32.xlu0 %v2148, 112
    %v2176 = vpop.permute.xlu0 %2175
    %2177 = vrot.lane.b32.xlu0 %v2143, 104
    %v2178 = vpop.permute.xlu0 %2177
    %2179 = vrot.lane.b32.xlu0 %v2148, 104
    %v2180 = vpop.permute.xlu0 %2179
    %2181 = vrot.lane.b32.xlu0 %v2143, 96
    %v2182 = vpop.permute.xlu0 %2181
    %v2183 = vsel %vm331, %v2151, 0
    %v2185 = vsel %vm331, %v2182, 0
    %2187 = vmatprep.subr.mxu0 0.0
    %2188 = vmatpush1.xpose.msra.mxu0 0.0
    %2189 = vmatprep.subr.mxu0 0.0
    %2190 = vmatpush1.xpose.msra.mxu0 0.0
    %2191 = vmatprep.subr.mxu0 0.0
    %2192 = vmatpush1.xpose.msra.mxu0 0.0
    %2193 = vmatprep.subr.mxu0 0.0
    %2194 = vmatpush1.xpose.msra.mxu0 0.0
    %2195 = vmatprep.subr.mxu0 0.0
    %2196 = vmatpush1.xpose.msra.mxu0 0.0
    %2197 = vmatprep.subr.mxu0 0.0
    %2198 = vmatpush1.xpose.msra.mxu0 0.0
    %2199 = vmatprep.subr.mxu0 0.0
    %2200 = vmatpush1.xpose.msra.mxu0 0.0
    %2201 = vmatprep.subr.mxu0 0.0
    %2202 = vmatpush1.xpose.msra.mxu0 0.0
    %2203 = vmatprep.subr.mxu0 0.0
    %2204 = vmatpush1.xpose.msra.mxu0 0.0
    %2205 = vmatprep.subr.mxu0 0.0
    %2206 = vmatpush1.xpose.msra.mxu0 0.0
    %2207 = vmatprep.subr.mxu0 0.0
    %2208 = vmatpush1.xpose.msra.mxu0 0.0
    %2209 = vmatprep.subr.mxu0 0.0
    %2210 = vmatpush1.xpose.msra.mxu0 0.0
    %2211 = vmatprep.subr.mxu0 0.0
    %2212 = vmatpush1.xpose.msra.mxu0 0.0
    %2213 = vmatprep.subr.mxu0 0.0
    %2214 = vmatpush1.xpose.msra.mxu0 0.0
    %2215 = vmatprep.subr.mxu0 0.0
    %2216 = vmatpush1.xpose.msra.mxu0 0.0
    %2217 = vmatprep.subr.mxu0 0.0
    %2218 = vmatpush1.xpose.msra.mxu0 %v2185
    %2219 = vmatprep.subr.mxu0 0.0
    %2220 = vmatpush2.xpose.msra.mxu0 0.0
    %2221 = vmatprep.subr.mxu0 0.0
    %2222 = vmatpush2.xpose.msra.mxu0 0.0
    %2223 = vmatprep.subr.mxu0 0.0
    %2224 = vmatpush2.xpose.msra.mxu0 0.0
    %2225 = vmatprep.subr.mxu0 0.0
    %2226 = vmatpush2.xpose.msra.mxu0 0.0
    %2227 = vmatprep.subr.mxu0 0.0
    %2228 = vmatpush2.xpose.msra.mxu0 0.0
    %2229 = vmatprep.subr.mxu0 0.0
    %2230 = vmatpush2.xpose.msra.mxu0 0.0
    %2231 = vmatprep.subr.mxu0 0.0
    %2232 = vmatpush2.xpose.msra.mxu0 0.0
    %2233 = vmatprep.subr.mxu0 0.0
    %2234 = vmatpush2.xpose.msra.mxu0 0.0
    %2235 = vmatprep.subr.mxu0 0.0
    %2236 = vmatpush2.xpose.msra.mxu0 0.0
    %2237 = vmatprep.subr.mxu0 0.0
    %2238 = vmatpush2.xpose.msra.mxu0 0.0
    %2239 = vmatprep.subr.mxu0 0.0
    %2240 = vmatpush2.xpose.msra.mxu0 0.0
    %2241 = vmatprep.subr.mxu0 0.0
    %2242 = vmatpush2.xpose.msra.mxu0 0.0
    %2243 = vmatprep.subr.mxu0 0.0
    %2244 = vmatpush2.xpose.msra.mxu0 0.0
    %2245 = vmatprep.subr.mxu0 0.0
    %2246 = vmatpush2.xpose.msra.mxu0 0.0
    %2247 = vmatprep.subr.mxu0 0.0
    %2248 = vmatpush2.xpose.msra.mxu0 0.0
    %2249 = vmatprep.subr.mxu0 0.0
    %2250 = vmatpush2.xpose.msra.mxu0 0.0
    %2251 = vmatprep.mubr.f32.mxu0 0.0
    %2252 = vmatmul.mubr.f32.gmra.mxu0 %v2183
    %v2253 = vpop.f32.mrf.mxu0
    %v2254 = vadd.f32 %v170, %v2253
    %v2255 = vpop.f32.mrf.mxu0
    %2256 = vdwg.mxu0
    %2257 = vrot.lane.b32.xlu0 %v2148, 96
    %v2258 = vpop.permute.xlu0 %2257
    %v2259 = vsel %vm331, %v2152, 0
    %v2261 = vsel %vm331, %v2258, 0
    %2263 = vmatprep.subr.mxu0 0.0
    %2264 = vmatpush1.xpose.msra.mxu0 0.0
    %2265 = vmatprep.subr.mxu0 0.0
    %2266 = vmatpush1.xpose.msra.mxu0 0.0
    %2267 = vmatprep.subr.mxu0 0.0
    %2268 = vmatpush1.xpose.msra.mxu0 0.0
    %2269 = vmatprep.subr.mxu0 0.0
    %2270 = vmatpush1.xpose.msra.mxu0 0.0
    %2271 = vmatprep.subr.mxu0 0.0
    %2272 = vmatpush1.xpose.msra.mxu0 0.0
    %2273 = vmatprep.subr.mxu0 0.0
    %2274 = vmatpush1.xpose.msra.mxu0 0.0
    %2275 = vmatprep.subr.mxu0 0.0
    %2276 = vmatpush1.xpose.msra.mxu0 0.0
    %2277 = vmatprep.subr.mxu0 0.0
    %2278 = vmatpush1.xpose.msra.mxu0 0.0
    %2279 = vmatprep.subr.mxu0 0.0
    %2280 = vmatpush1.xpose.msra.mxu0 0.0
    %2281 = vmatprep.subr.mxu0 0.0
    %2282 = vmatpush1.xpose.msra.mxu0 0.0
    %2283 = vmatprep.subr.mxu0 0.0
    %2284 = vmatpush1.xpose.msra.mxu0 0.0
    %2285 = vmatprep.subr.mxu0 0.0
    %2286 = vmatpush1.xpose.msra.mxu0 0.0
    %2287 = vmatprep.subr.mxu0 0.0
    %2288 = vmatpush1.xpose.msra.mxu0 0.0
    %2289 = vmatprep.subr.mxu0 0.0
    %2290 = vmatpush1.xpose.msra.mxu0 0.0
    %2291 = vmatprep.subr.mxu0 0.0
    %2292 = vmatpush1.xpose.msra.mxu0 0.0
    %2293 = vmatprep.subr.mxu0 0.0
    %2294 = vmatpush1.xpose.msra.mxu0 %v2261
    %2295 = vmatprep.subr.mxu0 0.0
    %2296 = vmatpush2.xpose.msra.mxu0 0.0
    %2297 = vmatprep.subr.mxu0 0.0
    %2298 = vmatpush2.xpose.msra.mxu0 0.0
    %2299 = vmatprep.subr.mxu0 0.0
    %2300 = vmatpush2.xpose.msra.mxu0 0.0
    %2301 = vmatprep.subr.mxu0 0.0
    %2302 = vmatpush2.xpose.msra.mxu0 0.0
    %2303 = vmatprep.subr.mxu0 0.0
    %2304 = vmatpush2.xpose.msra.mxu0 0.0
    %2305 = vmatprep.subr.mxu0 0.0
    %2306 = vmatpush2.xpose.msra.mxu0 0.0
    %2307 = vmatprep.subr.mxu0 0.0
    %2308 = vmatpush2.xpose.msra.mxu0 0.0
    %2309 = vmatprep.subr.mxu0 0.0
    %2310 = vmatpush2.xpose.msra.mxu0 0.0
    %2311 = vmatprep.subr.mxu0 0.0
    %2312 = vmatpush2.xpose.msra.mxu0 0.0
    %2313 = vmatprep.subr.mxu0 0.0
    %2314 = vmatpush2.xpose.msra.mxu0 0.0
    %2315 = vmatprep.subr.mxu0 0.0
    %2316 = vmatpush2.xpose.msra.mxu0 0.0
    %2317 = vmatprep.subr.mxu0 0.0
    %2318 = vmatpush2.xpose.msra.mxu0 0.0
    %2319 = vmatprep.subr.mxu0 0.0
    %2320 = vmatpush2.xpose.msra.mxu0 0.0
    %2321 = vmatprep.subr.mxu0 0.0
    %2322 = vmatpush2.xpose.msra.mxu0 0.0
    %2323 = vmatprep.subr.mxu0 0.0
    %2324 = vmatpush2.xpose.msra.mxu0 0.0
    %2325 = vmatprep.subr.mxu0 0.0
    %2326 = vmatpush2.xpose.msra.mxu0 0.0
    %2327 = vmatprep.mubr.f32.mxu0 0.0
    %2328 = vmatmul.mubr.f32.gmra.mxu0 %v2259
    %v2329 = vpop.f32.mrf.mxu0
    %v2330 = vadd.f32 %v174, %v2329
    %v2331 = vpop.f32.mrf.mxu0
    %2332 = vdwg.mxu0
    %2333 = vrot.lane.b32.xlu0 %v2170, 96
    %v2334 = vpop.permute.xlu0 %2333
    %v2335 = vsel %vm331, %v2156, 0
    %v2337 = vsel %vm331, %v2334, 0
    %2339 = vmatprep.subr.mxu0 0.0
    %2340 = vmatpush1.xpose.msra.mxu0 0.0
    %2341 = vmatprep.subr.mxu0 0.0
    %2342 = vmatpush1.xpose.msra.mxu0 0.0
    %2343 = vmatprep.subr.mxu0 0.0
    %2344 = vmatpush1.xpose.msra.mxu0 0.0
    %2345 = vmatprep.subr.mxu0 0.0
    %2346 = vmatpush1.xpose.msra.mxu0 0.0
    %2347 = vmatprep.subr.mxu0 0.0
    %2348 = vmatpush1.xpose.msra.mxu0 0.0
    %2349 = vmatprep.subr.mxu0 0.0
    %2350 = vmatpush1.xpose.msra.mxu0 0.0
    %2351 = vmatprep.subr.mxu0 0.0
    %2352 = vmatpush1.xpose.msra.mxu0 0.0
    %2353 = vmatprep.subr.mxu0 0.0
    %2354 = vmatpush1.xpose.msra.mxu0 0.0
    %2355 = vmatprep.subr.mxu0 0.0
    %2356 = vmatpush1.xpose.msra.mxu0 0.0
    %2357 = vmatprep.subr.mxu0 0.0
    %2358 = vmatpush1.xpose.msra.mxu0 0.0
    %2359 = vmatprep.subr.mxu0 0.0
    %2360 = vmatpush1.xpose.msra.mxu0 0.0
    %2361 = vmatprep.subr.mxu0 0.0
    %2362 = vmatpush1.xpose.msra.mxu0 0.0
    %2363 = vmatprep.subr.mxu0 0.0
    %2364 = vmatpush1.xpose.msra.mxu0 0.0
    %2365 = vmatprep.subr.mxu0 0.0
    %2366 = vmatpush1.xpose.msra.mxu0 0.0
    %2367 = vmatprep.subr.mxu0 0.0
    %2368 = vmatpush1.xpose.msra.mxu0 0.0
    %2369 = vmatprep.subr.mxu0 0.0
    %2370 = vmatpush1.xpose.msra.mxu0 %v2337
    %2371 = vmatprep.subr.mxu0 0.0
    %2372 = vmatpush2.xpose.msra.mxu0 0.0
    %2373 = vmatprep.subr.mxu0 0.0
    %2374 = vmatpush2.xpose.msra.mxu0 0.0
    %2375 = vmatprep.subr.mxu0 0.0
    %2376 = vmatpush2.xpose.msra.mxu0 0.0
    %2377 = vmatprep.subr.mxu0 0.0
    %2378 = vmatpush2.xpose.msra.mxu0 0.0
    %2379 = vmatprep.subr.mxu0 0.0
    %2380 = vmatpush2.xpose.msra.mxu0 0.0
    %2381 = vmatprep.subr.mxu0 0.0
    %2382 = vmatpush2.xpose.msra.mxu0 0.0
    %2383 = vmatprep.subr.mxu0 0.0
    %2384 = vmatpush2.xpose.msra.mxu0 0.0
    %2385 = vmatprep.subr.mxu0 0.0
    %2386 = vmatpush2.xpose.msra.mxu0 0.0
    %2387 = vmatprep.subr.mxu0 0.0
    %2388 = vmatpush2.xpose.msra.mxu0 0.0
    %2389 = vmatprep.subr.mxu0 0.0
    %2390 = vmatpush2.xpose.msra.mxu0 0.0
    %2391 = vmatprep.subr.mxu0 0.0
    %2392 = vmatpush2.xpose.msra.mxu0 0.0
    %2393 = vmatprep.subr.mxu0 0.0
    %2394 = vmatpush2.xpose.msra.mxu0 0.0
    %2395 = vmatprep.subr.mxu0 0.0
    %2396 = vmatpush2.xpose.msra.mxu0 0.0
    %2397 = vmatprep.subr.mxu0 0.0
    %2398 = vmatpush2.xpose.msra.mxu0 0.0
    %2399 = vmatprep.subr.mxu0 0.0
    %2400 = vmatpush2.xpose.msra.mxu0 0.0
    %2401 = vmatprep.subr.mxu0 0.0
    %2402 = vmatpush2.xpose.msra.mxu0 0.0
    %2403 = vmatprep.mubr.f32.mxu0 0.0
    %2404 = vmatmul.mubr.f32.gmra.mxu0 %v2335
    %v2405 = vpop.f32.mrf.mxu0
    %v2406 = vadd.f32 %v178, %v2405
    %v2407 = vpop.f32.mrf.mxu0
    %2408 = vdwg.mxu0
    %2409 = vrot.lane.b32.xlu0 %v2172, 96
    %v2410 = vpop.permute.xlu0 %2409
    %v2411 = vsel %vm331, %v2158, 0
    %v2413 = vsel %vm331, %v2410, 0
    %2415 = vmatprep.subr.mxu0 0.0
    %2416 = vmatpush1.xpose.msra.mxu0 0.0
    %2417 = vmatprep.subr.mxu0 0.0
    %2418 = vmatpush1.xpose.msra.mxu0 0.0
    %2419 = vmatprep.subr.mxu0 0.0
    %2420 = vmatpush1.xpose.msra.mxu0 0.0
    %2421 = vmatprep.subr.mxu0 0.0
    %2422 = vmatpush1.xpose.msra.mxu0 0.0
    %2423 = vmatprep.subr.mxu0 0.0
    %2424 = vmatpush1.xpose.msra.mxu0 0.0
    %2425 = vmatprep.subr.mxu0 0.0
    %2426 = vmatpush1.xpose.msra.mxu0 0.0
    %2427 = vmatprep.subr.mxu0 0.0
    %2428 = vmatpush1.xpose.msra.mxu0 0.0
    %2429 = vmatprep.subr.mxu0 0.0
    %2430 = vmatpush1.xpose.msra.mxu0 0.0
    %2431 = vmatprep.subr.mxu0 0.0
    %2432 = vmatpush1.xpose.msra.mxu0 0.0
    %2433 = vmatprep.subr.mxu0 0.0
    %2434 = vmatpush1.xpose.msra.mxu0 0.0
    %2435 = vmatprep.subr.mxu0 0.0
    %2436 = vmatpush1.xpose.msra.mxu0 0.0
    %2437 = vmatprep.subr.mxu0 0.0
    %2438 = vmatpush1.xpose.msra.mxu0 0.0
    %2439 = vmatprep.subr.mxu0 0.0
    %2440 = vmatpush1.xpose.msra.mxu0 0.0
    %2441 = vmatprep.subr.mxu0 0.0
    %2442 = vmatpush1.xpose.msra.mxu0 0.0
    %2443 = vmatprep.subr.mxu0 0.0
    %2444 = vmatpush1.xpose.msra.mxu0 0.0
    %2445 = vmatprep.subr.mxu0 0.0
    %2446 = vmatpush1.xpose.msra.mxu0 %v2413
    %2447 = vmatprep.subr.mxu0 0.0
    %2448 = vmatpush2.xpose.msra.mxu0 0.0
    %2449 = vmatprep.subr.mxu0 0.0
    %2450 = vmatpush2.xpose.msra.mxu0 0.0
    %2451 = vmatprep.subr.mxu0 0.0
    %2452 = vmatpush2.xpose.msra.mxu0 0.0
    %2453 = vmatprep.subr.mxu0 0.0
    %2454 = vmatpush2.xpose.msra.mxu0 0.0
    %2455 = vmatprep.subr.mxu0 0.0
    %2456 = vmatpush2.xpose.msra.mxu0 0.0
    %2457 = vmatprep.subr.mxu0 0.0
    %2458 = vmatpush2.xpose.msra.mxu0 0.0
    %2459 = vmatprep.subr.mxu0 0.0
    %2460 = vmatpush2.xpose.msra.mxu0 0.0
    %2461 = vmatprep.subr.mxu0 0.0
    %2462 = vmatpush2.xpose.msra.mxu0 0.0
    %2463 = vmatprep.subr.mxu0 0.0
    %2464 = vmatpush2.xpose.msra.mxu0 0.0
    %2465 = vmatprep.subr.mxu0 0.0
    %2466 = vmatpush2.xpose.msra.mxu0 0.0
    %2467 = vmatprep.subr.mxu0 0.0
    %2468 = vmatpush2.xpose.msra.mxu0 0.0
    %2469 = vmatprep.subr.mxu0 0.0
    %2470 = vmatpush2.xpose.msra.mxu0 0.0
    %2471 = vmatprep.subr.mxu0 0.0
    %2472 = vmatpush2.xpose.msra.mxu0 0.0
    %2473 = vmatprep.subr.mxu0 0.0
    %2474 = vmatpush2.xpose.msra.mxu0 0.0
    %2475 = vmatprep.subr.mxu0 0.0
    %2476 = vmatpush2.xpose.msra.mxu0 0.0
    %2477 = vmatprep.subr.mxu0 0.0
    %2478 = vmatpush2.xpose.msra.mxu0 0.0
    %2479 = vmatprep.mubr.f32.mxu0 0.0
    %2480 = vmatmul.mubr.f32.gmra.mxu0 %v2411
    %v2481 = vpop.f32.mrf.mxu0
    %v2482 = vadd.f32 %v182, %v2481
    %v2483 = vpop.f32.mrf.mxu0
    %2484 = vdwg.mxu0
    %2485 = vrot.lane.b32.xlu0 %v2174, 96
    %v2486 = vpop.permute.xlu0 %2485
    %v2487 = vsel %vm331, %v2160, 0
    %v2489 = vsel %vm331, %v2486, 0
    %2491 = vmatprep.subr.mxu0 0.0
    %2492 = vmatpush1.xpose.msra.mxu0 0.0
    %2493 = vmatprep.subr.mxu0 0.0
    %2494 = vmatpush1.xpose.msra.mxu0 0.0
    %2495 = vmatprep.subr.mxu0 0.0
    %2496 = vmatpush1.xpose.msra.mxu0 0.0
    %2497 = vmatprep.subr.mxu0 0.0
    %2498 = vmatpush1.xpose.msra.mxu0 0.0
    %2499 = vmatprep.subr.mxu0 0.0
    %2500 = vmatpush1.xpose.msra.mxu0 0.0
    %2501 = vmatprep.subr.mxu0 0.0
    %2502 = vmatpush1.xpose.msra.mxu0 0.0
    %2503 = vmatprep.subr.mxu0 0.0
    %2504 = vmatpush1.xpose.msra.mxu0 0.0
    %2505 = vmatprep.subr.mxu0 0.0
    %2506 = vmatpush1.xpose.msra.mxu0 0.0
    %2507 = vmatprep.subr.mxu0 0.0
    %2508 = vmatpush1.xpose.msra.mxu0 0.0
    %2509 = vmatprep.subr.mxu0 0.0
    %2510 = vmatpush1.xpose.msra.mxu0 0.0
    %2511 = vmatprep.subr.mxu0 0.0
    %2512 = vmatpush1.xpose.msra.mxu0 0.0
    %2513 = vmatprep.subr.mxu0 0.0
    %2514 = vmatpush1.xpose.msra.mxu0 0.0
    %2515 = vmatprep.subr.mxu0 0.0
    %2516 = vmatpush1.xpose.msra.mxu0 0.0
    %2517 = vmatprep.subr.mxu0 0.0
    %2518 = vmatpush1.xpose.msra.mxu0 0.0
    %2519 = vmatprep.subr.mxu0 0.0
    %2520 = vmatpush1.xpose.msra.mxu0 0.0
    %2521 = vmatprep.subr.mxu0 0.0
    %2522 = vmatpush1.xpose.msra.mxu0 %v2489
    %2523 = vmatprep.subr.mxu0 0.0
    %2524 = vmatpush2.xpose.msra.mxu0 0.0
    %2525 = vmatprep.subr.mxu0 0.0
    %2526 = vmatpush2.xpose.msra.mxu0 0.0
    %2527 = vmatprep.subr.mxu0 0.0
    %2528 = vmatpush2.xpose.msra.mxu0 0.0
    %2529 = vmatprep.subr.mxu0 0.0
    %2530 = vmatpush2.xpose.msra.mxu0 0.0
    %2531 = vmatprep.subr.mxu0 0.0
    %2532 = vmatpush2.xpose.msra.mxu0 0.0
    %2533 = vmatprep.subr.mxu0 0.0
    %2534 = vmatpush2.xpose.msra.mxu0 0.0
    %2535 = vmatprep.subr.mxu0 0.0
    %2536 = vmatpush2.xpose.msra.mxu0 0.0
    %2537 = vmatprep.subr.mxu0 0.0
    %2538 = vmatpush2.xpose.msra.mxu0 0.0
    %2539 = vmatprep.subr.mxu0 0.0
    %2540 = vmatpush2.xpose.msra.mxu0 0.0
    %2541 = vmatprep.subr.mxu0 0.0
    %2542 = vmatpush2.xpose.msra.mxu0 0.0
    %2543 = vmatprep.subr.mxu0 0.0
    %2544 = vmatpush2.xpose.msra.mxu0 0.0
    %2545 = vmatprep.subr.mxu0 0.0
    %2546 = vmatpush2.xpose.msra.mxu0 0.0
    %2547 = vmatprep.subr.mxu0 0.0
    %2548 = vmatpush2.xpose.msra.mxu0 0.0
    %2549 = vmatprep.subr.mxu0 0.0
    %2550 = vmatpush2.xpose.msra.mxu0 0.0
    %2551 = vmatprep.subr.mxu0 0.0
    %2552 = vmatpush2.xpose.msra.mxu0 0.0
    %2553 = vmatprep.subr.mxu0 0.0
    %2554 = vmatpush2.xpose.msra.mxu0 0.0
    %2555 = vmatprep.mubr.f32.mxu0 0.0
    %2556 = vmatmul.mubr.f32.gmra.mxu0 %v2487
    %v2557 = vpop.f32.mrf.mxu0
    %v2558 = vadd.f32 %v186, %v2557
    %v2559 = vpop.f32.mrf.mxu0
    %2560 = vdwg.mxu0
    %2561 = vrot.lane.b32.xlu0 %v2176, 96
    %v2562 = vpop.permute.xlu0 %2561
    %v2563 = vsel %vm331, %v2162, 0
    %v2565 = vsel %vm331, %v2562, 0
    %2567 = vmatprep.subr.mxu0 0.0
    %2568 = vmatpush1.xpose.msra.mxu0 0.0
    %2569 = vmatprep.subr.mxu0 0.0
    %2570 = vmatpush1.xpose.msra.mxu0 0.0
    %2571 = vmatprep.subr.mxu0 0.0
    %2572 = vmatpush1.xpose.msra.mxu0 0.0
    %2573 = vmatprep.subr.mxu0 0.0
    %2574 = vmatpush1.xpose.msra.mxu0 0.0
    %2575 = vmatprep.subr.mxu0 0.0
    %2576 = vmatpush1.xpose.msra.mxu0 0.0
    %2577 = vmatprep.subr.mxu0 0.0
    %2578 = vmatpush1.xpose.msra.mxu0 0.0
    %2579 = vmatprep.subr.mxu0 0.0
    %2580 = vmatpush1.xpose.msra.mxu0 0.0
    %2581 = vmatprep.subr.mxu0 0.0
    %2582 = vmatpush1.xpose.msra.mxu0 0.0
    %2583 = vmatprep.subr.mxu0 0.0
    %2584 = vmatpush1.xpose.msra.mxu0 0.0
    %2585 = vmatprep.subr.mxu0 0.0
    %2586 = vmatpush1.xpose.msra.mxu0 0.0
    %2587 = vmatprep.subr.mxu0 0.0
    %2588 = vmatpush1.xpose.msra.mxu0 0.0
    %2589 = vmatprep.subr.mxu0 0.0
    %2590 = vmatpush1.xpose.msra.mxu0 0.0
    %2591 = vmatprep.subr.mxu0 0.0
    %2592 = vmatpush1.xpose.msra.mxu0 0.0
    %2593 = vmatprep.subr.mxu0 0.0
    %2594 = vmatpush1.xpose.msra.mxu0 0.0
    %2595 = vmatprep.subr.mxu0 0.0
    %2596 = vmatpush1.xpose.msra.mxu0 0.0
    %2597 = vmatprep.subr.mxu0 0.0
    %2598 = vmatpush1.xpose.msra.mxu0 %v2565
    %2599 = vmatprep.subr.mxu0 0.0
    %2600 = vmatpush2.xpose.msra.mxu0 0.0
    %2601 = vmatprep.subr.mxu0 0.0
    %2602 = vmatpush2.xpose.msra.mxu0 0.0
    %2603 = vmatprep.subr.mxu0 0.0
    %2604 = vmatpush2.xpose.msra.mxu0 0.0
    %2605 = vmatprep.subr.mxu0 0.0
    %2606 = vmatpush2.xpose.msra.mxu0 0.0
    %2607 = vmatprep.subr.mxu0 0.0
    %2608 = vmatpush2.xpose.msra.mxu0 0.0
    %2609 = vmatprep.subr.mxu0 0.0
    %2610 = vmatpush2.xpose.msra.mxu0 0.0
    %2611 = vmatprep.subr.mxu0 0.0
    %2612 = vmatpush2.xpose.msra.mxu0 0.0
    %2613 = vmatprep.subr.mxu0 0.0
    %2614 = vmatpush2.xpose.msra.mxu0 0.0
    %2615 = vmatprep.subr.mxu0 0.0
    %2616 = vmatpush2.xpose.msra.mxu0 0.0
    %2617 = vmatprep.subr.mxu0 0.0
    %2618 = vmatpush2.xpose.msra.mxu0 0.0
    %2619 = vmatprep.subr.mxu0 0.0
    %2620 = vmatpush2.xpose.msra.mxu0 0.0
    %2621 = vmatprep.subr.mxu0 0.0
    %2622 = vmatpush2.xpose.msra.mxu0 0.0
    %2623 = vmatprep.subr.mxu0 0.0
    %2624 = vmatpush2.xpose.msra.mxu0 0.0
    %2625 = vmatprep.subr.mxu0 0.0
    %2626 = vmatpush2.xpose.msra.mxu0 0.0
    %2627 = vmatprep.subr.mxu0 0.0
    %2628 = vmatpush2.xpose.msra.mxu0 0.0
    %2629 = vmatprep.subr.mxu0 0.0
    %2630 = vmatpush2.xpose.msra.mxu0 0.0
    %2631 = vmatprep.mubr.f32.mxu0 0.0
    %2632 = vmatmul.mubr.f32.gmra.mxu0 %v2563
    %v2633 = vpop.f32.mrf.mxu0
    %v2634 = vadd.f32 %v190, %v2633
    %v2635 = vpop.f32.mrf.mxu0
    %2636 = vdwg.mxu0
    %2637 = vrot.lane.b32.xlu0 %v2178, 96
    %v2638 = vpop.permute.xlu0 %2637
    %v2639 = vsel %vm331, %v2164, 0
    %v2641 = vsel %vm331, %v2638, 0
    %2643 = vmatprep.subr.mxu0 0.0
    %2644 = vmatpush1.xpose.msra.mxu0 0.0
    %2645 = vmatprep.subr.mxu0 0.0
    %2646 = vmatpush1.xpose.msra.mxu0 0.0
    %2647 = vmatprep.subr.mxu0 0.0
    %2648 = vmatpush1.xpose.msra.mxu0 0.0
    %2649 = vmatprep.subr.mxu0 0.0
    %2650 = vmatpush1.xpose.msra.mxu0 0.0
    %2651 = vmatprep.subr.mxu0 0.0
    %2652 = vmatpush1.xpose.msra.mxu0 0.0
    %2653 = vmatprep.subr.mxu0 0.0
    %2654 = vmatpush1.xpose.msra.mxu0 0.0
    %2655 = vmatprep.subr.mxu0 0.0
    %2656 = vmatpush1.xpose.msra.mxu0 0.0
    %2657 = vmatprep.subr.mxu0 0.0
    %2658 = vmatpush1.xpose.msra.mxu0 0.0
    %2659 = vmatprep.subr.mxu0 0.0
    %2660 = vmatpush1.xpose.msra.mxu0 0.0
    %2661 = vmatprep.subr.mxu0 0.0
    %2662 = vmatpush1.xpose.msra.mxu0 0.0
    %2663 = vmatprep.subr.mxu0 0.0
    %2664 = vmatpush1.xpose.msra.mxu0 0.0
    %2665 = vmatprep.subr.mxu0 0.0
    %2666 = vmatpush1.xpose.msra.mxu0 0.0
    %2667 = vmatprep.subr.mxu0 0.0
    %2668 = vmatpush1.xpose.msra.mxu0 0.0
    %2669 = vmatprep.subr.mxu0 0.0
    %2670 = vmatpush1.xpose.msra.mxu0 0.0
    %2671 = vmatprep.subr.mxu0 0.0
    %2672 = vmatpush1.xpose.msra.mxu0 0.0
    %2673 = vmatprep.subr.mxu0 0.0
    %2674 = vmatpush1.xpose.msra.mxu0 %v2641
    %2675 = vmatprep.subr.mxu0 0.0
    %2676 = vmatpush2.xpose.msra.mxu0 0.0
    %2677 = vmatprep.subr.mxu0 0.0
    %2678 = vmatpush2.xpose.msra.mxu0 0.0
    %2679 = vmatprep.subr.mxu0 0.0
    %2680 = vmatpush2.xpose.msra.mxu0 0.0
    %2681 = vmatprep.subr.mxu0 0.0
    %2682 = vmatpush2.xpose.msra.mxu0 0.0
    %2683 = vmatprep.subr.mxu0 0.0
    %2684 = vmatpush2.xpose.msra.mxu0 0.0
    %2685 = vmatprep.subr.mxu0 0.0
    %2686 = vmatpush2.xpose.msra.mxu0 0.0
    %2687 = vmatprep.subr.mxu0 0.0
    %2688 = vmatpush2.xpose.msra.mxu0 0.0
    %2689 = vmatprep.subr.mxu0 0.0
    %2690 = vmatpush2.xpose.msra.mxu0 0.0
    %2691 = vmatprep.subr.mxu0 0.0
    %2692 = vmatpush2.xpose.msra.mxu0 0.0
    %2693 = vmatprep.subr.mxu0 0.0
    %2694 = vmatpush2.xpose.msra.mxu0 0.0
    %2695 = vmatprep.subr.mxu0 0.0
    %2696 = vmatpush2.xpose.msra.mxu0 0.0
    %2697 = vmatprep.subr.mxu0 0.0
    %2698 = vmatpush2.xpose.msra.mxu0 0.0
    %2699 = vmatprep.subr.mxu0 0.0
    %2700 = vmatpush2.xpose.msra.mxu0 0.0
    %2701 = vmatprep.subr.mxu0 0.0
    %2702 = vmatpush2.xpose.msra.mxu0 0.0
    %2703 = vmatprep.subr.mxu0 0.0
    %2704 = vmatpush2.xpose.msra.mxu0 0.0
    %2705 = vmatprep.subr.mxu0 0.0
    %2706 = vmatpush2.xpose.msra.mxu0 0.0
    %2707 = vmatprep.mubr.f32.mxu0 0.0
    %2708 = vmatmul.mubr.f32.gmra.mxu0 %v2639
    %v2709 = vpop.f32.mrf.mxu0
    %v2710 = vadd.f32 %v194, %v2709
    %v2711 = vpop.f32.mrf.mxu0
    %2712 = vdwg.mxu0
    %2713 = vrot.lane.b32.xlu0 %v2180, 96
    %v2714 = vpop.permute.xlu0 %2713
    %v2715 = vsel %vm331, %v2166, 0
    %v2717 = vsel %vm331, %v2714, 0
    %2719 = vmatprep.subr.mxu0 0.0
    %2720 = vmatpush1.xpose.msra.mxu0 0.0
    %2721 = vmatprep.subr.mxu0 0.0
    %2722 = vmatpush1.xpose.msra.mxu0 0.0
    %2723 = vmatprep.subr.mxu0 0.0
    %2724 = vmatpush1.xpose.msra.mxu0 0.0
    %2725 = vmatprep.subr.mxu0 0.0
    %2726 = vmatpush1.xpose.msra.mxu0 0.0
    %2727 = vmatprep.subr.mxu0 0.0
    %2728 = vmatpush1.xpose.msra.mxu0 0.0
    %2729 = vmatprep.subr.mxu0 0.0
    %2730 = vmatpush1.xpose.msra.mxu0 0.0
    %2731 = vmatprep.subr.mxu0 0.0
    %2732 = vmatpush1.xpose.msra.mxu0 0.0
    %2733 = vmatprep.subr.mxu0 0.0
    %2734 = vmatpush1.xpose.msra.mxu0 0.0
    %2735 = vmatprep.subr.mxu0 0.0
    %2736 = vmatpush1.xpose.msra.mxu0 0.0
    %2737 = vmatprep.subr.mxu0 0.0
    %2738 = vmatpush1.xpose.msra.mxu0 0.0
    %2739 = vmatprep.subr.mxu0 0.0
    %2740 = vmatpush1.xpose.msra.mxu0 0.0
    %2741 = vmatprep.subr.mxu0 0.0
    %2742 = vmatpush1.xpose.msra.mxu0 0.0
    %2743 = vmatprep.subr.mxu0 0.0
    %2744 = vmatpush1.xpose.msra.mxu0 0.0
    %2745 = vmatprep.subr.mxu0 0.0
    %2746 = vmatpush1.xpose.msra.mxu0 0.0
    %2747 = vmatprep.subr.mxu0 0.0
    %2748 = vmatpush1.xpose.msra.mxu0 0.0
    %2749 = vmatprep.subr.mxu0 0.0
    %2750 = vmatpush1.xpose.msra.mxu0 %v2717
    %2751 = vmatprep.subr.mxu0 0.0
    %2752 = vmatpush2.xpose.msra.mxu0 0.0
    %2753 = vmatprep.subr.mxu0 0.0
    %2754 = vmatpush2.xpose.msra.mxu0 0.0
    %2755 = vmatprep.subr.mxu0 0.0
    %2756 = vmatpush2.xpose.msra.mxu0 0.0
    %2757 = vmatprep.subr.mxu0 0.0
    %2758 = vmatpush2.xpose.msra.mxu0 0.0
    %2759 = vmatprep.subr.mxu0 0.0
    %2760 = vmatpush2.xpose.msra.mxu0 0.0
    %2761 = vmatprep.subr.mxu0 0.0
    %2762 = vmatpush2.xpose.msra.mxu0 0.0
    %2763 = vmatprep.subr.mxu0 0.0
    %2764 = vmatpush2.xpose.msra.mxu0 0.0
    %2765 = vmatprep.subr.mxu0 0.0
    %2766 = vmatpush2.xpose.msra.mxu0 0.0
    %2767 = vmatprep.subr.mxu0 0.0
    %2768 = vmatpush2.xpose.msra.mxu0 0.0
    %2769 = vmatprep.subr.mxu0 0.0
    %2770 = vmatpush2.xpose.msra.mxu0 0.0
    %2771 = vmatprep.subr.mxu0 0.0
    %2772 = vmatpush2.xpose.msra.mxu0 0.0
    %2773 = vmatprep.subr.mxu0 0.0
    %2774 = vmatpush2.xpose.msra.mxu0 0.0
    %2775 = vmatprep.subr.mxu0 0.0
    %2776 = vmatpush2.xpose.msra.mxu0 0.0
    %2777 = vmatprep.subr.mxu0 0.0
    %2778 = vmatpush2.xpose.msra.mxu0 0.0
    %2779 = vmatprep.subr.mxu0 0.0
    %2780 = vmatpush2.xpose.msra.mxu0 0.0
    %2781 = vmatprep.subr.mxu0 0.0
    %2782 = vmatpush2.xpose.msra.mxu0 0.0
    %2783 = vmatprep.mubr.f32.mxu0 0.0
    %2784 = vmatmul.mubr.f32.gmra.mxu0 %v2715
    %v2785 = vpop.f32.mrf.mxu0
    %v2786 = vadd.f32 %v198, %v2785
    %v2787 = vpop.f32.mrf.mxu0
    %2788 = vdwg.mxu0
    %v2789 = vsel %vm331, %v2254, -inf
    %2790 = vmax.xlane.f32.xlu0 %v2789
    %v2791 = vpop.xlane.xlu0 %2790
    %v2792 = vsel %vm331, %v2330, -inf
    %2793 = vmax.xlane.f32.xlu0 %v2792
    %v2794 = vpop.xlane.xlu0 %2793
    %v2795 = vsel %vm331, %v2406, -inf
    %2796 = vmax.xlane.f32.xlu0 %v2795
    %v2797 = vpop.xlane.xlu0 %2796
    %v2798 = vsel %vm331, %v2482, -inf
    %2799 = vmax.xlane.f32.xlu0 %v2798
    %v2800 = vpop.xlane.xlu0 %2799
    %v2801 = vsel %vm331, %v2558, -inf
    %2802 = vmax.xlane.f32.xlu0 %v2801
    %v2803 = vpop.xlane.xlu0 %2802
    %v2804 = vsel %vm331, %v2634, -inf
    %2805 = vmax.xlane.f32.xlu0 %v2804
    %v2806 = vpop.xlane.xlu0 %2805
    %v2807 = vsel %vm331, %v2710, -inf
    %2808 = vmax.xlane.f32.xlu0 %v2807
    %v2809 = vpop.xlane.xlu0 %2808
    %v2810 = vsel %vm331, %v2786, -inf
    %2811 = vmax.xlane.f32.xlu0 %v2810
    %v2812 = vpop.xlane.xlu0 %2811
    %v2813 = vsub.f32 %v2254, %v2791
    %v2814 = vsub.f32 %v2330, %v2794
    %v2815 = vsub.f32 %v2406, %v2797
    %v2816 = vsub.f32 %v2482, %v2800
    %v2817 = vsub.f32 %v2558, %v2803
    %v2818 = vsub.f32 %v2634, %v2806
    %v2819 = vsub.f32 %v2710, %v2809
    %v2820 = vsub.f32 %v2786, %v2812
    %v2821 = vmul.f32 %v2813, 1.442695
    %v2822 = vpow.pop %v2821
    %v2823 = vmul.f32 %v2814, 1.442695
    %v2824 = vpow.pop %v2823
    %v2825 = vmul.f32 %v2815, 1.442695
    %v2826 = vpow.pop %v2825
    %v2827 = vmul.f32 %v2816, 1.442695
    %v2828 = vpow.pop %v2827
    %v2829 = vmul.f32 %v2817, 1.442695
    %v2830 = vpow.pop %v2829
    %v2831 = vmul.f32 %v2818, 1.442695
    %v2832 = vpow.pop %v2831
    %v2833 = vmul.f32 %v2819, 1.442695
    %v2834 = vpow.pop %v2833
    %v2835 = vmul.f32 %v2820, 1.442695
    %v2836 = vpow.pop %v2835
    %v2837 = vsel %vm331, %v2822, 0.0
    %2838 = vadd.xlane.f32.xlu0 %v2837
    %v2839 = vpop.xlane.xlu0 %2838
    %v2840 = vsel %vm331, %v2824, 0.0
    %2841 = vadd.xlane.f32.xlu0 %v2840
    %v2842 = vpop.xlane.xlu0 %2841
    %v2843 = vsel %vm331, %v2826, 0.0
    %2844 = vadd.xlane.f32.xlu0 %v2843
    %v2845 = vpop.xlane.xlu0 %2844
    %v2846 = vsel %vm331, %v2828, 0.0
    %2847 = vadd.xlane.f32.xlu0 %v2846
    %v2848 = vpop.xlane.xlu0 %2847
    %v2849 = vsel %vm331, %v2830, 0.0
    %2850 = vadd.xlane.f32.xlu0 %v2849
    %v2851 = vpop.xlane.xlu0 %2850
    %v2852 = vsel %vm331, %v2832, 0.0
    %2853 = vadd.xlane.f32.xlu0 %v2852
    %v2854 = vpop.xlane.xlu0 %2853
    %v2855 = vsel %vm331, %v2834, 0.0
    %2856 = vadd.xlane.f32.xlu0 %v2855
    %v2857 = vpop.xlane.xlu0 %2856
    %v2858 = vsel %vm331, %v2836, 0.0
    %2859 = vadd.xlane.f32.xlu0 %v2858
    %v2860 = vpop.xlane.xlu0 %2859
    %v2861 = vrcp.pop %v2839
    %v2862 = vrcp.pop %v2842
    %v2863 = vrcp.pop %v2845
    %v2864 = vrcp.pop %v2848
    %v2865 = vrcp.pop %v2851
    %v2866 = vrcp.pop %v2854
    %v2867 = vrcp.pop %v2857
    %v2868 = vrcp.pop %v2860
    %v2869 = vmul.f32 %v2822, %v2861
    %v2870 = vmul.f32 %v2824, %v2862
    %v2871 = vmul.f32 %v2826, %v2863
    %v2872 = vmul.f32 %v2828, %v2864
    %v2873 = vmul.f32 %v2830, %v2865
    %v2874 = vmul.f32 %v2832, %v2866
    %v2875 = vmul.f32 %v2834, %v2867
    %v2876 = vmul.f32 %v2836, %v2868
    %2877 = vrot.lane.b32.xlu0 %v2143, 64
    %v2878 = vpop.permute.xlu0 %2877
    %v2881 = vsel %vm331, %v2869, 0
    %2883 = vmatprep.subr.mxu0 0.0
    %2884 = vmatpush1.msra.mxu0 0.0
    %2885 = vmatprep.subr.mxu0 0.0
    %2886 = vmatpush1.msra.mxu0 0.0
    %2887 = vmatprep.subr.mxu0 0.0
    %2888 = vmatpush1.msra.mxu0 0.0
    %2889 = vmatprep.subr.mxu0 0.0
    %2890 = vmatpush1.msra.mxu0 0.0
    %2891 = vmatprep.subr.mxu0 0.0
    %2892 = vmatpush1.msra.mxu0 0.0
    %2893 = vmatprep.subr.mxu0 0.0
    %2894 = vmatpush1.msra.mxu0 0.0
    %2895 = vmatprep.subr.mxu0 0.0
    %2896 = vmatpush1.msra.mxu0 0.0
    %2897 = vmatprep.subr.mxu0 0.0
    %2898 = vmatpush1.msra.mxu0 0.0
    %2899 = vmatprep.subr.mxu0 0.0
    %2900 = vmatpush1.msra.mxu0 0.0
    %2901 = vmatprep.subr.mxu0 0.0
    %2902 = vmatpush1.msra.mxu0 0.0
    %2903 = vmatprep.subr.mxu0 0.0
    %2904 = vmatpush1.msra.mxu0 0.0
    %2905 = vmatprep.subr.mxu0 0.0
    %2906 = vmatpush1.msra.mxu0 0.0
    %2907 = vmatprep.subr.mxu0 0.0
    %2908 = vmatpush1.msra.mxu0 0.0
    %2909 = vmatprep.subr.mxu0 0.0
    %2910 = vmatpush1.msra.mxu0 0.0
    %2911 = vmatprep.subr.mxu0 0.0
    %2912 = vmatpush1.msra.mxu0 0.0
    %2913 = vmatprep.subr.mxu0 0.0
    %2914 = vmatpush1.msra.mxu0 %v2878
    %2915 = vmatprep.subr.mxu0 0.0
    %2916 = vmatpush2.msra.mxu0 0.0
    %2917 = vmatprep.subr.mxu0 0.0
    %2918 = vmatpush2.msra.mxu0 0.0
    %2919 = vmatprep.subr.mxu0 0.0
    %2920 = vmatpush2.msra.mxu0 0.0
    %2921 = vmatprep.subr.mxu0 0.0
    %2922 = vmatpush2.msra.mxu0 0.0
    %2923 = vmatprep.subr.mxu0 0.0
    %2924 = vmatpush2.msra.mxu0 0.0
    %2925 = vmatprep.subr.mxu0 0.0
    %2926 = vmatpush2.msra.mxu0 0.0
    %2927 = vmatprep.subr.mxu0 0.0
    %2928 = vmatpush2.msra.mxu0 0.0
    %2929 = vmatprep.subr.mxu0 0.0
    %2930 = vmatpush2.msra.mxu0 0.0
    %2931 = vmatprep.subr.mxu0 0.0
    %2932 = vmatpush2.msra.mxu0 0.0
    %2933 = vmatprep.subr.mxu0 0.0
    %2934 = vmatpush2.msra.mxu0 0.0
    %2935 = vmatprep.subr.mxu0 0.0
    %2936 = vmatpush2.msra.mxu0 0.0
    %2937 = vmatprep.subr.mxu0 0.0
    %2938 = vmatpush2.msra.mxu0 0.0
    %2939 = vmatprep.subr.mxu0 0.0
    %2940 = vmatpush2.msra.mxu0 0.0
    %2941 = vmatprep.subr.mxu0 0.0
    %2942 = vmatpush2.msra.mxu0 0.0
    %2943 = vmatprep.subr.mxu0 0.0
    %2944 = vmatpush2.msra.mxu0 0.0
    %2945 = vmatprep.subr.mxu0 0.0
    %2946 = vmatpush2.msra.mxu0 0.0
    %2947 = vmatprep.mubr.f32.mxu0 0.0
    %2948 = vmatmul.mubr.f32.gmra.mxu0 %v2881
    %v2949 = vpop.f32.mrf.mxu0
    %v2950 = vadd.f32 0.0, %v2949
    %v2951 = vpop.f32.mrf.mxu0
    %2952 = vdwg.mxu0
    %2953 = vrot.lane.b32.xlu0 %v2148, 64
    %v2954 = vpop.permute.xlu0 %2953
    %v2957 = vsel %vm331, %v2870, 0
    %2959 = vmatprep.subr.mxu0 0.0
    %2960 = vmatpush1.msra.mxu0 0.0
    %2961 = vmatprep.subr.mxu0 0.0
    %2962 = vmatpush1.msra.mxu0 0.0
    %2963 = vmatprep.subr.mxu0 0.0
    %2964 = vmatpush1.msra.mxu0 0.0
    %2965 = vmatprep.subr.mxu0 0.0
    %2966 = vmatpush1.msra.mxu0 0.0
    %2967 = vmatprep.subr.mxu0 0.0
    %2968 = vmatpush1.msra.mxu0 0.0
    %2969 = vmatprep.subr.mxu0 0.0
    %2970 = vmatpush1.msra.mxu0 0.0
    %2971 = vmatprep.subr.mxu0 0.0
    %2972 = vmatpush1.msra.mxu0 0.0
    %2973 = vmatprep.subr.mxu0 0.0
    %2974 = vmatpush1.msra.mxu0 0.0
    %2975 = vmatprep.subr.mxu0 0.0
    %2976 = vmatpush1.msra.mxu0 0.0
    %2977 = vmatprep.subr.mxu0 0.0
    %2978 = vmatpush1.msra.mxu0 0.0
    %2979 = vmatprep.subr.mxu0 0.0
    %2980 = vmatpush1.msra.mxu0 0.0
    %2981 = vmatprep.subr.mxu0 0.0
    %2982 = vmatpush1.msra.mxu0 0.0
    %2983 = vmatprep.subr.mxu0 0.0
    %2984 = vmatpush1.msra.mxu0 0.0
    %2985 = vmatprep.subr.mxu0 0.0
    %2986 = vmatpush1.msra.mxu0 0.0
    %2987 = vmatprep.subr.mxu0 0.0
    %2988 = vmatpush1.msra.mxu0 0.0
    %2989 = vmatprep.subr.mxu0 0.0
    %2990 = vmatpush1.msra.mxu0 %v2954
    %2991 = vmatprep.subr.mxu0 0.0
    %2992 = vmatpush2.msra.mxu0 0.0
    %2993 = vmatprep.subr.mxu0 0.0
    %2994 = vmatpush2.msra.mxu0 0.0
    %2995 = vmatprep.subr.mxu0 0.0
    %2996 = vmatpush2.msra.mxu0 0.0
    %2997 = vmatprep.subr.mxu0 0.0
    %2998 = vmatpush2.msra.mxu0 0.0
    %2999 = vmatprep.subr.mxu0 0.0
    %3000 = vmatpush2.msra.mxu0 0.0
    %3001 = vmatprep.subr.mxu0 0.0
    %3002 = vmatpush2.msra.mxu0 0.0
    %3003 = vmatprep.subr.mxu0 0.0
    %3004 = vmatpush2.msra.mxu0 0.0
    %3005 = vmatprep.subr.mxu0 0.0
    %3006 = vmatpush2.msra.mxu0 0.0
    %3007 = vmatprep.subr.mxu0 0.0
    %3008 = vmatpush2.msra.mxu0 0.0
    %3009 = vmatprep.subr.mxu0 0.0
    %3010 = vmatpush2.msra.mxu0 0.0
    %3011 = vmatprep.subr.mxu0 0.0
    %3012 = vmatpush2.msra.mxu0 0.0
    %3013 = vmatprep.subr.mxu0 0.0
    %3014 = vmatpush2.msra.mxu0 0.0
    %3015 = vmatprep.subr.mxu0 0.0
    %3016 = vmatpush2.msra.mxu0 0.0
    %3017 = vmatprep.subr.mxu0 0.0
    %3018 = vmatpush2.msra.mxu0 0.0
    %3019 = vmatprep.subr.mxu0 0.0
    %3020 = vmatpush2.msra.mxu0 0.0
    %3021 = vmatprep.subr.mxu0 0.0
    %3022 = vmatpush2.msra.mxu0 0.0
    %3023 = vmatprep.mubr.f32.mxu0 0.0
    %3024 = vmatmul.mubr.f32.gmra.mxu0 %v2957
    %v3025 = vpop.f32.mrf.mxu0
    %v3026 = vadd.f32 0.0, %v3025
    %v3027 = vpop.f32.mrf.mxu0
    %3028 = vdwg.mxu0
    %3029 = vrot.lane.b32.xlu0 %v2170, 64
    %v3030 = vpop.permute.xlu0 %3029
    %v3033 = vsel %vm331, %v2871, 0
    %3035 = vmatprep.subr.mxu0 0.0
    %3036 = vmatpush1.msra.mxu0 0.0
    %3037 = vmatprep.subr.mxu0 0.0
    %3038 = vmatpush1.msra.mxu0 0.0
    %3039 = vmatprep.subr.mxu0 0.0
    %3040 = vmatpush1.msra.mxu0 0.0
    %3041 = vmatprep.subr.mxu0 0.0
    %3042 = vmatpush1.msra.mxu0 0.0
    %3043 = vmatprep.subr.mxu0 0.0
    %3044 = vmatpush1.msra.mxu0 0.0
    %3045 = vmatprep.subr.mxu0 0.0
    %3046 = vmatpush1.msra.mxu0 0.0
    %3047 = vmatprep.subr.mxu0 0.0
    %3048 = vmatpush1.msra.mxu0 0.0
    %3049 = vmatprep.subr.mxu0 0.0
    %3050 = vmatpush1.msra.mxu0 0.0
    %3051 = vmatprep.subr.mxu0 0.0
    %3052 = vmatpush1.msra.mxu0 0.0
    %3053 = vmatprep.subr.mxu0 0.0
    %3054 = vmatpush1.msra.mxu0 0.0
    %3055 = vmatprep.subr.mxu0 0.0
    %3056 = vmatpush1.msra.mxu0 0.0
    %3057 = vmatprep.subr.mxu0 0.0
    %3058 = vmatpush1.msra.mxu0 0.0
    %3059 = vmatprep.subr.mxu0 0.0
    %3060 = vmatpush1.msra.mxu0 0.0
    %3061 = vmatprep.subr.mxu0 0.0
    %3062 = vmatpush1.msra.mxu0 0.0
    %3063 = vmatprep.subr.mxu0 0.0
    %3064 = vmatpush1.msra.mxu0 0.0
    %3065 = vmatprep.subr.mxu0 0.0
    %3066 = vmatpush1.msra.mxu0 %v3030
    %3067 = vmatprep.subr.mxu0 0.0
    %3068 = vmatpush2.msra.mxu0 0.0
    %3069 = vmatprep.subr.mxu0 0.0
    %3070 = vmatpush2.msra.mxu0 0.0
    %3071 = vmatprep.subr.mxu0 0.0
    %3072 = vmatpush2.msra.mxu0 0.0
    %3073 = vmatprep.subr.mxu0 0.0
    %3074 = vmatpush2.msra.mxu0 0.0
    %3075 = vmatprep.subr.mxu0 0.0
    %3076 = vmatpush2.msra.mxu0 0.0
    %3077 = vmatprep.subr.mxu0 0.0
    %3078 = vmatpush2.msra.mxu0 0.0
    %3079 = vmatprep.subr.mxu0 0.0
    %3080 = vmatpush2.msra.mxu0 0.0
    %3081 = vmatprep.subr.mxu0 0.0
    %3082 = vmatpush2.msra.mxu0 0.0
    %3083 = vmatprep.subr.mxu0 0.0
    %3084 = vmatpush2.msra.mxu0 0.0
    %3085 = vmatprep.subr.mxu0 0.0
    %3086 = vmatpush2.msra.mxu0 0.0
    %3087 = vmatprep.subr.mxu0 0.0
    %3088 = vmatpush2.msra.mxu0 0.0
    %3089 = vmatprep.subr.mxu0 0.0
    %3090 = vmatpush2.msra.mxu0 0.0
    %3091 = vmatprep.subr.mxu0 0.0
    %3092 = vmatpush2.msra.mxu0 0.0
    %3093 = vmatprep.subr.mxu0 0.0
    %3094 = vmatpush2.msra.mxu0 0.0
    %3095 = vmatprep.subr.mxu0 0.0
    %3096 = vmatpush2.msra.mxu0 0.0
    %3097 = vmatprep.subr.mxu0 0.0
    %3098 = vmatpush2.msra.mxu0 0.0
    %3099 = vmatprep.mubr.f32.mxu0 0.0
    %3100 = vmatmul.mubr.f32.gmra.mxu0 %v3033
    %v3101 = vpop.f32.mrf.mxu0
    %v3102 = vadd.f32 0.0, %v3101
    %v3103 = vpop.f32.mrf.mxu0
    %3104 = vdwg.mxu0
    %3105 = vrot.lane.b32.xlu0 %v2172, 64
    %v3106 = vpop.permute.xlu0 %3105
    %v3109 = vsel %vm331, %v2872, 0
    %3111 = vmatprep.subr.mxu0 0.0
    %3112 = vmatpush1.msra.mxu0 0.0
    %3113 = vmatprep.subr.mxu0 0.0
    %3114 = vmatpush1.msra.mxu0 0.0
    %3115 = vmatprep.subr.mxu0 0.0
    %3116 = vmatpush1.msra.mxu0 0.0
    %3117 = vmatprep.subr.mxu0 0.0
    %3118 = vmatpush1.msra.mxu0 0.0
    %3119 = vmatprep.subr.mxu0 0.0
    %3120 = vmatpush1.msra.mxu0 0.0
    %3121 = vmatprep.subr.mxu0 0.0
    %3122 = vmatpush1.msra.mxu0 0.0
    %3123 = vmatprep.subr.mxu0 0.0
    %3124 = vmatpush1.msra.mxu0 0.0
    %3125 = vmatprep.subr.mxu0 0.0
    %3126 = vmatpush1.msra.mxu0 0.0
    %3127 = vmatprep.subr.mxu0 0.0
    %3128 = vmatpush1.msra.mxu0 0.0
    %3129 = vmatprep.subr.mxu0 0.0
    %3130 = vmatpush1.msra.mxu0 0.0
    %3131 = vmatprep.subr.mxu0 0.0
    %3132 = vmatpush1.msra.mxu0 0.0
    %3133 = vmatprep.subr.mxu0 0.0
    %3134 = vmatpush1.msra.mxu0 0.0
    %3135 = vmatprep.subr.mxu0 0.0
    %3136 = vmatpush1.msra.mxu0 0.0
    %3137 = vmatprep.subr.mxu0 0.0
    %3138 = vmatpush1.msra.mxu0 0.0
    %3139 = vmatprep.subr.mxu0 0.0
    %3140 = vmatpush1.msra.mxu0 0.0
    %3141 = vmatprep.subr.mxu0 0.0
    %3142 = vmatpush1.msra.mxu0 %v3106
    %3143 = vmatprep.subr.mxu0 0.0
    %3144 = vmatpush2.msra.mxu0 0.0
    %3145 = vmatprep.subr.mxu0 0.0
    %3146 = vmatpush2.msra.mxu0 0.0
    %3147 = vmatprep.subr.mxu0 0.0
    %3148 = vmatpush2.msra.mxu0 0.0
    %3149 = vmatprep.subr.mxu0 0.0
    %3150 = vmatpush2.msra.mxu0 0.0
    %3151 = vmatprep.subr.mxu0 0.0
    %3152 = vmatpush2.msra.mxu0 0.0
    %3153 = vmatprep.subr.mxu0 0.0
    %3154 = vmatpush2.msra.mxu0 0.0
    %3155 = vmatprep.subr.mxu0 0.0
    %3156 = vmatpush2.msra.mxu0 0.0
    %3157 = vmatprep.subr.mxu0 0.0
    %3158 = vmatpush2.msra.mxu0 0.0
    %3159 = vmatprep.subr.mxu0 0.0
    %3160 = vmatpush2.msra.mxu0 0.0
    %3161 = vmatprep.subr.mxu0 0.0
    %3162 = vmatpush2.msra.mxu0 0.0
    %3163 = vmatprep.subr.mxu0 0.0
    %3164 = vmatpush2.msra.mxu0 0.0
    %3165 = vmatprep.subr.mxu0 0.0
    %3166 = vmatpush2.msra.mxu0 0.0
    %3167 = vmatprep.subr.mxu0 0.0
    %3168 = vmatpush2.msra.mxu0 0.0
    %3169 = vmatprep.subr.mxu0 0.0
    %3170 = vmatpush2.msra.mxu0 0.0
    %3171 = vmatprep.subr.mxu0 0.0
    %3172 = vmatpush2.msra.mxu0 0.0
    %3173 = vmatprep.subr.mxu0 0.0
    %3174 = vmatpush2.msra.mxu0 0.0
    %3175 = vmatprep.mubr.f32.mxu0 0.0
    %3176 = vmatmul.mubr.f32.gmra.mxu0 %v3109
    %v3177 = vpop.f32.mrf.mxu0
    %v3178 = vadd.f32 0.0, %v3177
    %v3179 = vpop.f32.mrf.mxu0
    %3180 = vdwg.mxu0
    %3181 = vrot.lane.b32.xlu0 %v2174, 64
    %v3182 = vpop.permute.xlu0 %3181
    %v3185 = vsel %vm331, %v2873, 0
    %3187 = vmatprep.subr.mxu0 0.0
    %3188 = vmatpush1.msra.mxu0 0.0
    %3189 = vmatprep.subr.mxu0 0.0
    %3190 = vmatpush1.msra.mxu0 0.0
    %3191 = vmatprep.subr.mxu0 0.0
    %3192 = vmatpush1.msra.mxu0 0.0
    %3193 = vmatprep.subr.mxu0 0.0
    %3194 = vmatpush1.msra.mxu0 0.0
    %3195 = vmatprep.subr.mxu0 0.0
    %3196 = vmatpush1.msra.mxu0 0.0
    %3197 = vmatprep.subr.mxu0 0.0
    %3198 = vmatpush1.msra.mxu0 0.0
    %3199 = vmatprep.subr.mxu0 0.0
    %3200 = vmatpush1.msra.mxu0 0.0
    %3201 = vmatprep.subr.mxu0 0.0
    %3202 = vmatpush1.msra.mxu0 0.0
    %3203 = vmatprep.subr.mxu0 0.0
    %3204 = vmatpush1.msra.mxu0 0.0
    %3205 = vmatprep.subr.mxu0 0.0
    %3206 = vmatpush1.msra.mxu0 0.0
    %3207 = vmatprep.subr.mxu0 0.0
    %3208 = vmatpush1.msra.mxu0 0.0
    %3209 = vmatprep.subr.mxu0 0.0
    %3210 = vmatpush1.msra.mxu0 0.0
    %3211 = vmatprep.subr.mxu0 0.0
    %3212 = vmatpush1.msra.mxu0 0.0
    %3213 = vmatprep.subr.mxu0 0.0
    %3214 = vmatpush1.msra.mxu0 0.0
    %3215 = vmatprep.subr.mxu0 0.0
    %3216 = vmatpush1.msra.mxu0 0.0
    %3217 = vmatprep.subr.mxu0 0.0
    %3218 = vmatpush1.msra.mxu0 %v3182
    %3219 = vmatprep.subr.mxu0 0.0
    %3220 = vmatpush2.msra.mxu0 0.0
    %3221 = vmatprep.subr.mxu0 0.0
    %3222 = vmatpush2.msra.mxu0 0.0
    %3223 = vmatprep.subr.mxu0 0.0
    %3224 = vmatpush2.msra.mxu0 0.0
    %3225 = vmatprep.subr.mxu0 0.0
    %3226 = vmatpush2.msra.mxu0 0.0
    %3227 = vmatprep.subr.mxu0 0.0
    %3228 = vmatpush2.msra.mxu0 0.0
    %3229 = vmatprep.subr.mxu0 0.0
    %3230 = vmatpush2.msra.mxu0 0.0
    %3231 = vmatprep.subr.mxu0 0.0
    %3232 = vmatpush2.msra.mxu0 0.0
    %3233 = vmatprep.subr.mxu0 0.0
    %3234 = vmatpush2.msra.mxu0 0.0
    %3235 = vmatprep.subr.mxu0 0.0
    %3236 = vmatpush2.msra.mxu0 0.0
    %3237 = vmatprep.subr.mxu0 0.0
    %3238 = vmatpush2.msra.mxu0 0.0
    %3239 = vmatprep.subr.mxu0 0.0
    %3240 = vmatpush2.msra.mxu0 0.0
    %3241 = vmatprep.subr.mxu0 0.0
    %3242 = vmatpush2.msra.mxu0 0.0
    %3243 = vmatprep.subr.mxu0 0.0
    %3244 = vmatpush2.msra.mxu0 0.0
    %3245 = vmatprep.subr.mxu0 0.0
    %3246 = vmatpush2.msra.mxu0 0.0
    %3247 = vmatprep.subr.mxu0 0.0
    %3248 = vmatpush2.msra.mxu0 0.0
    %3249 = vmatprep.subr.mxu0 0.0
    %3250 = vmatpush2.msra.mxu0 0.0
    %3251 = vmatprep.mubr.f32.mxu0 0.0
    %3252 = vmatmul.mubr.f32.gmra.mxu0 %v3185
    %v3253 = vpop.f32.mrf.mxu0
    %v3254 = vadd.f32 0.0, %v3253
    %v3255 = vpop.f32.mrf.mxu0
    %3256 = vdwg.mxu0
    %3257 = vrot.lane.b32.xlu0 %v2176, 64
    %v3258 = vpop.permute.xlu0 %3257
    %v3261 = vsel %vm331, %v2874, 0
    %3263 = vmatprep.subr.mxu0 0.0
    %3264 = vmatpush1.msra.mxu0 0.0
    %3265 = vmatprep.subr.mxu0 0.0
    %3266 = vmatpush1.msra.mxu0 0.0
    %3267 = vmatprep.subr.mxu0 0.0
    %3268 = vmatpush1.msra.mxu0 0.0
    %3269 = vmatprep.subr.mxu0 0.0
    %3270 = vmatpush1.msra.mxu0 0.0
    %3271 = vmatprep.subr.mxu0 0.0
    %3272 = vmatpush1.msra.mxu0 0.0
    %3273 = vmatprep.subr.mxu0 0.0
    %3274 = vmatpush1.msra.mxu0 0.0
    %3275 = vmatprep.subr.mxu0 0.0
    %3276 = vmatpush1.msra.mxu0 0.0
    %3277 = vmatprep.subr.mxu0 0.0
    %3278 = vmatpush1.msra.mxu0 0.0
    %3279 = vmatprep.subr.mxu0 0.0
    %3280 = vmatpush1.msra.mxu0 0.0
    %3281 = vmatprep.subr.mxu0 0.0
    %3282 = vmatpush1.msra.mxu0 0.0
    %3283 = vmatprep.subr.mxu0 0.0
    %3284 = vmatpush1.msra.mxu0 0.0
    %3285 = vmatprep.subr.mxu0 0.0
    %3286 = vmatpush1.msra.mxu0 0.0
    %3287 = vmatprep.subr.mxu0 0.0
    %3288 = vmatpush1.msra.mxu0 0.0
    %3289 = vmatprep.subr.mxu0 0.0
    %3290 = vmatpush1.msra.mxu0 0.0
    %3291 = vmatprep.subr.mxu0 0.0
    %3292 = vmatpush1.msra.mxu0 0.0
    %3293 = vmatprep.subr.mxu0 0.0
    %3294 = vmatpush1.msra.mxu0 %v3258
    %3295 = vmatprep.subr.mxu0 0.0
    %3296 = vmatpush2.msra.mxu0 0.0
    %3297 = vmatprep.subr.mxu0 0.0
    %3298 = vmatpush2.msra.mxu0 0.0
    %3299 = vmatprep.subr.mxu0 0.0
    %3300 = vmatpush2.msra.mxu0 0.0
    %3301 = vmatprep.subr.mxu0 0.0
    %3302 = vmatpush2.msra.mxu0 0.0
    %3303 = vmatprep.subr.mxu0 0.0
    %3304 = vmatpush2.msra.mxu0 0.0
    %3305 = vmatprep.subr.mxu0 0.0
    %3306 = vmatpush2.msra.mxu0 0.0
    %3307 = vmatprep.subr.mxu0 0.0
    %3308 = vmatpush2.msra.mxu0 0.0
    %3309 = vmatprep.subr.mxu0 0.0
    %3310 = vmatpush2.msra.mxu0 0.0
    %3311 = vmatprep.subr.mxu0 0.0
    %3312 = vmatpush2.msra.mxu0 0.0
    %3313 = vmatprep.subr.mxu0 0.0
    %3314 = vmatpush2.msra.mxu0 0.0
    %3315 = vmatprep.subr.mxu0 0.0
    %3316 = vmatpush2.msra.mxu0 0.0
    %3317 = vmatprep.subr.mxu0 0.0
    %3318 = vmatpush2.msra.mxu0 0.0
    %3319 = vmatprep.subr.mxu0 0.0
    %3320 = vmatpush2.msra.mxu0 0.0
    %3321 = vmatprep.subr.mxu0 0.0
    %3322 = vmatpush2.msra.mxu0 0.0
    %3323 = vmatprep.subr.mxu0 0.0
    %3324 = vmatpush2.msra.mxu0 0.0
    %3325 = vmatprep.subr.mxu0 0.0
    %3326 = vmatpush2.msra.mxu0 0.0
    %3327 = vmatprep.mubr.f32.mxu0 0.0
    %3328 = vmatmul.mubr.f32.gmra.mxu0 %v3261
    %v3329 = vpop.f32.mrf.mxu0
    %v3330 = vadd.f32 0.0, %v3329
    %v3331 = vpop.f32.mrf.mxu0
    %3332 = vdwg.mxu0
    %3333 = vrot.lane.b32.xlu0 %v2178, 64
    %v3334 = vpop.permute.xlu0 %3333
    %v3337 = vsel %vm331, %v2875, 0
    %3339 = vmatprep.subr.mxu0 0.0
    %3340 = vmatpush1.msra.mxu0 0.0
    %3341 = vmatprep.subr.mxu0 0.0
    %3342 = vmatpush1.msra.mxu0 0.0
    %3343 = vmatprep.subr.mxu0 0.0
    %3344 = vmatpush1.msra.mxu0 0.0
    %3345 = vmatprep.subr.mxu0 0.0
    %3346 = vmatpush1.msra.mxu0 0.0
    %3347 = vmatprep.subr.mxu0 0.0
    %3348 = vmatpush1.msra.mxu0 0.0
    %3349 = vmatprep.subr.mxu0 0.0
    %3350 = vmatpush1.msra.mxu0 0.0
    %3351 = vmatprep.subr.mxu0 0.0
    %3352 = vmatpush1.msra.mxu0 0.0
    %3353 = vmatprep.subr.mxu0 0.0
    %3354 = vmatpush1.msra.mxu0 0.0
    %3355 = vmatprep.subr.mxu0 0.0
    %3356 = vmatpush1.msra.mxu0 0.0
    %3357 = vmatprep.subr.mxu0 0.0
    %3358 = vmatpush1.msra.mxu0 0.0
    %3359 = vmatprep.subr.mxu0 0.0
    %3360 = vmatpush1.msra.mxu0 0.0
    %3361 = vmatprep.subr.mxu0 0.0
    %3362 = vmatpush1.msra.mxu0 0.0
    %3363 = vmatprep.subr.mxu0 0.0
    %3364 = vmatpush1.msra.mxu0 0.0
    %3365 = vmatprep.subr.mxu0 0.0
    %3366 = vmatpush1.msra.mxu0 0.0
    %3367 = vmatprep.subr.mxu0 0.0
    %3368 = vmatpush1.msra.mxu0 0.0
    %3369 = vmatprep.subr.mxu0 0.0
    %3370 = vmatpush1.msra.mxu0 %v3334
    %3371 = vmatprep.subr.mxu0 0.0
    %3372 = vmatpush2.msra.mxu0 0.0
    %3373 = vmatprep.subr.mxu0 0.0
    %3374 = vmatpush2.msra.mxu0 0.0
    %3375 = vmatprep.subr.mxu0 0.0
    %3376 = vmatpush2.msra.mxu0 0.0
    %3377 = vmatprep.subr.mxu0 0.0
    %3378 = vmatpush2.msra.mxu0 0.0
    %3379 = vmatprep.subr.mxu0 0.0
    %3380 = vmatpush2.msra.mxu0 0.0
    %3381 = vmatprep.subr.mxu0 0.0
    %3382 = vmatpush2.msra.mxu0 0.0
    %3383 = vmatprep.subr.mxu0 0.0
    %3384 = vmatpush2.msra.mxu0 0.0
    %3385 = vmatprep.subr.mxu0 0.0
    %3386 = vmatpush2.msra.mxu0 0.0
    %3387 = vmatprep.subr.mxu0 0.0
    %3388 = vmatpush2.msra.mxu0 0.0
    %3389 = vmatprep.subr.mxu0 0.0
    %3390 = vmatpush2.msra.mxu0 0.0
    %3391 = vmatprep.subr.mxu0 0.0
    %3392 = vmatpush2.msra.mxu0 0.0
    %3393 = vmatprep.subr.mxu0 0.0
    %3394 = vmatpush2.msra.mxu0 0.0
    %3395 = vmatprep.subr.mxu0 0.0
    %3396 = vmatpush2.msra.mxu0 0.0
    %3397 = vmatprep.subr.mxu0 0.0
    %3398 = vmatpush2.msra.mxu0 0.0
    %3399 = vmatprep.subr.mxu0 0.0
    %3400 = vmatpush2.msra.mxu0 0.0
    %3401 = vmatprep.subr.mxu0 0.0
    %3402 = vmatpush2.msra.mxu0 0.0
    %3403 = vmatprep.mubr.f32.mxu0 0.0
    %3404 = vmatmul.mubr.f32.gmra.mxu0 %v3337
    %v3405 = vpop.f32.mrf.mxu0
    %v3406 = vadd.f32 0.0, %v3405
    %v3407 = vpop.f32.mrf.mxu0
    %3408 = vdwg.mxu0
    %3409 = vrot.lane.b32.xlu0 %v2180, 64
    %v3410 = vpop.permute.xlu0 %3409
    %v3413 = vsel %vm331, %v2876, 0
    %3415 = vmatprep.subr.mxu0 0.0
    %3416 = vmatpush1.msra.mxu0 0.0
    %3417 = vmatprep.subr.mxu0 0.0
    %3418 = vmatpush1.msra.mxu0 0.0
    %3419 = vmatprep.subr.mxu0 0.0
    %3420 = vmatpush1.msra.mxu0 0.0
    %3421 = vmatprep.subr.mxu0 0.0
    %3422 = vmatpush1.msra.mxu0 0.0
    %3423 = vmatprep.subr.mxu0 0.0
    %3424 = vmatpush1.msra.mxu0 0.0
    %3425 = vmatprep.subr.mxu0 0.0
    %3426 = vmatpush1.msra.mxu0 0.0
    %3427 = vmatprep.subr.mxu0 0.0
    %3428 = vmatpush1.msra.mxu0 0.0
    %3429 = vmatprep.subr.mxu0 0.0
    %3430 = vmatpush1.msra.mxu0 0.0
    %3431 = vmatprep.subr.mxu0 0.0
    %3432 = vmatpush1.msra.mxu0 0.0
    %3433 = vmatprep.subr.mxu0 0.0
    %3434 = vmatpush1.msra.mxu0 0.0
    %3435 = vmatprep.subr.mxu0 0.0
    %3436 = vmatpush1.msra.mxu0 0.0
    %3437 = vmatprep.subr.mxu0 0.0
    %3438 = vmatpush1.msra.mxu0 0.0
    %3439 = vmatprep.subr.mxu0 0.0
    %3440 = vmatpush1.msra.mxu0 0.0
    %3441 = vmatprep.subr.mxu0 0.0
    %3442 = vmatpush1.msra.mxu0 0.0
    %3443 = vmatprep.subr.mxu0 0.0
    %3444 = vmatpush1.msra.mxu0 0.0
    %3445 = vmatprep.subr.mxu0 0.0
    %3446 = vmatpush1.msra.mxu0 %v3410
    %3447 = vmatprep.subr.mxu0 0.0
    %3448 = vmatpush2.msra.mxu0 0.0
    %3449 = vmatprep.subr.mxu0 0.0
    %3450 = vmatpush2.msra.mxu0 0.0
    %3451 = vmatprep.subr.mxu0 0.0
    %3452 = vmatpush2.msra.mxu0 0.0
    %3453 = vmatprep.subr.mxu0 0.0
    %3454 = vmatpush2.msra.mxu0 0.0
    %3455 = vmatprep.subr.mxu0 0.0
    %3456 = vmatpush2.msra.mxu0 0.0
    %3457 = vmatprep.subr.mxu0 0.0
    %3458 = vmatpush2.msra.mxu0 0.0
    %3459 = vmatprep.subr.mxu0 0.0
    %3460 = vmatpush2.msra.mxu0 0.0
    %3461 = vmatprep.subr.mxu0 0.0
    %3462 = vmatpush2.msra.mxu0 0.0
    %3463 = vmatprep.subr.mxu0 0.0
    %3464 = vmatpush2.msra.mxu0 0.0
    %3465 = vmatprep.subr.mxu0 0.0
    %3466 = vmatpush2.msra.mxu0 0.0
    %3467 = vmatprep.subr.mxu0 0.0
    %3468 = vmatpush2.msra.mxu0 0.0
    %3469 = vmatprep.subr.mxu0 0.0
    %3470 = vmatpush2.msra.mxu0 0.0
    %3471 = vmatprep.subr.mxu0 0.0
    %3472 = vmatpush2.msra.mxu0 0.0
    %3473 = vmatprep.subr.mxu0 0.0
    %3474 = vmatpush2.msra.mxu0 0.0
    %3475 = vmatprep.subr.mxu0 0.0
    %3476 = vmatpush2.msra.mxu0 0.0
    %3477 = vmatprep.subr.mxu0 0.0
    %3478 = vmatpush2.msra.mxu0 0.0
    %3479 = vmatprep.mubr.f32.mxu0 0.0
    %3480 = vmatmul.mubr.f32.gmra.mxu0 %v3413
    %v3481 = vpop.f32.mrf.mxu0
    %v3482 = vadd.f32 0.0, %v3481
    %v3483 = vpop.f32.mrf.mxu0
    %3484 = vdwg.mxu0
    %3487 = vrot.lane.b32.xlu0 %v3102, 8
    %v3488 = vpop.permute.xlu0 %3487
    %3489 = vrot.lane.b32.xlu0 %v3178, 8
    %v3490 = vpop.permute.xlu0 %3489
    %3495 = vrot.lane.b32.xlu0 %v3254, 16
    %v3496 = vpop.permute.xlu0 %3495
    %3497 = vrot.lane.b32.xlu0 %v3330, 16
    %v3498 = vpop.permute.xlu0 %3497
    %3503 = vrot.lane.b32.xlu0 %v3406, 24
    %v3504 = vpop.permute.xlu0 %3503
    %3505 = vrot.lane.b32.xlu0 %v3482, 24
    %v3506 = vpop.permute.xlu0 %3505
    %v3509 = vsel %vm331, %v2950, %v3488
    %v3510 = vsel %vm331, %v3026, %v3490
    %v3511 = vsel %vm1660, %v3509, %v3496
    %v3512 = vsel %vm1660, %v3510, %v3498
    %v3513 = vsel %vm1663, %v3511, %v3504
    %v3514 = vsel %vm1663, %v3512, %v3506
    %s3515 = scalar_lea.vmem %s6, 32
    %v3516 = vld [vmem:[%s3515] sm:$0xff]
    %v3517 = vld [vmem:[%s3515 + $0x8] sm:$0xff]
    %v3518 = vld [vmem:[%s3515 + $0x10] sm:$0xff]
    %v3519 = vld [vmem:[%s3515 + $0x18] sm:$0xff]
    %s3520 = scalar_lea.vmem %s7, 1
    %v3521 = vld [vmem:[%s3520] sm:$0x1]
    %v3523 = vlaneseq
    %v3524 = vshrl.u32 %v3523, 7
    %v3525 = vsub.s32 0, %v3524
    %v3526 = vrot.slane %v3521, %v3525
    %v3529 = vsel %vm107, %v3513, 0
    %v3532 = vsel %vm107, %v3514, 0
    %3534 = vmatprep.subr.mxu0 0.0
    %3535 = vmatpush1.msra.mxu0 0.0
    %3536 = vmatprep.subr.mxu0 0.0
    %3537 = vmatpush1.msra.mxu0 0.0
    %3538 = vmatprep.subr.mxu0 0.0
    %3539 = vmatpush1.msra.mxu0 0.0
    %3540 = vmatprep.subr.mxu0 0.0
    %3541 = vmatpush1.msra.mxu0 0.0
    %3542 = vmatprep.subr.mxu0 0.0
    %3543 = vmatpush1.msra.mxu0 0.0
    %3544 = vmatprep.subr.mxu0 0.0
    %3545 = vmatpush1.msra.mxu0 0.0
    %3546 = vmatprep.subr.mxu0 0.0
    %3547 = vmatpush1.msra.mxu0 0.0
    %3548 = vmatprep.subr.mxu0 0.0
    %3549 = vmatpush1.msra.mxu0 0.0
    %3550 = vmatprep.subr.mxu0 0.0
    %3551 = vmatpush1.msra.mxu0 0.0
    %3552 = vmatprep.subr.mxu0 0.0
    %3553 = vmatpush1.msra.mxu0 0.0
    %3554 = vmatprep.subr.mxu0 0.0
    %3555 = vmatpush1.msra.mxu0 0.0
    %3556 = vmatprep.subr.mxu0 0.0
    %3557 = vmatpush1.msra.mxu0 0.0
    %3558 = vmatprep.subr.mxu0 0.0
    %3559 = vmatpush1.msra.mxu0 %v3519
    %3560 = vmatprep.subr.mxu0 0.0
    %3561 = vmatpush1.msra.mxu0 %v3518
    %3562 = vmatprep.subr.mxu0 0.0
    %3563 = vmatpush1.msra.mxu0 %v3517
    %3564 = vmatprep.subr.mxu0 0.0
    %3565 = vmatpush1.msra.mxu0 %v3516
    %3566 = vmatprep.subr.mxu0 0.0
    %3567 = vmatpush2.msra.mxu0 0.0
    %3568 = vmatprep.subr.mxu0 0.0
    %3569 = vmatpush2.msra.mxu0 0.0
    %3570 = vmatprep.subr.mxu0 0.0
    %3571 = vmatpush2.msra.mxu0 0.0
    %3572 = vmatprep.subr.mxu0 0.0
    %3573 = vmatpush2.msra.mxu0 0.0
    %3574 = vmatprep.subr.mxu0 0.0
    %3575 = vmatpush2.msra.mxu0 0.0
    %3576 = vmatprep.subr.mxu0 0.0
    %3577 = vmatpush2.msra.mxu0 0.0
    %3578 = vmatprep.subr.mxu0 0.0
    %3579 = vmatpush2.msra.mxu0 0.0
    %3580 = vmatprep.subr.mxu0 0.0
    %3581 = vmatpush2.msra.mxu0 0.0
    %3582 = vmatprep.subr.mxu0 0.0
    %3583 = vmatpush2.msra.mxu0 0.0
    %3584 = vmatprep.subr.mxu0 0.0
    %3585 = vmatpush2.msra.mxu0 0.0
    %3586 = vmatprep.subr.mxu0 0.0
    %3587 = vmatpush2.msra.mxu0 0.0
    %3588 = vmatprep.subr.mxu0 0.0
    %3589 = vmatpush2.msra.mxu0 0.0
    %3590 = vmatprep.subr.mxu0 0.0
    %3591 = vmatpush2.msra.mxu0 0.0
    %3592 = vmatprep.subr.mxu0 0.0
    %3593 = vmatpush2.msra.mxu0 0.0
    %3594 = vmatprep.subr.mxu0 0.0
    %3595 = vmatpush2.msra.mxu0 0.0
    %3596 = vmatprep.subr.mxu0 0.0
    %3597 = vmatpush2.msra.mxu0 0.0
    %3598 = vmatprep.mubr.f32.mxu0 0.0
    %3599 = vmatmul.mubr.f32.gmra.mxu0 %v3529
    %v3600 = vpop.f32.mrf.mxu0
    %v3601 = vadd.f32 %v3526, %v3600
    %v3602 = vpop.f32.mrf.mxu0
    %3603 = vmatprep.mubr.f32.mxu0 0.0
    %3604 = vmatmul.mubr.f32.gmra.mxu0 %v3532
    %v3605 = vpop.f32.mrf.mxu0
    %v3606 = vadd.f32 %v3526, %v3605
    %v3607 = vpop.f32.mrf.mxu0
    %3608 = vdwg.mxu0
    %v3609 = vadd.f32 %v3601, %v2055
    %v3610 = vadd.f32 %v3606, %v2056
    %s3611 = scalar_lea.vmem %s8, 1
    %v3612 = vld [vmem:[%s3611] sm:$0x1]
    %s3613 = scalar_lea.vmem %s9, 1
    %v3614 = vld [vmem:[%s3613] sm:$0x1]
    %v3615 = vsel %vm107, %v3609, 0.0
    %3616 = vadd.xlane.f32.xlu0 %v3615
    %v3617 = vpop.xlane.xlu0 %3616
    %v3618 = vsel %vm107, %v3610, 0.0
    %3619 = vadd.xlane.f32.xlu0 %v3618
    %v3620 = vpop.xlane.xlu0 %3619
    %v3621 = vmul.f32 %v3617, %v114
    %v3622 = vmul.f32 %v3620, %v114
    %v3623 = vsub.f32 %v3609, %v3621
    %v3624 = vsub.f32 %v3610, %v3622
    %v3625 = vmul.f32 %v3623, %v3623
    %v3626 = vmul.f32 %v3624, %v3624
    %v3627 = vsel %vm107, %v3625, 0.0
    %3628 = vadd.xlane.f32.xlu0 %v3627
    %v3629 = vpop.xlane.xlu0 %3628
    %v3630 = vsel %vm107, %v3626, 0.0
    %3631 = vadd.xlane.f32.xlu0 %v3630
    %v3632 = vpop.xlane.xlu0 %3631
    %v3633 = vmul.f32 %v3629, %v114
    %v3634 = vmul.f32 %v3632, %v114
    %v3635 = vadd.f32 %v3633, 1e-12
    %v3636 = vadd.f32 %v3634, 1e-12
    %v3637 = vrsqrt.pop %v3635
    %v3638 = vrsqrt.pop %v3636
    %v3639 = vmul.f32 %v3623, %v3637
    %v3640 = vmul.f32 %v3624, %v3638
    %v3642 = vlaneseq
    %v3643 = vshrl.u32 %v3642, 7
    %v3644 = vsub.s32 0, %v3643
    %v3645 = vrot.slane %v3612, %v3644
    %v3647 = vmul.f32 %v3639, %v3645
    %v3648 = vmul.f32 %v3640, %v3645
    %v3650 = vlaneseq
    %v3651 = vshrl.u32 %v3650, 7
    %v3652 = vsub.s32 0, %v3651
    %v3653 = vrot.slane %v3614, %v3652
    %v3655 = vadd.f32 %v3647, %v3653
    %v3656 = vadd.f32 %v3648, %v3653
    %s3657 = scalar_lea.vmem %s10, 32
    %v3658 = vld [vmem:[%s3657] sm:$0xff]
    %v3659 = vld [vmem:[%s3657 + $0x8] sm:$0xff]
    %v3660 = vld [vmem:[%s3657 + $0x10] sm:$0xff]
    %v3661 = vld [vmem:[%s3657 + $0x18] sm:$0xff]
    %s3662 = scalar_lea.vmem %s11, 1
    %v3663 = vld [vmem:[%s3662] sm:$0x1]
    %v3665 = vlaneseq
    %v3666 = vshrl.u32 %v3665, 7
    %v3667 = vsub.s32 0, %v3666
    %v3668 = vrot.slane %v3663, %v3667
    %v3671 = vsel %vm107, %v3655, 0
    %v3674 = vsel %vm107, %v3656, 0
    %3676 = vmatprep.subr.mxu0 0.0
    %3677 = vmatpush1.msra.mxu0 0.0
    %3678 = vmatprep.subr.mxu0 0.0
    %3679 = vmatpush1.msra.mxu0 0.0
    %3680 = vmatprep.subr.mxu0 0.0
    %3681 = vmatpush1.msra.mxu0 0.0
    %3682 = vmatprep.subr.mxu0 0.0
    %3683 = vmatpush1.msra.mxu0 0.0
    %3684 = vmatprep.subr.mxu0 0.0
    %3685 = vmatpush1.msra.mxu0 0.0
    %3686 = vmatprep.subr.mxu0 0.0
    %3687 = vmatpush1.msra.mxu0 0.0
    %3688 = vmatprep.subr.mxu0 0.0
    %3689 = vmatpush1.msra.mxu0 0.0
    %3690 = vmatprep.subr.mxu0 0.0
    %3691 = vmatpush1.msra.mxu0 0.0
    %3692 = vmatprep.subr.mxu0 0.0
    %3693 = vmatpush1.msra.mxu0 0.0
    %3694 = vmatprep.subr.mxu0 0.0
    %3695 = vmatpush1.msra.mxu0 0.0
    %3696 = vmatprep.subr.mxu0 0.0
    %3697 = vmatpush1.msra.mxu0 0.0
    %3698 = vmatprep.subr.mxu0 0.0
    %3699 = vmatpush1.msra.mxu0 0.0
    %3700 = vmatprep.subr.mxu0 0.0
    %3701 = vmatpush1.msra.mxu0 %v3661
    %3702 = vmatprep.subr.mxu0 0.0
    %3703 = vmatpush1.msra.mxu0 %v3660
    %3704 = vmatprep.subr.mxu0 0.0
    %3705 = vmatpush1.msra.mxu0 %v3659
    %3706 = vmatprep.subr.mxu0 0.0
    %3707 = vmatpush1.msra.mxu0 %v3658
    %3708 = vmatprep.subr.mxu0 0.0
    %3709 = vmatpush2.msra.mxu0 0.0
    %3710 = vmatprep.subr.mxu0 0.0
    %3711 = vmatpush2.msra.mxu0 0.0
    %3712 = vmatprep.subr.mxu0 0.0
    %3713 = vmatpush2.msra.mxu0 0.0
    %3714 = vmatprep.subr.mxu0 0.0
    %3715 = vmatpush2.msra.mxu0 0.0
    %3716 = vmatprep.subr.mxu0 0.0
    %3717 = vmatpush2.msra.mxu0 0.0
    %3718 = vmatprep.subr.mxu0 0.0
    %3719 = vmatpush2.msra.mxu0 0.0
    %3720 = vmatprep.subr.mxu0 0.0
    %3721 = vmatpush2.msra.mxu0 0.0
    %3722 = vmatprep.subr.mxu0 0.0
    %3723 = vmatpush2.msra.mxu0 0.0
    %3724 = vmatprep.subr.mxu0 0.0
    %3725 = vmatpush2.msra.mxu0 0.0
    %3726 = vmatprep.subr.mxu0 0.0
    %3727 = vmatpush2.msra.mxu0 0.0
    %3728 = vmatprep.subr.mxu0 0.0
    %3729 = vmatpush2.msra.mxu0 0.0
    %3730 = vmatprep.subr.mxu0 0.0
    %3731 = vmatpush2.msra.mxu0 0.0
    %3732 = vmatprep.subr.mxu0 0.0
    %3733 = vmatpush2.msra.mxu0 0.0
    %3734 = vmatprep.subr.mxu0 0.0
    %3735 = vmatpush2.msra.mxu0 0.0
    %3736 = vmatprep.subr.mxu0 0.0
    %3737 = vmatpush2.msra.mxu0 0.0
    %3738 = vmatprep.subr.mxu0 0.0
    %3739 = vmatpush2.msra.mxu0 0.0
    %3740 = vmatprep.mubr.f32.mxu0 0.0
    %3741 = vmatmul.mubr.f32.gmra.mxu0 %v3671
    %v3742 = vpop.f32.mrf.mxu0
    %v3743 = vadd.f32 %v3668, %v3742
    %v3744 = vpop.f32.mrf.mxu0
    %3745 = vmatprep.mubr.f32.mxu0 0.0
    %3746 = vmatmul.mubr.f32.gmra.mxu0 %v3674
    %v3747 = vpop.f32.mrf.mxu0
    %v3748 = vadd.f32 %v3668, %v3747
    %v3749 = vpop.f32.mrf.mxu0
    %3750 = vdwg.mxu0
    %v3751 = vmul.f32 %v3743, 0.5
    %v3752 = vmul.f32 %v3748, 0.5
    %v3753 = vmul.f32 %v3743, 0.044715
    %v3754 = vmul.f32 %v3748, 0.044715
    %v3755 = vmul.f32 %v3753, %v3743
    %v3756 = vmul.f32 %v3754, %v3748
    %v3757 = vmul.f32 %v3755, %v3743
    %v3758 = vmul.f32 %v3756, %v3748
    %v3759 = vadd.f32 %v3743, %v3757
    %v3760 = vadd.f32 %v3748, %v3758
    %v3761 = vmul.f32 %v3759, 0.7978846
    %v3762 = vmul.f32 %v3760, 0.7978846
    %v3763 = vtanh.pop %v3761
    %v3764 = vtanh.pop %v3762
    %v3765 = vadd.f32 %v3763, 1.0
    %v3766 = vadd.f32 %v3764, 1.0
    %v3767 = vmul.f32 %v3751, %v3765
    %v3768 = vmul.f32 %v3752, %v3766
    %s3769 = scalar_lea.vmem %s12, 64
    %v3770 = vld [vmem:[%s3769] sm:$0xff]
    %v3771 = vld [vmem:[%s3769 + $0x8] sm:$0xff]
    %v3772 = vld [vmem:[%s3769 + $0x10] sm:$0xff]
    %v3773 = vld [vmem:[%s3769 + $0x18] sm:$0xff]
    %v3774 = vld [vmem:[%s3769 + $0x20] sm:$0xff]
    %v3775 = vld [vmem:[%s3769 + $0x28] sm:$0xff]
    %v3776 = vld [vmem:[%s3769 + $0x30] sm:$0xff]
    %v3777 = vld [vmem:[%s3769 + $0x38] sm:$0xff]
    %s3778 = scalar_lea.vmem %s13, 1
    %v3779 = vld [vmem:[%s3778] sm:$0x1]
    %v3781 = vlaneseq
    %v3782 = vshrl.u32 %v3781, 7
    %v3783 = vsub.s32 0, %v3782
    %v3784 = vrot.slane %v3779, %v3783
    %v3787 = vsel %vm1929, %v3767, 0
    %v3790 = vsel %vm1929, %v3768, 0
    %3792 = vmatprep.subr.mxu0 0.0
    %3793 = vmatpush1.msra.mxu0 0.0
    %3794 = vmatprep.subr.mxu0 0.0
    %3795 = vmatpush1.msra.mxu0 0.0
    %3796 = vmatprep.subr.mxu0 0.0
    %3797 = vmatpush1.msra.mxu0 0.0
    %3798 = vmatprep.subr.mxu0 0.0
    %3799 = vmatpush1.msra.mxu0 0.0
    %3800 = vmatprep.subr.mxu0 0.0
    %3801 = vmatpush1.msra.mxu0 0.0
    %3802 = vmatprep.subr.mxu0 0.0
    %3803 = vmatpush1.msra.mxu0 0.0
    %3804 = vmatprep.subr.mxu0 0.0
    %3805 = vmatpush1.msra.mxu0 0.0
    %3806 = vmatprep.subr.mxu0 0.0
    %3807 = vmatpush1.msra.mxu0 0.0
    %3808 = vmatprep.subr.mxu0 0.0
    %3809 = vmatpush1.msra.mxu0 %v3777
    %3810 = vmatprep.subr.mxu0 0.0
    %3811 = vmatpush1.msra.mxu0 %v3776
    %3812 = vmatprep.subr.mxu0 0.0
    %3813 = vmatpush1.msra.mxu0 %v3775
    %3814 = vmatprep.subr.mxu0 0.0
    %3815 = vmatpush1.msra.mxu0 %v3774
    %3816 = vmatprep.subr.mxu0 0.0
    %3817 = vmatpush1.msra.mxu0 %v3773
    %3818 = vmatprep.subr.mxu0 0.0
    %3819 = vmatpush1.msra.mxu0 %v3772
    %3820 = vmatprep.subr.mxu0 0.0
    %3821 = vmatpush1.msra.mxu0 %v3771
    %3822 = vmatprep.subr.mxu0 0.0
    %3823 = vmatpush1.msra.mxu0 %v3770
    %3824 = vmatprep.subr.mxu0 0.0
    %3825 = vmatpush2.msra.mxu0 0.0
    %3826 = vmatprep.subr.mxu0 0.0
    %3827 = vmatpush2.msra.mxu0 0.0
    %3828 = vmatprep.subr.mxu0 0.0
    %3829 = vmatpush2.msra.mxu0 0.0
    %3830 = vmatprep.subr.mxu0 0.0
    %3831 = vmatpush2.msra.mxu0 0.0
    %3832 = vmatprep.subr.mxu0 0.0
    %3833 = vmatpush2.msra.mxu0 0.0
    %3834 = vmatprep.subr.mxu0 0.0
    %3835 = vmatpush2.msra.mxu0 0.0
    %3836 = vmatprep.subr.mxu0 0.0
    %3837 = vmatpush2.msra.mxu0 0.0
    %3838 = vmatprep.subr.mxu0 0.0
    %3839 = vmatpush2.msra.mxu0 0.0
    %3840 = vmatprep.subr.mxu0 0.0
    %3841 = vmatpush2.msra.mxu0 0.0
    %3842 = vmatprep.subr.mxu0 0.0
    %3843 = vmatpush2.msra.mxu0 0.0
    %3844 = vmatprep.subr.mxu0 0.0
    %3845 = vmatpush2.msra.mxu0 0.0
    %3846 = vmatprep.subr.mxu0 0.0
    %3847 = vmatpush2.msra.mxu0 0.0
    %3848 = vmatprep.subr.mxu0 0.0
    %3849 = vmatpush2.msra.mxu0 0.0
    %3850 = vmatprep.subr.mxu0 0.0
    %3851 = vmatpush2.msra.mxu0 0.0
    %3852 = vmatprep.subr.mxu0 0.0
    %3853 = vmatpush2.msra.mxu0 0.0
    %3854 = vmatprep.subr.mxu0 0.0
    %3855 = vmatpush2.msra.mxu0 0.0
    %3856 = vmatprep.mubr.f32.mxu0 0.0
    %3857 = vmatmul.mubr.f32.gmra.mxu0 %v3787
    %v3858 = vpop.f32.mrf.mxu0
    %v3859 = vadd.f32 %v3784, %v3858
    %v3860 = vpop.f32.mrf.mxu0
    %3861 = vmatprep.mubr.f32.mxu0 0.0
    %3862 = vmatmul.mubr.f32.gmra.mxu0 %v3790
    %v3863 = vpop.f32.mrf.mxu0
    %v3864 = vadd.f32 %v3784, %v3863
    %v3865 = vpop.f32.mrf.mxu0
    %3866 = vdwg.mxu0
    %v3867 = vadd.f32 %v3859, %v3655
    %v3868 = vadd.f32 %v3864, %v3656
    %s3869 = scalar_lea.vmem %s14, 1
    %v3870 = vld [vmem:[%s3869] sm:$0x1]
    %s3871 = scalar_lea.vmem %s15, 1
    %v3872 = vld [vmem:[%s3871] sm:$0x1]
    %v3873 = vsel %vm107, %v3867, 0.0
    %3874 = vadd.xlane.f32.xlu0 %v3873
    %v3875 = vpop.xlane.xlu0 %3874
    %v3876 = vsel %vm107, %v3868, 0.0
    %3877 = vadd.xlane.f32.xlu0 %v3876
    %v3878 = vpop.xlane.xlu0 %3877
    %v3879 = vmul.f32 %v3875, %v114
    %v3880 = vmul.f32 %v3878, %v114
    %v3881 = vsub.f32 %v3867, %v3879
    %v3882 = vsub.f32 %v3868, %v3880
    %v3883 = vmul.f32 %v3881, %v3881
    %v3884 = vmul.f32 %v3882, %v3882
    %v3885 = vsel %vm107, %v3883, 0.0
    %3886 = vadd.xlane.f32.xlu0 %v3885
    %v3887 = vpop.xlane.xlu0 %3886
    %v3888 = vsel %vm107, %v3884, 0.0
    %3889 = vadd.xlane.f32.xlu0 %v3888
    %v3890 = vpop.xlane.xlu0 %3889
    %v3891 = vmul.f32 %v3887, %v114
    %v3892 = vmul.f32 %v3890, %v114
    %v3893 = vadd.f32 %v3891, 1e-12
    %v3894 = vadd.f32 %v3892, 1e-12
    %v3895 = vrsqrt.pop %v3893
    %v3896 = vrsqrt.pop %v3894
    %v3897 = vmul.f32 %v3881, %v3895
    %v3898 = vmul.f32 %v3882, %v3896
    %v3900 = vlaneseq
    %v3901 = vshrl.u32 %v3900, 7
    %v3902 = vsub.s32 0, %v3901
    %v3903 = vrot.slane %v3870, %v3902
    %v3905 = vmul.f32 %v3897, %v3903
    %v3906 = vmul.f32 %v3898, %v3903
    %v3908 = vlaneseq
    %v3909 = vshrl.u32 %v3908, 7
    %v3910 = vsub.s32 0, %v3909
    %v3911 = vrot.slane %v3872, %v3910
    %v3913 = vadd.f32 %v3905, %v3911
    %v3914 = vadd.f32 %v3906, %v3911
    %3915 = vst.msk [vmem:[#allocation2] sm:$0xff] %vm107, %v3913
    %3916 = vst.msk [vmem:[#allocation2 + $0x8] sm:$0xff] %vm107, %v3914
    %v3917 = vld [vmem:[#allocation2] ss:$8 sm:$0x3]
    %v3918 = vld [vmem:[%s16] sm:$0xff]
    %v3919 = vld [vmem:[%s16 + $0x8] sm:$0xff]
    %v3920 = vld [vmem:[%s16 + $0x10] sm:$0xff]
    %v3921 = vld [vmem:[%s16 + $0x18] sm:$0xff]
    %v3922 = vld [vmem:[%s17] sm:$0x1]
    %v3924 = vlaneseq
    %v3925 = vshrl.u32 %v3924, 7
    %v3926 = vsub.s32 0, %v3925
    %v3927 = vrot.slane %v3922, %v3926
    %v3930 = vsel %vm107, %v3917, 0
    %3932 = vmatprep.subr.mxu0 0.0
    %3933 = vmatpush1.msra.mxu0 0.0
    %3934 = vmatprep.subr.mxu0 0.0
    %3935 = vmatpush1.msra.mxu0 0.0
    %3936 = vmatprep.subr.mxu0 0.0
    %3937 = vmatpush1.msra.mxu0 0.0
    %3938 = vmatprep.subr.mxu0 0.0
    %3939 = vmatpush1.msra.mxu0 0.0
    %3940 = vmatprep.subr.mxu0 0.0
    %3941 = vmatpush1.msra.mxu0 0.0
    %3942 = vmatprep.subr.mxu0 0.0
    %3943 = vmatpush1.msra.mxu0 0.0
    %3944 = vmatprep.subr.mxu0 0.0
    %3945 = vmatpush1.msra.mxu0 0.0
    %3946 = vmatprep.subr.mxu0 0.0
    %3947 = vmatpush1.msra.mxu0 0.0
    %3948 = vmatprep.subr.mxu0 0.0
    %3949 = vmatpush1.msra.mxu0 0.0
    %3950 = vmatprep.subr.mxu0 0.0
    %3951 = vmatpush1.msra.mxu0 0.0
    %3952 = vmatprep.subr.mxu0 0.0
    %3953 = vmatpush1.msra.mxu0 0.0
    %3954 = vmatprep.subr.mxu0 0.0
    %3955 = vmatpush1.msra.mxu0 0.0
    %3956 = vmatprep.subr.mxu0 0.0
    %3957 = vmatpush1.msra.mxu0 %v3921
    %3958 = vmatprep.subr.mxu0 0.0
    %3959 = vmatpush1.msra.mxu0 %v3920
    %3960 = vmatprep.subr.mxu0 0.0
    %3961 = vmatpush1.msra.mxu0 %v3919
    %3962 = vmatprep.subr.mxu0 0.0
    %3963 = vmatpush1.msra.mxu0 %v3918
    %3964 = vmatprep.subr.mxu0 0.0
    %3965 = vmatpush2.msra.mxu0 0.0
    %3966 = vmatprep.subr.mxu0 0.0
    %3967 = vmatpush2.msra.mxu0 0.0
    %3968 = vmatprep.subr.mxu0 0.0
    %3969 = vmatpush2.msra.mxu0 0.0
    %3970 = vmatprep.subr.mxu0 0.0
    %3971 = vmatpush2.msra.mxu0 0.0
    %3972 = vmatprep.subr.mxu0 0.0
    %3973 = vmatpush2.msra.mxu0 0.0
    %3974 = vmatprep.subr.mxu0 0.0
    %3975 = vmatpush2.msra.mxu0 0.0
    %3976 = vmatprep.subr.mxu0 0.0
    %3977 = vmatpush2.msra.mxu0 0.0
    %3978 = vmatprep.subr.mxu0 0.0
    %3979 = vmatpush2.msra.mxu0 0.0
    %3980 = vmatprep.subr.mxu0 0.0
    %3981 = vmatpush2.msra.mxu0 0.0
    %3982 = vmatprep.subr.mxu0 0.0
    %3983 = vmatpush2.msra.mxu0 0.0
    %3984 = vmatprep.subr.mxu0 0.0
    %3985 = vmatpush2.msra.mxu0 0.0
    %3986 = vmatprep.subr.mxu0 0.0
    %3987 = vmatpush2.msra.mxu0 0.0
    %3988 = vmatprep.subr.mxu0 0.0
    %3989 = vmatpush2.msra.mxu0 0.0
    %3990 = vmatprep.subr.mxu0 0.0
    %3991 = vmatpush2.msra.mxu0 0.0
    %3992 = vmatprep.subr.mxu0 0.0
    %3993 = vmatpush2.msra.mxu0 0.0
    %3994 = vmatprep.subr.mxu0 0.0
    %3995 = vmatpush2.msra.mxu0 0.0
    %3996 = vmatprep.mubr.f32.mxu0 0.0
    %3997 = vmatmul.mubr.f32.gmra.mxu0 %v3930
    %v3998 = vpop.f32.mrf.mxu0
    %v3999 = vadd.f32 %v3927, %v3998
    %v4000 = vpop.f32.mrf.mxu0
    %4001 = vdwg.mxu0
    %v4002 = vmax.f32 %v3999, 0.0
    %v4003 = vld [vmem:[%s18] sm:$0xff]
    %v4004 = vld [vmem:[%s18 + $0x8] sm:$0xff]
    %v4005 = vld [vmem:[%s18 + $0x10] sm:$0xff]
    %v4006 = vld [vmem:[%s18 + $0x18] sm:$0xff]
    %v4007 = vld [vmem:[%s19] sm:$0x1]
    %v4009 = vlaneseq
    %v4010 = vshrl.u32 %v4009, 7
    %v4011 = vsub.s32 0, %v4010
    %v4012 = vrot.slane %v4007, %v4011
    %v4015 = vsel %vm107, %v4002, 0
    %4017 = vmatprep.subr.mxu0 0.0
    %4018 = vmatpush1.msra.mxu0 0.0
    %4019 = vmatprep.subr.mxu0 0.0
    %4020 = vmatpush1.msra.mxu0 0.0
    %4021 = vmatprep.subr.mxu0 0.0
    %4022 = vmatpush1.msra.mxu0 0.0
    %4023 = vmatprep.subr.mxu0 0.0
    %4024 = vmatpush1.msra.mxu0 0.0
    %4025 = vmatprep.subr.mxu0 0.0
    %4026 = vmatpush1.msra.mxu0 0.0
    %4027 = vmatprep.subr.mxu0 0.0
    %4028 = vmatpush1.msra.mxu0 0.0
    %4029 = vmatprep.subr.mxu0 0.0
    %4030 = vmatpush1.msra.mxu0 0.0
    %4031 = vmatprep.subr.mxu0 0.0
    %4032 = vmatpush1.msra.mxu0 0.0
    %4033 = vmatprep.subr.mxu0 0.0
    %4034 = vmatpush1.msra.mxu0 0.0
    %4035 = vmatprep.subr.mxu0 0.0
    %4036 = vmatpush1.msra.mxu0 0.0
    %4037 = vmatprep.subr.mxu0 0.0
    %4038 = vmatpush1.msra.mxu0 0.0
    %4039 = vmatprep.subr.mxu0 0.0
    %4040 = vmatpush1.msra.mxu0 0.0
    %4041 = vmatprep.subr.mxu0 0.0
    %4042 = vmatpush1.msra.mxu0 %v4006
    %4043 = vmatprep.subr.mxu0 0.0
    %4044 = vmatpush1.msra.mxu0 %v4005
    %4045 = vmatprep.subr.mxu0 0.0
    %4046 = vmatpush1.msra.mxu0 %v4004
    %4047 = vmatprep.subr.mxu0 0.0
    %4048 = vmatpush1.msra.mxu0 %v4003
    %4049 = vmatprep.subr.mxu0 0.0
    %4050 = vmatpush2.msra.mxu0 0.0
    %4051 = vmatprep.subr.mxu0 0.0
    %4052 = vmatpush2.msra.mxu0 0.0
    %4053 = vmatprep.subr.mxu0 0.0
    %4054 = vmatpush2.msra.mxu0 0.0
    %4055 = vmatprep.subr.mxu0 0.0
    %4056 = vmatpush2.msra.mxu0 0.0
    %4057 = vmatprep.subr.mxu0 0.0
    %4058 = vmatpush2.msra.mxu0 0.0
    %4059 = vmatprep.subr.mxu0 0.0
    %4060 = vmatpush2.msra.mxu0 0.0
    %4061 = vmatprep.subr.mxu0 0.0
    %4062 = vmatpush2.msra.mxu0 0.0
    %4063 = vmatprep.subr.mxu0 0.0
    %4064 = vmatpush2.msra.mxu0 0.0
    %4065 = vmatprep.subr.mxu0 0.0
    %4066 = vmatpush2.msra.mxu0 0.0
    %4067 = vmatprep.subr.mxu0 0.0
    %4068 = vmatpush2.msra.mxu0 0.0
    %4069 = vmatprep.subr.mxu0 0.0
    %4070 = vmatpush2.msra.mxu0 0.0
    %4071 = vmatprep.subr.mxu0 0.0
    %4072 = vmatpush2.msra.mxu0 0.0
    %4073 = vmatprep.subr.mxu0 0.0
    %4074 = vmatpush2.msra.mxu0 0.0
    %4075 = vmatprep.subr.mxu0 0.0
    %4076 = vmatpush2.msra.mxu0 0.0
    %4077 = vmatprep.subr.mxu0 0.0
    %4078 = vmatpush2.msra.mxu0 0.0
    %4079 = vmatprep.subr.mxu0 0.0
    %4080 = vmatpush2.msra.mxu0 0.0
    %4081 = vmatprep.mubr.f32.mxu0 0.0
    %4082 = vmatmul.mubr.f32.gmra.mxu0 %v4015
    %v4083 = vpop.f32.mrf.mxu0
    %v4084 = vadd.f32 %v4012, %v4083
    %v4085 = vpop.f32.mrf.mxu0
    %4086 = vdwg.mxu0
    %vm4087 = vcmask 58368
    %4088 = vst.msk [vmem:[#allocation9] sm:$0x3] %vm4087, %v4084
    // Predicated region
    $region94: #{tpu_custom_call.1} parent=1 // pred_check
      _
    $region95: #{tpu_custom_call.1} parent=1 // pred_check_branch
      %4090 = sbr.rel (0) target = $region97
    $region96: #{tpu_custom_call.1} parent=1 // pred_region
      %s4092 = ssub.s32 32, 32
      %4093 = vsyncadd [#allocation5], %s4092
      %s4095 = sshll.u32 [#allocation9], 4
      %s4096 = int_to_ptr.vmem [resolvable:$true] %s4095
      %4098 = dma.vmem_to_hbm [thread:$0]  %s4096, 32, %s20, [#allocation5]
    $region97: #{tpu_custom_call.1} parent=1 // pred_fallthru
      _
    // Predicated region
    $region98: #{tpu_custom_call.1} parent=1 // pred_check
      _
    $region99: #{tpu_custom_call.1} parent=1 // pred_check_branch
      %4100 = sbr.rel (0) target = $region101
    $region100: #{tpu_custom_call.1} parent=1 // pred_region
      %4101 = dma.done [#allocation5], 32
    $region101: #{tpu_custom_call.1} parent=1 // pred_fallthru
      _
    %4102 = vsyncpa [#allocation4], 1
    %4103 = vsyncpa [#allocation7], 1
    %4104 = vsyncpa [#allocation5], 1

</llo_original>
